<compile_context>
chip_gen: v6e
topology: v6e:2x2x1
jax: 0.10.0
libtpu: 0.0.40
codegen_flags: <defaults>
</compile_context>

<pallas_src>
import functools
import math

import jax
import jax.numpy as jnp
from jax.experimental import pallas as pl
from jax.experimental.pallas import tpu as pltpu

# ----------------------------- config ---------------------------------------
VOCAB = 100
HIDDEN = 32
NUM_HEADS = 4
HEAD_DIM = HIDDEN // NUM_HEADS
INTERMEDIATE = 64
NUM_LAYERS = 2
MAX_POS = 64
NUM_LABELS = 5
LN_EPS = 1e-12
FC_PAD = 128                      # lane-dense logits slab; sliced to NUM_LABELS outside
ATTN_SCALE = 1.0 / math.sqrt(HEAD_DIM)

_VMEM = functools.partial(pl.BlockSpec, memory_space=pltpu.MemorySpace.VMEM)


# ----------------------------- in-kernel helpers ------------------------------
def _layernorm(x, g, b):
    mu = jnp.mean(x, axis=-1, keepdims=True)
    var = jnp.mean((x - mu) ** 2, axis=-1, keepdims=True)
    return (x - mu) * jax.lax.rsqrt(var + LN_EPS) * g + b


def _erf(x):
    # Abramowitz & Stegun 7.1.26 (max abs err ~1.5e-7). Gives erf-exact GELU
    # semantics using only exp / mul / add / where (all VPU+EUP friendly).
    a1, a2, a3, a4, a5 = (0.254829592, -0.284496736, 1.421413741,
                          -1.453152027, 1.061405429)
    p = 0.3275911
    ax = jnp.abs(x)
    t = 1.0 / (1.0 + p * ax)
    poly = ((((a5 * t + a4) * t + a3) * t + a2) * t + a1) * t
    y = 1.0 - poly * jnp.exp(-ax * ax)
    return jnp.where(x >= 0.0, y, -y)


def _gelu_erf(x):
    return 0.5 * x * (1.0 + _erf(x * (1.0 / math.sqrt(2.0))))


# ----------------------------- fused kernel -----------------------------------
def _cwsb_kernel(
    x_ref, mask_ref,
    emb_g_ref, emb_b_ref,
    wqkv_ref, bqkv_ref, wo_ref, bo_ref, ln1_g_ref, ln1_b_ref,
    w1_ref, b1_ref, w2_ref, b2_ref, ln2_g_ref, ln2_b_ref,
    fc_w_ref,
    out_ref, logits_ref,
    *, batch, seq,
):
    rows = batch * seq

    # --- embedding LayerNorm (plain LN, no residual) ---
    x = _layernorm(x_ref[...], emb_g_ref[...], emb_b_ref[...])

    # --- additive attention mask, computed once and hoisted out of the layer loop.
    #     Identical across heads and query positions, so only a (B, S, S) value exists.
    madd = (1.0 - mask_ref[...]) * -10000.0                       # (B, S)
    madd = jnp.broadcast_to(madd[:, None, :], (batch, seq, seq))  # (B, S, S)

    # --- transformer encoder stack (unrolled; 2 layers x 4 heads) ---
    for l in range(NUM_LAYERS):
        # fused QKV projection: one (rows, H) @ (H, 3H) MXU pass
        qkv = jnp.dot(x, wqkv_ref[l], preferred_element_type=jnp.float32) + bqkv_ref[l]

        attn = None
        for h in range(NUM_HEADS):
            lo = h * HEAD_DIM
            q = qkv[:, lo:lo + HEAD_DIM].reshape(batch, seq, HEAD_DIM)
            k = qkv[:, HIDDEN + lo:HIDDEN + lo + HEAD_DIM].reshape(batch, seq, HEAD_DIM)
            v = qkv[:, 2 * HIDDEN + lo:2 * HIDDEN + lo + HEAD_DIM].reshape(batch, seq, HEAD_DIM)

            s = jnp.einsum("bqd,bkd->bqk", q, k,
                           preferred_element_type=jnp.float32) * ATTN_SCALE + madd
            s = s - jnp.max(s, axis=-1, keepdims=True)
            p = jnp.exp(s)
            p = p * pl.reciprocal(jnp.sum(p, axis=-1, keepdims=True), approx=True)
            c = jnp.einsum("bqk,bkd->bqd", p, v,
                           preferred_element_type=jnp.float32)
            c = c.reshape(rows, HEAD_DIM)

            # fold the output projection per head: ctx @ Wo == sum_h ctx_h @ Wo[h]
            d = jnp.dot(c, wo_ref[l, h], preferred_element_type=jnp.float32)
            attn = d if attn is None else attn + d

        attn = attn + bo_ref[l]
        x = _layernorm(attn + x, ln1_g_ref[l], ln1_b_ref[l])

        # feed-forward (erf-exact GELU)
        hmid = jnp.dot(x, w1_ref[l], preferred_element_type=jnp.float32) + b1_ref[l]
        hmid = _gelu_erf(hmid)
        ff = jnp.dot(hmid, w2_ref[l], preferred_element_type=jnp.float32) + b2_ref[l]
        x = _layernorm(ff + x, ln2_g_ref[l], ln2_b_ref[l])

    out_ref[...] = x
    # dropout(hidden_dropout_prob) == identity at eval; bias-free fc head.
    # fc_w is zero-padded to 128 lanes so this store is lane-dense (no vst.msk).
    logits_ref[...] = jnp.dot(x, fc_w_ref[...], preferred_element_type=jnp.float32)


# ----------------------------- params -----------------------------------------
def init_params(key):
    def nrm(k, shape):
        return jax.random.normal(k, shape, jnp.float32) * 0.02

    keys = iter(jax.random.split(key, 8))
    return {
        "word_emb": nrm(next(keys), (VOCAB, HIDDEN)),
        "pos_emb": nrm(next(keys), (MAX_POS, HIDDEN)),
        "type_emb": nrm(next(keys), (2, HIDDEN)),
        "emb_ln_g": jnp.ones((HIDDEN,), jnp.float32),
        "emb_ln_b": jnp.zeros((HIDDEN,), jnp.float32),
        # per-layer weights stacked on a leading layer axis; wq|wk|wv concatenated.
        "wqkv": nrm(next(keys), (NUM_LAYERS, HIDDEN, 3 * HIDDEN)),
        "bqkv": jnp.zeros((NUM_LAYERS, 3 * HIDDEN), jnp.float32),
        "wo": nrm(next(keys), (NUM_LAYERS, HIDDEN, HIDDEN)),
        "bo": jnp.zeros((NUM_LAYERS, HIDDEN), jnp.float32),
        "ln1_g": jnp.ones((NUM_LAYERS, HIDDEN), jnp.float32),
        "ln1_b": jnp.zeros((NUM_LAYERS, HIDDEN), jnp.float32),
        "w1": nrm(next(keys), (NUM_LAYERS, HIDDEN, INTERMEDIATE)),
        "b1": jnp.zeros((NUM_LAYERS, INTERMEDIATE), jnp.float32),
        "w2": nrm(next(keys), (NUM_LAYERS, INTERMEDIATE, HIDDEN)),
        "b2": jnp.zeros((NUM_LAYERS, HIDDEN), jnp.float32),
        "ln2_g": jnp.ones((NUM_LAYERS, HIDDEN), jnp.float32),
        "ln2_b": jnp.zeros((NUM_LAYERS, HIDDEN), jnp.float32),
        "fc_w": nrm(next(keys), (HIDDEN, NUM_LABELS)),  # nn.Linear(H, num_labels, bias=False)
    }


# ----------------------------- forward -----------------------------------------
@jax.jit
def cwsb_forward(params, input_ids, attention_mask):
    B, S = input_ids.shape
    L = NUM_LAYERS

    # Embedding gathers are host-side glue; everything downstream runs inside a
    # single fused Pallas kernel.
    pos_ids = jnp.arange(S)
    emb = (
        params["word_emb"][input_ids]
        + params["pos_emb"][pos_ids][None, :, :]
        + params["type_emb"][0][None, None, :]          # token_type_ids == 0
    )
    x2 = emb.reshape(B * S, HIDDEN).astype(jnp.float32)
    mask = attention_mask.astype(jnp.float32)           # raw (B, S); additive mask built in-kernel

    # zero-pad the bias-free fc head to 128 output lanes; padded cols sliced away below
    fc_pad = jnp.zeros((HIDDEN, FC_PAD), jnp.float32).at[:, :NUM_LABELS].set(params["fc_w"])

    out2, logits_pad = pl.pallas_call(
        functools.partial(_cwsb_kernel, batch=B, seq=S),
        out_shape=(
            jax.ShapeDtypeStruct((B * S, HIDDEN), jnp.float32),
            jax.ShapeDtypeStruct((B * S, FC_PAD), jnp.float32),
        ),
        in_specs=[_VMEM() for _ in range(17)],
        out_specs=(_VMEM(), _VMEM()),
        # TODO(synk): at real-BERT scale (H=768, S=512) switch to tiled BlockSpecs over
        # row tiles with dimension_semantics=("parallel",) (v7x megacore), bf16 matmul
        # operands, and an explicit vmem_limit_bytes; at this toy size everything fits
        # in VMEM and a single un-gridded call is optimal.
    )(
        x2, mask,
        params["emb_ln_g"].reshape(1, HIDDEN), params["emb_ln_b"].reshape(1, HIDDEN),
        params["wqkv"], params["bqkv"].reshape(L, 1, 3 * HIDDEN),
        params["wo"].reshape(L, NUM_HEADS, HEAD_DIM, HIDDEN),
        params["bo"].reshape(L, 1, HIDDEN),
        params["ln1_g"].reshape(L, 1, HIDDEN), params["ln1_b"].reshape(L, 1, HIDDEN),
        params["w1"], params["b1"].reshape(L, 1, INTERMEDIATE),
        params["w2"], params["b2"].reshape(L, 1, HIDDEN),
        params["ln2_g"].reshape(L, 1, HIDDEN), params["ln2_b"].reshape(L, 1, HIDDEN),
        fc_pad,
    )

    output = out2.reshape(B, S, HIDDEN)
    logits = logits_pad[:, :NUM_LABELS].reshape(B, S, NUM_LABELS)
    return output, logits


# ----------------------------- main ---------------------------------------------
if __name__ == "__main__":
    key = jax.random.PRNGKey(0)
    pkey, ikey = jax.random.split(key)

    params = init_params(pkey)

    B, S = 2, 8
    input_ids = jax.random.randint(ikey, (B, S), 0, VOCAB, dtype=jnp.int32)
    attention_mask = jnp.ones((B, S), dtype=jnp.int32).at[1, 6:].set(0)  # ragged mask

    output, logits = cwsb_forward(params, input_ids, attention_mask)
    jax.block_until_ready((output, logits))

    assert output.shape == (B, S, HIDDEN)
    assert logits.shape == (B, S, NUM_LABELS)
    print("KERNEL_OK")
</pallas_src>

<mosaic_0001>
module attributes {stable_mosaic.version = 11 : i64} {
  func.func @_cwsb_kernel(%arg0: memref<16x32xf32, #tpu.memory_space<vmem>>, %arg1: memref<2x8xf32, #tpu.memory_space<vmem>>, %arg2: memref<1x32xf32, #tpu.memory_space<vmem>>, %arg3: memref<1x32xf32, #tpu.memory_space<vmem>>, %arg4: memref<2x32x96xf32, #tpu.memory_space<vmem>>, %arg5: memref<2x1x96xf32, #tpu.memory_space<vmem>>, %arg6: memref<2x4x8x32xf32, #tpu.memory_space<vmem>>, %arg7: memref<2x1x32xf32, #tpu.memory_space<vmem>>, %arg8: memref<2x1x32xf32, #tpu.memory_space<vmem>>, %arg9: memref<2x1x32xf32, #tpu.memory_space<vmem>>, %arg10: memref<2x32x64xf32, #tpu.memory_space<vmem>>, %arg11: memref<2x1x64xf32, #tpu.memory_space<vmem>>, %arg12: memref<2x64x32xf32, #tpu.memory_space<vmem>>, %arg13: memref<2x1x32xf32, #tpu.memory_space<vmem>>, %arg14: memref<2x1x32xf32, #tpu.memory_space<vmem>>, %arg15: memref<2x1x32xf32, #tpu.memory_space<vmem>>, %arg16: memref<32x128xf32, #tpu.memory_space<vmem>>, %arg17: memref<16x32xf32, #tpu.memory_space<vmem>>, %arg18: memref<16x128xf32, #tpu.memory_space<vmem>>) attributes {dimension_semantics = [], scalar_prefetch = 0 : i64, scratch_operands = 0 : i64, tpu.core_type = #tpu.core_type<tc>} {
    %c0 = arith.constant 0 : index
    %c0_0 = arith.constant 0 : index
    %0 = vector.load %arg0[%c0, %c0_0] : memref<16x32xf32, #tpu.memory_space<vmem>>, vector<16x32xf32>
    %c0_1 = arith.constant 0 : index
    %c0_2 = arith.constant 0 : index
    %1 = vector.load %arg2[%c0_1, %c0_2] : memref<1x32xf32, #tpu.memory_space<vmem>>, vector<1x32xf32>
    %c0_3 = arith.constant 0 : index
    %c0_4 = arith.constant 0 : index
    %2 = vector.load %arg3[%c0_3, %c0_4] : memref<1x32xf32, #tpu.memory_space<vmem>>, vector<1x32xf32>
    %cst = arith.constant dense<0.000000e+00> : vector<16xf32>
    %3 = vector.multi_reduction <add>, %0, %cst [1] : vector<16x32xf32> to vector<16xf32>
    %4 = vector.shape_cast %3 : vector<16xf32> to vector<16x1xf32>
    %cst_5 = arith.constant 3.200000e+01 : f32
    %5 = vector.broadcast %cst_5 : f32 to vector<16x1xf32>
    %6 = arith.divf %4, %5 : vector<16x1xf32>
    %7 = vector.broadcast %6 : vector<16x1xf32> to vector<16x32xf32>
    %8 = arith.subf %0, %7 : vector<16x32xf32>
    %9 = arith.mulf %8, %8 : vector<16x32xf32>
    %cst_6 = arith.constant dense<0.000000e+00> : vector<16xf32>
    %10 = vector.multi_reduction <add>, %9, %cst_6 [1] : vector<16x32xf32> to vector<16xf32>
    %11 = vector.shape_cast %10 : vector<16xf32> to vector<16x1xf32>
    %cst_7 = arith.constant 3.200000e+01 : f32
    %12 = vector.broadcast %cst_7 : f32 to vector<16x1xf32>
    %13 = arith.divf %11, %12 : vector<16x1xf32>
    %14 = vector.broadcast %6 : vector<16x1xf32> to vector<16x32xf32>
    %15 = arith.subf %0, %14 : vector<16x32xf32>
    %cst_8 = arith.constant 9.99999996E-13 : f32
    %16 = vector.broadcast %cst_8 : f32 to vector<16x1xf32>
    %17 = arith.addf %13, %16 : vector<16x1xf32>
    %18 = math.rsqrt %17 : vector<16x1xf32>
    %19 = vector.broadcast %18 : vector<16x1xf32> to vector<16x32xf32>
    %20 = arith.mulf %15, %19 : vector<16x32xf32>
    %21 = vector.broadcast %1 : vector<1x32xf32> to vector<16x32xf32>
    %22 = arith.mulf %20, %21 : vector<16x32xf32>
    %23 = vector.broadcast %2 : vector<1x32xf32> to vector<16x32xf32>
    %24 = arith.addf %22, %23 : vector<16x32xf32>
    %c0_9 = arith.constant 0 : index
    %c0_10 = arith.constant 0 : index
    %25 = vector.load %arg1[%c0_9, %c0_10] : memref<2x8xf32, #tpu.memory_space<vmem>>, vector<2x8xf32>
    %cst_11 = arith.constant 1.000000e+00 : f32
    %26 = vector.broadcast %cst_11 : f32 to vector<2x8xf32>
    %27 = arith.subf %26, %25 : vector<2x8xf32>
    %cst_12 = arith.constant -1.000000e+04 : f32
    %28 = vector.broadcast %cst_12 : f32 to vector<2x8xf32>
    %29 = arith.mulf %27, %28 : vector<2x8xf32>
    %30 = vector.shape_cast %29 : vector<2x8xf32> to vector<2x1x8xf32>
    %31 = vector.shape_cast %30 : vector<2x1x8xf32> to vector<2x1x8xf32>
    %32 = vector.broadcast %31 : vector<2x1x8xf32> to vector<2x8x8xf32>
    %c0_13 = arith.constant 0 : index
    %c0_14 = arith.constant 0 : index
    %c0_15 = arith.constant 0 : index
    %33 = vector.load %arg4[%c0_13, %c0_14, %c0_15] : memref<2x32x96xf32, #tpu.memory_space<vmem>>, vector<1x32x96xf32>
    %34 = vector.shape_cast %33 : vector<1x32x96xf32> to vector<32x96xf32>
    %cst_16 = arith.constant dense<0.000000e+00> : vector<16x96xf32>
    %35 = tpu.matmul %24, %34, %cst_16 {dimension_numbers = #tpu.dot_dimension_numbers<[1], [0], [0], [1], [0, 0, 1, 1], [], []>} : vector<16x32xf32>, vector<32x96xf32>, vector<16x96xf32> -> vector<16x96xf32>
    %c0_17 = arith.constant 0 : index
    %c0_18 = arith.constant 0 : index
    %c0_19 = arith.constant 0 : index
    %36 = vector.load %arg5[%c0_17, %c0_18, %c0_19] : memref<2x1x96xf32, #tpu.memory_space<vmem>>, vector<1x1x96xf32>
    %37 = vector.shape_cast %36 : vector<1x1x96xf32> to vector<1x96xf32>
    %38 = vector.broadcast %37 : vector<1x96xf32> to vector<16x96xf32>
    %39 = arith.addf %35, %38 : vector<16x96xf32>
    %40 = vector.extract_strided_slice %39 {offsets = [0, 0], sizes = [16, 8], strides = [1, 1]} : vector<16x96xf32> to vector<16x8xf32>
    %41 = vector.shape_cast %40 : vector<16x8xf32> to vector<2x8x8xf32>
    %42 = vector.extract_strided_slice %39 {offsets = [0, 32], sizes = [16, 8], strides = [1, 1]} : vector<16x96xf32> to vector<16x8xf32>
    %43 = vector.shape_cast %42 : vector<16x8xf32> to vector<2x8x8xf32>
    %44 = vector.extract_strided_slice %39 {offsets = [0, 64], sizes = [16, 8], strides = [1, 1]} : vector<16x96xf32> to vector<16x8xf32>
    %45 = vector.shape_cast %44 : vector<16x8xf32> to vector<2x8x8xf32>
    "tpu.trace_start"() <{level = 10 : i32, message = "bqd,bkd->bqk"}> : () -> ()
    %cst_20 = arith.constant dense<0.000000e+00> : vector<2x8x8xf32>
    %46 = tpu.matmul %41, %43, %cst_20 {dimension_numbers = #tpu.dot_dimension_numbers<[2], [2], [1], [1], [0, 0, 0, 1, 1, 1], [0], [0]>} : vector<2x8x8xf32>, vector<2x8x8xf32>, vector<2x8x8xf32> -> vector<2x8x8xf32>
    "tpu.trace_stop"() : () -> ()
    %cst_21 = arith.constant 0.353553385 : f32
    %47 = vector.broadcast %cst_21 : f32 to vector<2x8x8xf32>
    %48 = arith.mulf %46, %47 : vector<2x8x8xf32>
    %49 = arith.addf %48, %32 : vector<2x8x8xf32>
    %cst_22 = arith.constant dense<0xFF800000> : vector<2x8xf32>
    %50 = vector.multi_reduction <maximumf>, %49, %cst_22 [2] : vector<2x8x8xf32> to vector<2x8xf32>
    %51 = vector.shape_cast %50 : vector<2x8xf32> to vector<2x8x1xf32>
    %52 = vector.broadcast %51 : vector<2x8x1xf32> to vector<2x8x8xf32>
    %53 = arith.subf %49, %52 : vector<2x8x8xf32>
    %54 = math.exp %53 : vector<2x8x8xf32>
    %cst_23 = arith.constant dense<0.000000e+00> : vector<2x8xf32>
    %55 = vector.multi_reduction <add>, %54, %cst_23 [2] : vector<2x8x8xf32> to vector<2x8xf32>
    %56 = vector.shape_cast %55 : vector<2x8xf32> to vector<2x8x1xf32>
    %57 = tpu.reciprocal %56 {approx = true} : vector<2x8x1xf32> -> vector<2x8x1xf32>
    %58 = vector.broadcast %57 : vector<2x8x1xf32> to vector<2x8x8xf32>
    %59 = arith.mulf %54, %58 : vector<2x8x8xf32>
    "tpu.trace_start"() <{level = 10 : i32, message = "bqk,bkd->bqd"}> : () -> ()
    %cst_24 = arith.constant dense<0.000000e+00> : vector<2x8x8xf32>
    %60 = tpu.matmul %59, %45, %cst_24 {dimension_numbers = #tpu.dot_dimension_numbers<[2], [1], [1], [2], [0, 0, 0, 1, 1, 2], [0], [0]>} : vector<2x8x8xf32>, vector<2x8x8xf32>, vector<2x8x8xf32> -> vector<2x8x8xf32>
    "tpu.trace_stop"() : () -> ()
    %61 = vector.shape_cast %60 : vector<2x8x8xf32> to vector<16x8xf32>
    %c0_25 = arith.constant 0 : index
    %c0_26 = arith.constant 0 : index
    %c0_27 = arith.constant 0 : index
    %c0_28 = arith.constant 0 : index
    %62 = vector.load %arg6[%c0_25, %c0_26, %c0_27, %c0_28] : memref<2x4x8x32xf32, #tpu.memory_space<vmem>>, vector<1x1x8x32xf32>
    %63 = vector.shape_cast %62 : vector<1x1x8x32xf32> to vector<8x32xf32>
    %cst_29 = arith.constant dense<0.000000e+00> : vector<16x32xf32>
    %64 = tpu.matmul %61, %63, %cst_29 {dimension_numbers = #tpu.dot_dimension_numbers<[1], [0], [0], [1], [0, 0, 1, 1], [], []>} : vector<16x8xf32>, vector<8x32xf32>, vector<16x32xf32> -> vector<16x32xf32>
    %65 = vector.extract_strided_slice %39 {offsets = [0, 8], sizes = [16, 8], strides = [1, 1]} : vector<16x96xf32> to vector<16x8xf32>
    %66 = vector.shape_cast %65 : vector<16x8xf32> to vector<2x8x8xf32>
    %67 = vector.extract_strided_slice %39 {offsets = [0, 40], sizes = [16, 8], strides = [1, 1]} : vector<16x96xf32> to vector<16x8xf32>
    %68 = vector.shape_cast %67 : vector<16x8xf32> to vector<2x8x8xf32>
    %69 = vector.extract_strided_slice %39 {offsets = [0, 72], sizes = [16, 8], strides = [1, 1]} : vector<16x96xf32> to vector<16x8xf32>
    %70 = vector.shape_cast %69 : vector<16x8xf32> to vector<2x8x8xf32>
    "tpu.trace_start"() <{level = 10 : i32, message = "bqd,bkd->bqk"}> : () -> ()
    %cst_30 = arith.constant dense<0.000000e+00> : vector<2x8x8xf32>
    %71 = tpu.matmul %66, %68, %cst_30 {dimension_numbers = #tpu.dot_dimension_numbers<[2], [2], [1], [1], [0, 0, 0, 1, 1, 1], [0], [0]>} : vector<2x8x8xf32>, vector<2x8x8xf32>, vector<2x8x8xf32> -> vector<2x8x8xf32>
    "tpu.trace_stop"() : () -> ()
    %cst_31 = arith.constant 0.353553385 : f32
    %72 = vector.broadcast %cst_31 : f32 to vector<2x8x8xf32>
    %73 = arith.mulf %71, %72 : vector<2x8x8xf32>
    %74 = arith.addf %73, %32 : vector<2x8x8xf32>
    %cst_32 = arith.constant dense<0xFF800000> : vector<2x8xf32>
    %75 = vector.multi_reduction <maximumf>, %74, %cst_32 [2] : vector<2x8x8xf32> to vector<2x8xf32>
    %76 = vector.shape_cast %75 : vector<2x8xf32> to vector<2x8x1xf32>
    %77 = vector.broadcast %76 : vector<2x8x1xf32> to vector<2x8x8xf32>
    %78 = arith.subf %74, %77 : vector<2x8x8xf32>
    %79 = math.exp %78 : vector<2x8x8xf32>
    %cst_33 = arith.constant dense<0.000000e+00> : vector<2x8xf32>
    %80 = vector.multi_reduction <add>, %79, %cst_33 [2] : vector<2x8x8xf32> to vector<2x8xf32>
    %81 = vector.shape_cast %80 : vector<2x8xf32> to vector<2x8x1xf32>
    %82 = tpu.reciprocal %81 {approx = true} : vector<2x8x1xf32> -> vector<2x8x1xf32>
    %83 = vector.broadcast %82 : vector<2x8x1xf32> to vector<2x8x8xf32>
    %84 = arith.mulf %79, %83 : vector<2x8x8xf32>
    "tpu.trace_start"() <{level = 10 : i32, message = "bqk,bkd->bqd"}> : () -> ()
    %cst_34 = arith.constant dense<0.000000e+00> : vector<2x8x8xf32>
    %85 = tpu.matmul %84, %70, %cst_34 {dimension_numbers = #tpu.dot_dimension_numbers<[2], [1], [1], [2], [0, 0, 0, 1, 1, 2], [0], [0]>} : vector<2x8x8xf32>, vector<2x8x8xf32>, vector<2x8x8xf32> -> vector<2x8x8xf32>
    "tpu.trace_stop"() : () -> ()
    %86 = vector.shape_cast %85 : vector<2x8x8xf32> to vector<16x8xf32>
    %c0_35 = arith.constant 0 : index
    %c1 = arith.constant 1 : index
    %c0_36 = arith.constant 0 : index
    %c0_37 = arith.constant 0 : index
    %87 = vector.load %arg6[%c0_35, %c1, %c0_36, %c0_37] : memref<2x4x8x32xf32, #tpu.memory_space<vmem>>, vector<1x1x8x32xf32>
    %88 = vector.shape_cast %87 : vector<1x1x8x32xf32> to vector<8x32xf32>
    %cst_38 = arith.constant dense<0.000000e+00> : vector<16x32xf32>
    %89 = tpu.matmul %86, %88, %cst_38 {dimension_numbers = #tpu.dot_dimension_numbers<[1], [0], [0], [1], [0, 0, 1, 1], [], []>} : vector<16x8xf32>, vector<8x32xf32>, vector<16x32xf32> -> vector<16x32xf32>
    %90 = arith.addf %64, %89 : vector<16x32xf32>
    %91 = vector.extract_strided_slice %39 {offsets = [0, 16], sizes = [16, 8], strides = [1, 1]} : vector<16x96xf32> to vector<16x8xf32>
    %92 = vector.shape_cast %91 : vector<16x8xf32> to vector<2x8x8xf32>
    %93 = vector.extract_strided_slice %39 {offsets = [0, 48], sizes = [16, 8], strides = [1, 1]} : vector<16x96xf32> to vector<16x8xf32>
    %94 = vector.shape_cast %93 : vector<16x8xf32> to vector<2x8x8xf32>
    %95 = vector.extract_strided_slice %39 {offsets = [0, 80], sizes = [16, 8], strides = [1, 1]} : vector<16x96xf32> to vector<16x8xf32>
    %96 = vector.shape_cast %95 : vector<16x8xf32> to vector<2x8x8xf32>
    "tpu.trace_start"() <{level = 10 : i32, message = "bqd,bkd->bqk"}> : () -> ()
    %cst_39 = arith.constant dense<0.000000e+00> : vector<2x8x8xf32>
    %97 = tpu.matmul %92, %94, %cst_39 {dimension_numbers = #tpu.dot_dimension_numbers<[2], [2], [1], [1], [0, 0, 0, 1, 1, 1], [0], [0]>} : vector<2x8x8xf32>, vector<2x8x8xf32>, vector<2x8x8xf32> -> vector<2x8x8xf32>
    "tpu.trace_stop"() : () -> ()
    %cst_40 = arith.constant 0.353553385 : f32
    %98 = vector.broadcast %cst_40 : f32 to vector<2x8x8xf32>
    %99 = arith.mulf %97, %98 : vector<2x8x8xf32>
    %100 = arith.addf %99, %32 : vector<2x8x8xf32>
    %cst_41 = arith.constant dense<0xFF800000> : vector<2x8xf32>
    %101 = vector.multi_reduction <maximumf>, %100, %cst_41 [2] : vector<2x8x8xf32> to vector<2x8xf32>
    %102 = vector.shape_cast %101 : vector<2x8xf32> to vector<2x8x1xf32>
    %103 = vector.broadcast %102 : vector<2x8x1xf32> to vector<2x8x8xf32>
    %104 = arith.subf %100, %103 : vector<2x8x8xf32>
    %105 = math.exp %104 : vector<2x8x8xf32>
    %cst_42 = arith.constant dense<0.000000e+00> : vector<2x8xf32>
    %106 = vector.multi_reduction <add>, %105, %cst_42 [2] : vector<2x8x8xf32> to vector<2x8xf32>
    %107 = vector.shape_cast %106 : vector<2x8xf32> to vector<2x8x1xf32>
    %108 = tpu.reciprocal %107 {approx = true} : vector<2x8x1xf32> -> vector<2x8x1xf32>
    %109 = vector.broadcast %108 : vector<2x8x1xf32> to vector<2x8x8xf32>
    %110 = arith.mulf %105, %109 : vector<2x8x8xf32>
    "tpu.trace_start"() <{level = 10 : i32, message = "bqk,bkd->bqd"}> : () -> ()
    %cst_43 = arith.constant dense<0.000000e+00> : vector<2x8x8xf32>
    %111 = tpu.matmul %110, %96, %cst_43 {dimension_numbers = #tpu.dot_dimension_numbers<[2], [1], [1], [2], [0, 0, 0, 1, 1, 2], [0], [0]>} : vector<2x8x8xf32>, vector<2x8x8xf32>, vector<2x8x8xf32> -> vector<2x8x8xf32>
    "tpu.trace_stop"() : () -> ()
    %112 = vector.shape_cast %111 : vector<2x8x8xf32> to vector<16x8xf32>
    %c0_44 = arith.constant 0 : index
    %c2 = arith.constant 2 : index
    %c0_45 = arith.constant 0 : index
    %c0_46 = arith.constant 0 : index
    %113 = vector.load %arg6[%c0_44, %c2, %c0_45, %c0_46] : memref<2x4x8x32xf32, #tpu.memory_space<vmem>>, vector<1x1x8x32xf32>
    %114 = vector.shape_cast %113 : vector<1x1x8x32xf32> to vector<8x32xf32>
    %cst_47 = arith.constant dense<0.000000e+00> : vector<16x32xf32>
    %115 = tpu.matmul %112, %114, %cst_47 {dimension_numbers = #tpu.dot_dimension_numbers<[1], [0], [0], [1], [0, 0, 1, 1], [], []>} : vector<16x8xf32>, vector<8x32xf32>, vector<16x32xf32> -> vector<16x32xf32>
    %116 = arith.addf %90, %115 : vector<16x32xf32>
    %117 = vector.extract_strided_slice %39 {offsets = [0, 24], sizes = [16, 8], strides = [1, 1]} : vector<16x96xf32> to vector<16x8xf32>
    %118 = vector.shape_cast %117 : vector<16x8xf32> to vector<2x8x8xf32>
    %119 = vector.extract_strided_slice %39 {offsets = [0, 56], sizes = [16, 8], strides = [1, 1]} : vector<16x96xf32> to vector<16x8xf32>
    %120 = vector.shape_cast %119 : vector<16x8xf32> to vector<2x8x8xf32>
    %121 = vector.extract_strided_slice %39 {offsets = [0, 88], sizes = [16, 8], strides = [1, 1]} : vector<16x96xf32> to vector<16x8xf32>
    %122 = vector.shape_cast %121 : vector<16x8xf32> to vector<2x8x8xf32>
    "tpu.trace_start"() <{level = 10 : i32, message = "bqd,bkd->bqk"}> : () -> ()
    %cst_48 = arith.constant dense<0.000000e+00> : vector<2x8x8xf32>
    %123 = tpu.matmul %118, %120, %cst_48 {dimension_numbers = #tpu.dot_dimension_numbers<[2], [2], [1], [1], [0, 0, 0, 1, 1, 1], [0], [0]>} : vector<2x8x8xf32>, vector<2x8x8xf32>, vector<2x8x8xf32> -> vector<2x8x8xf32>
    "tpu.trace_stop"() : () -> ()
    %cst_49 = arith.constant 0.353553385 : f32
    %124 = vector.broadcast %cst_49 : f32 to vector<2x8x8xf32>
    %125 = arith.mulf %123, %124 : vector<2x8x8xf32>
    %126 = arith.addf %125, %32 : vector<2x8x8xf32>
    %cst_50 = arith.constant dense<0xFF800000> : vector<2x8xf32>
    %127 = vector.multi_reduction <maximumf>, %126, %cst_50 [2] : vector<2x8x8xf32> to vector<2x8xf32>
    %128 = vector.shape_cast %127 : vector<2x8xf32> to vector<2x8x1xf32>
    %129 = vector.broadcast %128 : vector<2x8x1xf32> to vector<2x8x8xf32>
    %130 = arith.subf %126, %129 : vector<2x8x8xf32>
    %131 = math.exp %130 : vector<2x8x8xf32>
    %cst_51 = arith.constant dense<0.000000e+00> : vector<2x8xf32>
    %132 = vector.multi_reduction <add>, %131, %cst_51 [2] : vector<2x8x8xf32> to vector<2x8xf32>
    %133 = vector.shape_cast %132 : vector<2x8xf32> to vector<2x8x1xf32>
    %134 = tpu.reciprocal %133 {approx = true} : vector<2x8x1xf32> -> vector<2x8x1xf32>
    %135 = vector.broadcast %134 : vector<2x8x1xf32> to vector<2x8x8xf32>
    %136 = arith.mulf %131, %135 : vector<2x8x8xf32>
    "tpu.trace_start"() <{level = 10 : i32, message = "bqk,bkd->bqd"}> : () -> ()
    %cst_52 = arith.constant dense<0.000000e+00> : vector<2x8x8xf32>
    %137 = tpu.matmul %136, %122, %cst_52 {dimension_numbers = #tpu.dot_dimension_numbers<[2], [1], [1], [2], [0, 0, 0, 1, 1, 2], [0], [0]>} : vector<2x8x8xf32>, vector<2x8x8xf32>, vector<2x8x8xf32> -> vector<2x8x8xf32>
    "tpu.trace_stop"() : () -> ()
    %138 = vector.shape_cast %137 : vector<2x8x8xf32> to vector<16x8xf32>
    %c0_53 = arith.constant 0 : index
    %c3 = arith.constant 3 : index
    %c0_54 = arith.constant 0 : index
    %c0_55 = arith.constant 0 : index
    %139 = vector.load %arg6[%c0_53, %c3, %c0_54, %c0_55] : memref<2x4x8x32xf32, #tpu.memory_space<vmem>>, vector<1x1x8x32xf32>
    %140 = vector.shape_cast %139 : vector<1x1x8x32xf32> to vector<8x32xf32>
    %cst_56 = arith.constant dense<0.000000e+00> : vector<16x32xf32>
    %141 = tpu.matmul %138, %140, %cst_56 {dimension_numbers = #tpu.dot_dimension_numbers<[1], [0], [0], [1], [0, 0, 1, 1], [], []>} : vector<16x8xf32>, vector<8x32xf32>, vector<16x32xf32> -> vector<16x32xf32>
    %142 = arith.addf %116, %141 : vector<16x32xf32>
    %c0_57 = arith.constant 0 : index
    %c0_58 = arith.constant 0 : index
    %c0_59 = arith.constant 0 : index
    %143 = vector.load %arg7[%c0_57, %c0_58, %c0_59] : memref<2x1x32xf32, #tpu.memory_space<vmem>>, vector<1x1x32xf32>
    %144 = vector.shape_cast %143 : vector<1x1x32xf32> to vector<1x32xf32>
    %145 = vector.broadcast %144 : vector<1x32xf32> to vector<16x32xf32>
    %146 = arith.addf %142, %145 : vector<16x32xf32>
    %147 = arith.addf %146, %24 : vector<16x32xf32>
    %c0_60 = arith.constant 0 : index
    %c0_61 = arith.constant 0 : index
    %c0_62 = arith.constant 0 : index
    %148 = vector.load %arg8[%c0_60, %c0_61, %c0_62] : memref<2x1x32xf32, #tpu.memory_space<vmem>>, vector<1x1x32xf32>
    %149 = vector.shape_cast %148 : vector<1x1x32xf32> to vector<1x32xf32>
    %c0_63 = arith.constant 0 : index
    %c0_64 = arith.constant 0 : index
    %c0_65 = arith.constant 0 : index
    %150 = vector.load %arg9[%c0_63, %c0_64, %c0_65] : memref<2x1x32xf32, #tpu.memory_space<vmem>>, vector<1x1x32xf32>
    %151 = vector.shape_cast %150 : vector<1x1x32xf32> to vector<1x32xf32>
    %cst_66 = arith.constant dense<0.000000e+00> : vector<16xf32>
    %152 = vector.multi_reduction <add>, %147, %cst_66 [1] : vector<16x32xf32> to vector<16xf32>
    %153 = vector.shape_cast %152 : vector<16xf32> to vector<16x1xf32>
    %cst_67 = arith.constant 3.200000e+01 : f32
    %154 = vector.broadcast %cst_67 : f32 to vector<16x1xf32>
    %155 = arith.divf %153, %154 : vector<16x1xf32>
    %156 = vector.broadcast %155 : vector<16x1xf32> to vector<16x32xf32>
    %157 = arith.subf %147, %156 : vector<16x32xf32>
    %158 = arith.mulf %157, %157 : vector<16x32xf32>
    %cst_68 = arith.constant dense<0.000000e+00> : vector<16xf32>
    %159 = vector.multi_reduction <add>, %158, %cst_68 [1] : vector<16x32xf32> to vector<16xf32>
    %160 = vector.shape_cast %159 : vector<16xf32> to vector<16x1xf32>
    %cst_69 = arith.constant 3.200000e+01 : f32
    %161 = vector.broadcast %cst_69 : f32 to vector<16x1xf32>
    %162 = arith.divf %160, %161 : vector<16x1xf32>
    %163 = vector.broadcast %155 : vector<16x1xf32> to vector<16x32xf32>
    %164 = arith.subf %147, %163 : vector<16x32xf32>
    %cst_70 = arith.constant 9.99999996E-13 : f32
    %165 = vector.broadcast %cst_70 : f32 to vector<16x1xf32>
    %166 = arith.addf %162, %165 : vector<16x1xf32>
    %167 = math.rsqrt %166 : vector<16x1xf32>
    %168 = vector.broadcast %167 : vector<16x1xf32> to vector<16x32xf32>
    %169 = arith.mulf %164, %168 : vector<16x32xf32>
    %170 = vector.broadcast %149 : vector<1x32xf32> to vector<16x32xf32>
    %171 = arith.mulf %169, %170 : vector<16x32xf32>
    %172 = vector.broadcast %151 : vector<1x32xf32> to vector<16x32xf32>
    %173 = arith.addf %171, %172 : vector<16x32xf32>
    %c0_71 = arith.constant 0 : index
    %c0_72 = arith.constant 0 : index
    %c0_73 = arith.constant 0 : index
    %174 = vector.load %arg10[%c0_71, %c0_72, %c0_73] : memref<2x32x64xf32, #tpu.memory_space<vmem>>, vector<1x32x64xf32>
    %175 = vector.shape_cast %174 : vector<1x32x64xf32> to vector<32x64xf32>
    %cst_74 = arith.constant dense<0.000000e+00> : vector<16x64xf32>
    %176 = tpu.matmul %173, %175, %cst_74 {dimension_numbers = #tpu.dot_dimension_numbers<[1], [0], [0], [1], [0, 0, 1, 1], [], []>} : vector<16x32xf32>, vector<32x64xf32>, vector<16x64xf32> -> vector<16x64xf32>
    %c0_75 = arith.constant 0 : index
    %c0_76 = arith.constant 0 : index
    %c0_77 = arith.constant 0 : index
    %177 = vector.load %arg11[%c0_75, %c0_76, %c0_77] : memref<2x1x64xf32, #tpu.memory_space<vmem>>, vector<1x1x64xf32>
    %178 = vector.shape_cast %177 : vector<1x1x64xf32> to vector<1x64xf32>
    %179 = vector.broadcast %178 : vector<1x64xf32> to vector<16x64xf32>
    %180 = arith.addf %176, %179 : vector<16x64xf32>
    %cst_78 = arith.constant 5.000000e-01 : f32
    %181 = vector.broadcast %cst_78 : f32 to vector<16x64xf32>
    %182 = arith.mulf %181, %180 : vector<16x64xf32>
    %cst_79 = arith.constant 0.707106769 : f32
    %183 = vector.broadcast %cst_79 : f32 to vector<16x64xf32>
    %184 = arith.mulf %180, %183 : vector<16x64xf32>
    %185 = math.absf %184 : vector<16x64xf32>
    %cst_80 = arith.constant 0.327591091 : f32
    %186 = vector.broadcast %cst_80 : f32 to vector<16x64xf32>
    %187 = arith.mulf %186, %185 : vector<16x64xf32>
    %cst_81 = arith.constant 1.000000e+00 : f32
    %188 = vector.broadcast %cst_81 : f32 to vector<16x64xf32>
    %189 = arith.addf %188, %187 : vector<16x64xf32>
    %cst_82 = arith.constant 1.000000e+00 : f32
    %190 = vector.broadcast %cst_82 : f32 to vector<16x64xf32>
    %191 = arith.divf %190, %189 : vector<16x64xf32>
    %cst_83 = arith.constant 1.06140542 : f32
    %192 = vector.broadcast %cst_83 : f32 to vector<16x64xf32>
    %193 = arith.mulf %192, %191 : vector<16x64xf32>
    %cst_84 = arith.constant -1.45315206 : f32
    %194 = vector.broadcast %cst_84 : f32 to vector<16x64xf32>
    %195 = arith.addf %193, %194 : vector<16x64xf32>
    %196 = arith.mulf %195, %191 : vector<16x64xf32>
    %cst_85 = arith.constant 1.42141378 : f32
    %197 = vector.broadcast %cst_85 : f32 to vector<16x64xf32>
    %198 = arith.addf %196, %197 : vector<16x64xf32>
    %199 = arith.mulf %198, %191 : vector<16x64xf32>
    %cst_86 = arith.constant -0.284496725 : f32
    %200 = vector.broadcast %cst_86 : f32 to vector<16x64xf32>
    %201 = arith.addf %199, %200 : vector<16x64xf32>
    %202 = arith.mulf %201, %191 : vector<16x64xf32>
    %cst_87 = arith.constant 0.254829586 : f32
    %203 = vector.broadcast %cst_87 : f32 to vector<16x64xf32>
    %204 = arith.addf %202, %203 : vector<16x64xf32>
    %205 = arith.mulf %204, %191 : vector<16x64xf32>
    %cst_88 = arith.constant 0.000000e+00 : f32
    %206 = vector.broadcast %cst_88 : f32 to vector<16x64xf32>
    %207 = arith.subf %206, %185 : vector<16x64xf32>
    %208 = arith.mulf %207, %185 : vector<16x64xf32>
    %209 = math.exp %208 : vector<16x64xf32>
    %210 = arith.mulf %205, %209 : vector<16x64xf32>
    %cst_89 = arith.constant 1.000000e+00 : f32
    %211 = vector.broadcast %cst_89 : f32 to vector<16x64xf32>
    %212 = arith.subf %211, %210 : vector<16x64xf32>
    %cst_90 = arith.constant 0.000000e+00 : f32
    %213 = vector.broadcast %cst_90 : f32 to vector<16x64xf32>
    %214 = arith.cmpf oge, %184, %213 : vector<16x64xf32>
    %cst_91 = arith.constant 0.000000e+00 : f32
    %215 = vector.broadcast %cst_91 : f32 to vector<16x64xf32>
    %216 = arith.subf %215, %212 : vector<16x64xf32>
    %217 = arith.select %214, %212, %216 : vector<16x64xi1>, vector<16x64xf32>
    %cst_92 = arith.constant 1.000000e+00 : f32
    %218 = vector.broadcast %cst_92 : f32 to vector<16x64xf32>
    %219 = arith.addf %218, %217 : vector<16x64xf32>
    %220 = arith.mulf %182, %219 : vector<16x64xf32>
    %c0_93 = arith.constant 0 : index
    %c0_94 = arith.constant 0 : index
    %c0_95 = arith.constant 0 : index
    %221 = vector.load %arg12[%c0_93, %c0_94, %c0_95] : memref<2x64x32xf32, #tpu.memory_space<vmem>>, vector<1x64x32xf32>
    %222 = vector.shape_cast %221 : vector<1x64x32xf32> to vector<64x32xf32>
    %cst_96 = arith.constant dense<0.000000e+00> : vector<16x32xf32>
    %223 = tpu.matmul %220, %222, %cst_96 {dimension_numbers = #tpu.dot_dimension_numbers<[1], [0], [0], [1], [0, 0, 1, 1], [], []>} : vector<16x64xf32>, vector<64x32xf32>, vector<16x32xf32> -> vector<16x32xf32>
    %c0_97 = arith.constant 0 : index
    %c0_98 = arith.constant 0 : index
    %c0_99 = arith.constant 0 : index
    %224 = vector.load %arg13[%c0_97, %c0_98, %c0_99] : memref<2x1x32xf32, #tpu.memory_space<vmem>>, vector<1x1x32xf32>
    %225 = vector.shape_cast %224 : vector<1x1x32xf32> to vector<1x32xf32>
    %226 = vector.broadcast %225 : vector<1x32xf32> to vector<16x32xf32>
    %227 = arith.addf %223, %226 : vector<16x32xf32>
    %228 = arith.addf %227, %173 : vector<16x32xf32>
    %c0_100 = arith.constant 0 : index
    %c0_101 = arith.constant 0 : index
    %c0_102 = arith.constant 0 : index
    %229 = vector.load %arg14[%c0_100, %c0_101, %c0_102] : memref<2x1x32xf32, #tpu.memory_space<vmem>>, vector<1x1x32xf32>
    %230 = vector.shape_cast %229 : vector<1x1x32xf32> to vector<1x32xf32>
    %c0_103 = arith.constant 0 : index
    %c0_104 = arith.constant 0 : index
    %c0_105 = arith.constant 0 : index
    %231 = vector.load %arg15[%c0_103, %c0_104, %c0_105] : memref<2x1x32xf32, #tpu.memory_space<vmem>>, vector<1x1x32xf32>
    %232 = vector.shape_cast %231 : vector<1x1x32xf32> to vector<1x32xf32>
    %cst_106 = arith.constant dense<0.000000e+00> : vector<16xf32>
    %233 = vector.multi_reduction <add>, %228, %cst_106 [1] : vector<16x32xf32> to vector<16xf32>
    %234 = vector.shape_cast %233 : vector<16xf32> to vector<16x1xf32>
    %cst_107 = arith.constant 3.200000e+01 : f32
    %235 = vector.broadcast %cst_107 : f32 to vector<16x1xf32>
    %236 = arith.divf %234, %235 : vector<16x1xf32>
    %237 = vector.broadcast %236 : vector<16x1xf32> to vector<16x32xf32>
    %238 = arith.subf %228, %237 : vector<16x32xf32>
    %239 = arith.mulf %238, %238 : vector<16x32xf32>
    %cst_108 = arith.constant dense<0.000000e+00> : vector<16xf32>
    %240 = vector.multi_reduction <add>, %239, %cst_108 [1] : vector<16x32xf32> to vector<16xf32>
    %241 = vector.shape_cast %240 : vector<16xf32> to vector<16x1xf32>
    %cst_109 = arith.constant 3.200000e+01 : f32
    %242 = vector.broadcast %cst_109 : f32 to vector<16x1xf32>
    %243 = arith.divf %241, %242 : vector<16x1xf32>
    %244 = vector.broadcast %236 : vector<16x1xf32> to vector<16x32xf32>
    %245 = arith.subf %228, %244 : vector<16x32xf32>
    %cst_110 = arith.constant 9.99999996E-13 : f32
    %246 = vector.broadcast %cst_110 : f32 to vector<16x1xf32>
    %247 = arith.addf %243, %246 : vector<16x1xf32>
    %248 = math.rsqrt %247 : vector<16x1xf32>
    %249 = vector.broadcast %248 : vector<16x1xf32> to vector<16x32xf32>
    %250 = arith.mulf %245, %249 : vector<16x32xf32>
    %251 = vector.broadcast %230 : vector<1x32xf32> to vector<16x32xf32>
    %252 = arith.mulf %250, %251 : vector<16x32xf32>
    %253 = vector.broadcast %232 : vector<1x32xf32> to vector<16x32xf32>
    %254 = arith.addf %252, %253 : vector<16x32xf32>
    %c1_111 = arith.constant 1 : index
    %c0_112 = arith.constant 0 : index
    %c0_113 = arith.constant 0 : index
    %255 = vector.load %arg4[%c1_111, %c0_112, %c0_113] : memref<2x32x96xf32, #tpu.memory_space<vmem>>, vector<1x32x96xf32>
    %256 = vector.shape_cast %255 : vector<1x32x96xf32> to vector<32x96xf32>
    %cst_114 = arith.constant dense<0.000000e+00> : vector<16x96xf32>
    %257 = tpu.matmul %254, %256, %cst_114 {dimension_numbers = #tpu.dot_dimension_numbers<[1], [0], [0], [1], [0, 0, 1, 1], [], []>} : vector<16x32xf32>, vector<32x96xf32>, vector<16x96xf32> -> vector<16x96xf32>
    %c1_115 = arith.constant 1 : index
    %c0_116 = arith.constant 0 : index
    %c0_117 = arith.constant 0 : index
    %258 = vector.load %arg5[%c1_115, %c0_116, %c0_117] : memref<2x1x96xf32, #tpu.memory_space<vmem>>, vector<1x1x96xf32>
    %259 = vector.shape_cast %258 : vector<1x1x96xf32> to vector<1x96xf32>
    %260 = vector.broadcast %259 : vector<1x96xf32> to vector<16x96xf32>
    %261 = arith.addf %257, %260 : vector<16x96xf32>
    %262 = vector.extract_strided_slice %261 {offsets = [0, 0], sizes = [16, 8], strides = [1, 1]} : vector<16x96xf32> to vector<16x8xf32>
    %263 = vector.shape_cast %262 : vector<16x8xf32> to vector<2x8x8xf32>
    %264 = vector.extract_strided_slice %261 {offsets = [0, 32], sizes = [16, 8], strides = [1, 1]} : vector<16x96xf32> to vector<16x8xf32>
    %265 = vector.shape_cast %264 : vector<16x8xf32> to vector<2x8x8xf32>
    %266 = vector.extract_strided_slice %261 {offsets = [0, 64], sizes = [16, 8], strides = [1, 1]} : vector<16x96xf32> to vector<16x8xf32>
    %267 = vector.shape_cast %266 : vector<16x8xf32> to vector<2x8x8xf32>
    "tpu.trace_start"() <{level = 10 : i32, message = "bqd,bkd->bqk"}> : () -> ()
    %cst_118 = arith.constant dense<0.000000e+00> : vector<2x8x8xf32>
    %268 = tpu.matmul %263, %265, %cst_118 {dimension_numbers = #tpu.dot_dimension_numbers<[2], [2], [1], [1], [0, 0, 0, 1, 1, 1], [0], [0]>} : vector<2x8x8xf32>, vector<2x8x8xf32>, vector<2x8x8xf32> -> vector<2x8x8xf32>
    "tpu.trace_stop"() : () -> ()
    %cst_119 = arith.constant 0.353553385 : f32
    %269 = vector.broadcast %cst_119 : f32 to vector<2x8x8xf32>
    %270 = arith.mulf %268, %269 : vector<2x8x8xf32>
    %271 = arith.addf %270, %32 : vector<2x8x8xf32>
    %cst_120 = arith.constant dense<0xFF800000> : vector<2x8xf32>
    %272 = vector.multi_reduction <maximumf>, %271, %cst_120 [2] : vector<2x8x8xf32> to vector<2x8xf32>
    %273 = vector.shape_cast %272 : vector<2x8xf32> to vector<2x8x1xf32>
    %274 = vector.broadcast %273 : vector<2x8x1xf32> to vector<2x8x8xf32>
    %275 = arith.subf %271, %274 : vector<2x8x8xf32>
    %276 = math.exp %275 : vector<2x8x8xf32>
    %cst_121 = arith.constant dense<0.000000e+00> : vector<2x8xf32>
    %277 = vector.multi_reduction <add>, %276, %cst_121 [2] : vector<2x8x8xf32> to vector<2x8xf32>
    %278 = vector.shape_cast %277 : vector<2x8xf32> to vector<2x8x1xf32>
    %279 = tpu.reciprocal %278 {approx = true} : vector<2x8x1xf32> -> vector<2x8x1xf32>
    %280 = vector.broadcast %279 : vector<2x8x1xf32> to vector<2x8x8xf32>
    %281 = arith.mulf %276, %280 : vector<2x8x8xf32>
    "tpu.trace_start"() <{level = 10 : i32, message = "bqk,bkd->bqd"}> : () -> ()
    %cst_122 = arith.constant dense<0.000000e+00> : vector<2x8x8xf32>
    %282 = tpu.matmul %281, %267, %cst_122 {dimension_numbers = #tpu.dot_dimension_numbers<[2], [1], [1], [2], [0, 0, 0, 1, 1, 2], [0], [0]>} : vector<2x8x8xf32>, vector<2x8x8xf32>, vector<2x8x8xf32> -> vector<2x8x8xf32>
    "tpu.trace_stop"() : () -> ()
    %283 = vector.shape_cast %282 : vector<2x8x8xf32> to vector<16x8xf32>
    %c1_123 = arith.constant 1 : index
    %c0_124 = arith.constant 0 : index
    %c0_125 = arith.constant 0 : index
    %c0_126 = arith.constant 0 : index
    %284 = vector.load %arg6[%c1_123, %c0_124, %c0_125, %c0_126] : memref<2x4x8x32xf32, #tpu.memory_space<vmem>>, vector<1x1x8x32xf32>
    %285 = vector.shape_cast %284 : vector<1x1x8x32xf32> to vector<8x32xf32>
    %cst_127 = arith.constant dense<0.000000e+00> : vector<16x32xf32>
    %286 = tpu.matmul %283, %285, %cst_127 {dimension_numbers = #tpu.dot_dimension_numbers<[1], [0], [0], [1], [0, 0, 1, 1], [], []>} : vector<16x8xf32>, vector<8x32xf32>, vector<16x32xf32> -> vector<16x32xf32>
    %287 = vector.extract_strided_slice %261 {offsets = [0, 8], sizes = [16, 8], strides = [1, 1]} : vector<16x96xf32> to vector<16x8xf32>
    %288 = vector.shape_cast %287 : vector<16x8xf32> to vector<2x8x8xf32>
    %289 = vector.extract_strided_slice %261 {offsets = [0, 40], sizes = [16, 8], strides = [1, 1]} : vector<16x96xf32> to vector<16x8xf32>
    %290 = vector.shape_cast %289 : vector<16x8xf32> to vector<2x8x8xf32>
    %291 = vector.extract_strided_slice %261 {offsets = [0, 72], sizes = [16, 8], strides = [1, 1]} : vector<16x96xf32> to vector<16x8xf32>
    %292 = vector.shape_cast %291 : vector<16x8xf32> to vector<2x8x8xf32>
    "tpu.trace_start"() <{level = 10 : i32, message = "bqd,bkd->bqk"}> : () -> ()
    %cst_128 = arith.constant dense<0.000000e+00> : vector<2x8x8xf32>
    %293 = tpu.matmul %288, %290, %cst_128 {dimension_numbers = #tpu.dot_dimension_numbers<[2], [2], [1], [1], [0, 0, 0, 1, 1, 1], [0], [0]>} : vector<2x8x8xf32>, vector<2x8x8xf32>, vector<2x8x8xf32> -> vector<2x8x8xf32>
    "tpu.trace_stop"() : () -> ()
    %cst_129 = arith.constant 0.353553385 : f32
    %294 = vector.broadcast %cst_129 : f32 to vector<2x8x8xf32>
    %295 = arith.mulf %293, %294 : vector<2x8x8xf32>
    %296 = arith.addf %295, %32 : vector<2x8x8xf32>
    %cst_130 = arith.constant dense<0xFF800000> : vector<2x8xf32>
    %297 = vector.multi_reduction <maximumf>, %296, %cst_130 [2] : vector<2x8x8xf32> to vector<2x8xf32>
    %298 = vector.shape_cast %297 : vector<2x8xf32> to vector<2x8x1xf32>
    %299 = vector.broadcast %298 : vector<2x8x1xf32> to vector<2x8x8xf32>
    %300 = arith.subf %296, %299 : vector<2x8x8xf32>
    %301 = math.exp %300 : vector<2x8x8xf32>
    %cst_131 = arith.constant dense<0.000000e+00> : vector<2x8xf32>
    %302 = vector.multi_reduction <add>, %301, %cst_131 [2] : vector<2x8x8xf32> to vector<2x8xf32>
    %303 = vector.shape_cast %302 : vector<2x8xf32> to vector<2x8x1xf32>
    %304 = tpu.reciprocal %303 {approx = true} : vector<2x8x1xf32> -> vector<2x8x1xf32>
    %305 = vector.broadcast %304 : vector<2x8x1xf32> to vector<2x8x8xf32>
    %306 = arith.mulf %301, %305 : vector<2x8x8xf32>
    "tpu.trace_start"() <{level = 10 : i32, message = "bqk,bkd->bqd"}> : () -> ()
    %cst_132 = arith.constant dense<0.000000e+00> : vector<2x8x8xf32>
    %307 = tpu.matmul %306, %292, %cst_132 {dimension_numbers = #tpu.dot_dimension_numbers<[2], [1], [1], [2], [0, 0, 0, 1, 1, 2], [0], [0]>} : vector<2x8x8xf32>, vector<2x8x8xf32>, vector<2x8x8xf32> -> vector<2x8x8xf32>
    "tpu.trace_stop"() : () -> ()
    %308 = vector.shape_cast %307 : vector<2x8x8xf32> to vector<16x8xf32>
    %c1_133 = arith.constant 1 : index
    %c1_134 = arith.constant 1 : index
    %c0_135 = arith.constant 0 : index
    %c0_136 = arith.constant 0 : index
    %309 = vector.load %arg6[%c1_133, %c1_134, %c0_135, %c0_136] : memref<2x4x8x32xf32, #tpu.memory_space<vmem>>, vector<1x1x8x32xf32>
    %310 = vector.shape_cast %309 : vector<1x1x8x32xf32> to vector<8x32xf32>
    %cst_137 = arith.constant dense<0.000000e+00> : vector<16x32xf32>
    %311 = tpu.matmul %308, %310, %cst_137 {dimension_numbers = #tpu.dot_dimension_numbers<[1], [0], [0], [1], [0, 0, 1, 1], [], []>} : vector<16x8xf32>, vector<8x32xf32>, vector<16x32xf32> -> vector<16x32xf32>
    %312 = arith.addf %286, %311 : vector<16x32xf32>
    %313 = vector.extract_strided_slice %261 {offsets = [0, 16], sizes = [16, 8], strides = [1, 1]} : vector<16x96xf32> to vector<16x8xf32>
    %314 = vector.shape_cast %313 : vector<16x8xf32> to vector<2x8x8xf32>
    %315 = vector.extract_strided_slice %261 {offsets = [0, 48], sizes = [16, 8], strides = [1, 1]} : vector<16x96xf32> to vector<16x8xf32>
    %316 = vector.shape_cast %315 : vector<16x8xf32> to vector<2x8x8xf32>
    %317 = vector.extract_strided_slice %261 {offsets = [0, 80], sizes = [16, 8], strides = [1, 1]} : vector<16x96xf32> to vector<16x8xf32>
    %318 = vector.shape_cast %317 : vector<16x8xf32> to vector<2x8x8xf32>
    "tpu.trace_start"() <{level = 10 : i32, message = "bqd,bkd->bqk"}> : () -> ()
    %cst_138 = arith.constant dense<0.000000e+00> : vector<2x8x8xf32>
    %319 = tpu.matmul %314, %316, %cst_138 {dimension_numbers = #tpu.dot_dimension_numbers<[2], [2], [1], [1], [0, 0, 0, 1, 1, 1], [0], [0]>} : vector<2x8x8xf32>, vector<2x8x8xf32>, vector<2x8x8xf32> -> vector<2x8x8xf32>
    "tpu.trace_stop"() : () -> ()
    %cst_139 = arith.constant 0.353553385 : f32
    %320 = vector.broadcast %cst_139 : f32 to vector<2x8x8xf32>
    %321 = arith.mulf %319, %320 : vector<2x8x8xf32>
    %322 = arith.addf %321, %32 : vector<2x8x8xf32>
    %cst_140 = arith.constant dense<0xFF800000> : vector<2x8xf32>
    %323 = vector.multi_reduction <maximumf>, %322, %cst_140 [2] : vector<2x8x8xf32> to vector<2x8xf32>
    %324 = vector.shape_cast %323 : vector<2x8xf32> to vector<2x8x1xf32>
    %325 = vector.broadcast %324 : vector<2x8x1xf32> to vector<2x8x8xf32>
    %326 = arith.subf %322, %325 : vector<2x8x8xf32>
    %327 = math.exp %326 : vector<2x8x8xf32>
    %cst_141 = arith.constant dense<0.000000e+00> : vector<2x8xf32>
    %328 = vector.multi_reduction <add>, %327, %cst_141 [2] : vector<2x8x8xf32> to vector<2x8xf32>
    %329 = vector.shape_cast %328 : vector<2x8xf32> to vector<2x8x1xf32>
    %330 = tpu.reciprocal %329 {approx = true} : vector<2x8x1xf32> -> vector<2x8x1xf32>
    %331 = vector.broadcast %330 : vector<2x8x1xf32> to vector<2x8x8xf32>
    %332 = arith.mulf %327, %331 : vector<2x8x8xf32>
    "tpu.trace_start"() <{level = 10 : i32, message = "bqk,bkd->bqd"}> : () -> ()
    %cst_142 = arith.constant dense<0.000000e+00> : vector<2x8x8xf32>
    %333 = tpu.matmul %332, %318, %cst_142 {dimension_numbers = #tpu.dot_dimension_numbers<[2], [1], [1], [2], [0, 0, 0, 1, 1, 2], [0], [0]>} : vector<2x8x8xf32>, vector<2x8x8xf32>, vector<2x8x8xf32> -> vector<2x8x8xf32>
    "tpu.trace_stop"() : () -> ()
    %334 = vector.shape_cast %333 : vector<2x8x8xf32> to vector<16x8xf32>
    %c1_143 = arith.constant 1 : index
    %c2_144 = arith.constant 2 : index
    %c0_145 = arith.constant 0 : index
    %c0_146 = arith.constant 0 : index
    %335 = vector.load %arg6[%c1_143, %c2_144, %c0_145, %c0_146] : memref<2x4x8x32xf32, #tpu.memory_space<vmem>>, vector<1x1x8x32xf32>
    %336 = vector.shape_cast %335 : vector<1x1x8x32xf32> to vector<8x32xf32>
    %cst_147 = arith.constant dense<0.000000e+00> : vector<16x32xf32>
    %337 = tpu.matmul %334, %336, %cst_147 {dimension_numbers = #tpu.dot_dimension_numbers<[1], [0], [0], [1], [0, 0, 1, 1], [], []>} : vector<16x8xf32>, vector<8x32xf32>, vector<16x32xf32> -> vector<16x32xf32>
    %338 = arith.addf %312, %337 : vector<16x32xf32>
    %339 = vector.extract_strided_slice %261 {offsets = [0, 24], sizes = [16, 8], strides = [1, 1]} : vector<16x96xf32> to vector<16x8xf32>
    %340 = vector.shape_cast %339 : vector<16x8xf32> to vector<2x8x8xf32>
    %341 = vector.extract_strided_slice %261 {offsets = [0, 56], sizes = [16, 8], strides = [1, 1]} : vector<16x96xf32> to vector<16x8xf32>
    %342 = vector.shape_cast %341 : vector<16x8xf32> to vector<2x8x8xf32>
    %343 = vector.extract_strided_slice %261 {offsets = [0, 88], sizes = [16, 8], strides = [1, 1]} : vector<16x96xf32> to vector<16x8xf32>
    %344 = vector.shape_cast %343 : vector<16x8xf32> to vector<2x8x8xf32>
    "tpu.trace_start"() <{level = 10 : i32, message = "bqd,bkd->bqk"}> : () -> ()
    %cst_148 = arith.constant dense<0.000000e+00> : vector<2x8x8xf32>
    %345 = tpu.matmul %340, %342, %cst_148 {dimension_numbers = #tpu.dot_dimension_numbers<[2], [2], [1], [1], [0, 0, 0, 1, 1, 1], [0], [0]>} : vector<2x8x8xf32>, vector<2x8x8xf32>, vector<2x8x8xf32> -> vector<2x8x8xf32>
    "tpu.trace_stop"() : () -> ()
    %cst_149 = arith.constant 0.353553385 : f32
    %346 = vector.broadcast %cst_149 : f32 to vector<2x8x8xf32>
    %347 = arith.mulf %345, %346 : vector<2x8x8xf32>
    %348 = arith.addf %347, %32 : vector<2x8x8xf32>
    %cst_150 = arith.constant dense<0xFF800000> : vector<2x8xf32>
    %349 = vector.multi_reduction <maximumf>, %348, %cst_150 [2] : vector<2x8x8xf32> to vector<2x8xf32>
    %350 = vector.shape_cast %349 : vector<2x8xf32> to vector<2x8x1xf32>
    %351 = vector.broadcast %350 : vector<2x8x1xf32> to vector<2x8x8xf32>
    %352 = arith.subf %348, %351 : vector<2x8x8xf32>
    %353 = math.exp %352 : vector<2x8x8xf32>
    %cst_151 = arith.constant dense<0.000000e+00> : vector<2x8xf32>
    %354 = vector.multi_reduction <add>, %353, %cst_151 [2] : vector<2x8x8xf32> to vector<2x8xf32>
    %355 = vector.shape_cast %354 : vector<2x8xf32> to vector<2x8x1xf32>
    %356 = tpu.reciprocal %355 {approx = true} : vector<2x8x1xf32> -> vector<2x8x1xf32>
    %357 = vector.broadcast %356 : vector<2x8x1xf32> to vector<2x8x8xf32>
    %358 = arith.mulf %353, %357 : vector<2x8x8xf32>
    "tpu.trace_start"() <{level = 10 : i32, message = "bqk,bkd->bqd"}> : () -> ()
    %cst_152 = arith.constant dense<0.000000e+00> : vector<2x8x8xf32>
    %359 = tpu.matmul %358, %344, %cst_152 {dimension_numbers = #tpu.dot_dimension_numbers<[2], [1], [1], [2], [0, 0, 0, 1, 1, 2], [0], [0]>} : vector<2x8x8xf32>, vector<2x8x8xf32>, vector<2x8x8xf32> -> vector<2x8x8xf32>
    "tpu.trace_stop"() : () -> ()
    %360 = vector.shape_cast %359 : vector<2x8x8xf32> to vector<16x8xf32>
    %c1_153 = arith.constant 1 : index
    %c3_154 = arith.constant 3 : index
    %c0_155 = arith.constant 0 : index
    %c0_156 = arith.constant 0 : index
    %361 = vector.load %arg6[%c1_153, %c3_154, %c0_155, %c0_156] : memref<2x4x8x32xf32, #tpu.memory_space<vmem>>, vector<1x1x8x32xf32>
    %362 = vector.shape_cast %361 : vector<1x1x8x32xf32> to vector<8x32xf32>
    %cst_157 = arith.constant dense<0.000000e+00> : vector<16x32xf32>
    %363 = tpu.matmul %360, %362, %cst_157 {dimension_numbers = #tpu.dot_dimension_numbers<[1], [0], [0], [1], [0, 0, 1, 1], [], []>} : vector<16x8xf32>, vector<8x32xf32>, vector<16x32xf32> -> vector<16x32xf32>
    %364 = arith.addf %338, %363 : vector<16x32xf32>
    %c1_158 = arith.constant 1 : index
    %c0_159 = arith.constant 0 : index
    %c0_160 = arith.constant 0 : index
    %365 = vector.load %arg7[%c1_158, %c0_159, %c0_160] : memref<2x1x32xf32, #tpu.memory_space<vmem>>, vector<1x1x32xf32>
    %366 = vector.shape_cast %365 : vector<1x1x32xf32> to vector<1x32xf32>
    %367 = vector.broadcast %366 : vector<1x32xf32> to vector<16x32xf32>
    %368 = arith.addf %364, %367 : vector<16x32xf32>
    %369 = arith.addf %368, %254 : vector<16x32xf32>
    %c1_161 = arith.constant 1 : index
    %c0_162 = arith.constant 0 : index
    %c0_163 = arith.constant 0 : index
    %370 = vector.load %arg8[%c1_161, %c0_162, %c0_163] : memref<2x1x32xf32, #tpu.memory_space<vmem>>, vector<1x1x32xf32>
    %371 = vector.shape_cast %370 : vector<1x1x32xf32> to vector<1x32xf32>
    %c1_164 = arith.constant 1 : index
    %c0_165 = arith.constant 0 : index
    %c0_166 = arith.constant 0 : index
    %372 = vector.load %arg9[%c1_164, %c0_165, %c0_166] : memref<2x1x32xf32, #tpu.memory_space<vmem>>, vector<1x1x32xf32>
    %373 = vector.shape_cast %372 : vector<1x1x32xf32> to vector<1x32xf32>
    %cst_167 = arith.constant dense<0.000000e+00> : vector<16xf32>
    %374 = vector.multi_reduction <add>, %369, %cst_167 [1] : vector<16x32xf32> to vector<16xf32>
    %375 = vector.shape_cast %374 : vector<16xf32> to vector<16x1xf32>
    %cst_168 = arith.constant 3.200000e+01 : f32
    %376 = vector.broadcast %cst_168 : f32 to vector<16x1xf32>
    %377 = arith.divf %375, %376 : vector<16x1xf32>
    %378 = vector.broadcast %377 : vector<16x1xf32> to vector<16x32xf32>
    %379 = arith.subf %369, %378 : vector<16x32xf32>
    %380 = arith.mulf %379, %379 : vector<16x32xf32>
    %cst_169 = arith.constant dense<0.000000e+00> : vector<16xf32>
    %381 = vector.multi_reduction <add>, %380, %cst_169 [1] : vector<16x32xf32> to vector<16xf32>
    %382 = vector.shape_cast %381 : vector<16xf32> to vector<16x1xf32>
    %cst_170 = arith.constant 3.200000e+01 : f32
    %383 = vector.broadcast %cst_170 : f32 to vector<16x1xf32>
    %384 = arith.divf %382, %383 : vector<16x1xf32>
    %385 = vector.broadcast %377 : vector<16x1xf32> to vector<16x32xf32>
    %386 = arith.subf %369, %385 : vector<16x32xf32>
    %cst_171 = arith.constant 9.99999996E-13 : f32
    %387 = vector.broadcast %cst_171 : f32 to vector<16x1xf32>
    %388 = arith.addf %384, %387 : vector<16x1xf32>
    %389 = math.rsqrt %388 : vector<16x1xf32>
    %390 = vector.broadcast %389 : vector<16x1xf32> to vector<16x32xf32>
    %391 = arith.mulf %386, %390 : vector<16x32xf32>
    %392 = vector.broadcast %371 : vector<1x32xf32> to vector<16x32xf32>
    %393 = arith.mulf %391, %392 : vector<16x32xf32>
    %394 = vector.broadcast %373 : vector<1x32xf32> to vector<16x32xf32>
    %395 = arith.addf %393, %394 : vector<16x32xf32>
    %c1_172 = arith.constant 1 : index
    %c0_173 = arith.constant 0 : index
    %c0_174 = arith.constant 0 : index
    %396 = vector.load %arg10[%c1_172, %c0_173, %c0_174] : memref<2x32x64xf32, #tpu.memory_space<vmem>>, vector<1x32x64xf32>
    %397 = vector.shape_cast %396 : vector<1x32x64xf32> to vector<32x64xf32>
    %cst_175 = arith.constant dense<0.000000e+00> : vector<16x64xf32>
    %398 = tpu.matmul %395, %397, %cst_175 {dimension_numbers = #tpu.dot_dimension_numbers<[1], [0], [0], [1], [0, 0, 1, 1], [], []>} : vector<16x32xf32>, vector<32x64xf32>, vector<16x64xf32> -> vector<16x64xf32>
    %c1_176 = arith.constant 1 : index
    %c0_177 = arith.constant 0 : index
    %c0_178 = arith.constant 0 : index
    %399 = vector.load %arg11[%c1_176, %c0_177, %c0_178] : memref<2x1x64xf32, #tpu.memory_space<vmem>>, vector<1x1x64xf32>
    %400 = vector.shape_cast %399 : vector<1x1x64xf32> to vector<1x64xf32>
    %401 = vector.broadcast %400 : vector<1x64xf32> to vector<16x64xf32>
    %402 = arith.addf %398, %401 : vector<16x64xf32>
    %cst_179 = arith.constant 5.000000e-01 : f32
    %403 = vector.broadcast %cst_179 : f32 to vector<16x64xf32>
    %404 = arith.mulf %403, %402 : vector<16x64xf32>
    %cst_180 = arith.constant 0.707106769 : f32
    %405 = vector.broadcast %cst_180 : f32 to vector<16x64xf32>
    %406 = arith.mulf %402, %405 : vector<16x64xf32>
    %407 = math.absf %406 : vector<16x64xf32>
    %cst_181 = arith.constant 0.327591091 : f32
    %408 = vector.broadcast %cst_181 : f32 to vector<16x64xf32>
    %409 = arith.mulf %408, %407 : vector<16x64xf32>
    %cst_182 = arith.constant 1.000000e+00 : f32
    %410 = vector.broadcast %cst_182 : f32 to vector<16x64xf32>
    %411 = arith.addf %410, %409 : vector<16x64xf32>
    %cst_183 = arith.constant 1.000000e+00 : f32
    %412 = vector.broadcast %cst_183 : f32 to vector<16x64xf32>
    %413 = arith.divf %412, %411 : vector<16x64xf32>
    %cst_184 = arith.constant 1.06140542 : f32
    %414 = vector.broadcast %cst_184 : f32 to vector<16x64xf32>
    %415 = arith.mulf %414, %413 : vector<16x64xf32>
    %cst_185 = arith.constant -1.45315206 : f32
    %416 = vector.broadcast %cst_185 : f32 to vector<16x64xf32>
    %417 = arith.addf %415, %416 : vector<16x64xf32>
    %418 = arith.mulf %417, %413 : vector<16x64xf32>
    %cst_186 = arith.constant 1.42141378 : f32
    %419 = vector.broadcast %cst_186 : f32 to vector<16x64xf32>
    %420 = arith.addf %418, %419 : vector<16x64xf32>
    %421 = arith.mulf %420, %413 : vector<16x64xf32>
    %cst_187 = arith.constant -0.284496725 : f32
    %422 = vector.broadcast %cst_187 : f32 to vector<16x64xf32>
    %423 = arith.addf %421, %422 : vector<16x64xf32>
    %424 = arith.mulf %423, %413 : vector<16x64xf32>
    %cst_188 = arith.constant 0.254829586 : f32
    %425 = vector.broadcast %cst_188 : f32 to vector<16x64xf32>
    %426 = arith.addf %424, %425 : vector<16x64xf32>
    %427 = arith.mulf %426, %413 : vector<16x64xf32>
    %cst_189 = arith.constant 0.000000e+00 : f32
    %428 = vector.broadcast %cst_189 : f32 to vector<16x64xf32>
    %429 = arith.subf %428, %407 : vector<16x64xf32>
    %430 = arith.mulf %429, %407 : vector<16x64xf32>
    %431 = math.exp %430 : vector<16x64xf32>
    %432 = arith.mulf %427, %431 : vector<16x64xf32>
    %cst_190 = arith.constant 1.000000e+00 : f32
    %433 = vector.broadcast %cst_190 : f32 to vector<16x64xf32>
    %434 = arith.subf %433, %432 : vector<16x64xf32>
    %cst_191 = arith.constant 0.000000e+00 : f32
    %435 = vector.broadcast %cst_191 : f32 to vector<16x64xf32>
    %436 = arith.cmpf oge, %406, %435 : vector<16x64xf32>
    %cst_192 = arith.constant 0.000000e+00 : f32
    %437 = vector.broadcast %cst_192 : f32 to vector<16x64xf32>
    %438 = arith.subf %437, %434 : vector<16x64xf32>
    %439 = arith.select %436, %434, %438 : vector<16x64xi1>, vector<16x64xf32>
    %cst_193 = arith.constant 1.000000e+00 : f32
    %440 = vector.broadcast %cst_193 : f32 to vector<16x64xf32>
    %441 = arith.addf %440, %439 : vector<16x64xf32>
    %442 = arith.mulf %404, %441 : vector<16x64xf32>
    %c1_194 = arith.constant 1 : index
    %c0_195 = arith.constant 0 : index
    %c0_196 = arith.constant 0 : index
    %443 = vector.load %arg12[%c1_194, %c0_195, %c0_196] : memref<2x64x32xf32, #tpu.memory_space<vmem>>, vector<1x64x32xf32>
    %444 = vector.shape_cast %443 : vector<1x64x32xf32> to vector<64x32xf32>
    %cst_197 = arith.constant dense<0.000000e+00> : vector<16x32xf32>
    %445 = tpu.matmul %442, %444, %cst_197 {dimension_numbers = #tpu.dot_dimension_numbers<[1], [0], [0], [1], [0, 0, 1, 1], [], []>} : vector<16x64xf32>, vector<64x32xf32>, vector<16x32xf32> -> vector<16x32xf32>
    %c1_198 = arith.constant 1 : index
    %c0_199 = arith.constant 0 : index
    %c0_200 = arith.constant 0 : index
    %446 = vector.load %arg13[%c1_198, %c0_199, %c0_200] : memref<2x1x32xf32, #tpu.memory_space<vmem>>, vector<1x1x32xf32>
    %447 = vector.shape_cast %446 : vector<1x1x32xf32> to vector<1x32xf32>
    %448 = vector.broadcast %447 : vector<1x32xf32> to vector<16x32xf32>
    %449 = arith.addf %445, %448 : vector<16x32xf32>
    %450 = arith.addf %449, %395 : vector<16x32xf32>
    %c1_201 = arith.constant 1 : index
    %c0_202 = arith.constant 0 : index
    %c0_203 = arith.constant 0 : index
    %451 = vector.load %arg14[%c1_201, %c0_202, %c0_203] : memref<2x1x32xf32, #tpu.memory_space<vmem>>, vector<1x1x32xf32>
    %452 = vector.shape_cast %451 : vector<1x1x32xf32> to vector<1x32xf32>
    %c1_204 = arith.constant 1 : index
    %c0_205 = arith.constant 0 : index
    %c0_206 = arith.constant 0 : index
    %453 = vector.load %arg15[%c1_204, %c0_205, %c0_206] : memref<2x1x32xf32, #tpu.memory_space<vmem>>, vector<1x1x32xf32>
    %454 = vector.shape_cast %453 : vector<1x1x32xf32> to vector<1x32xf32>
    %cst_207 = arith.constant dense<0.000000e+00> : vector<16xf32>
    %455 = vector.multi_reduction <add>, %450, %cst_207 [1] : vector<16x32xf32> to vector<16xf32>
    %456 = vector.shape_cast %455 : vector<16xf32> to vector<16x1xf32>
    %cst_208 = arith.constant 3.200000e+01 : f32
    %457 = vector.broadcast %cst_208 : f32 to vector<16x1xf32>
    %458 = arith.divf %456, %457 : vector<16x1xf32>
    %459 = vector.broadcast %458 : vector<16x1xf32> to vector<16x32xf32>
    %460 = arith.subf %450, %459 : vector<16x32xf32>
    %461 = arith.mulf %460, %460 : vector<16x32xf32>
    %cst_209 = arith.constant dense<0.000000e+00> : vector<16xf32>
    %462 = vector.multi_reduction <add>, %461, %cst_209 [1] : vector<16x32xf32> to vector<16xf32>
    %463 = vector.shape_cast %462 : vector<16xf32> to vector<16x1xf32>
    %cst_210 = arith.constant 3.200000e+01 : f32
    %464 = vector.broadcast %cst_210 : f32 to vector<16x1xf32>
    %465 = arith.divf %463, %464 : vector<16x1xf32>
    %466 = vector.broadcast %458 : vector<16x1xf32> to vector<16x32xf32>
    %467 = arith.subf %450, %466 : vector<16x32xf32>
    %cst_211 = arith.constant 9.99999996E-13 : f32
    %468 = vector.broadcast %cst_211 : f32 to vector<16x1xf32>
    %469 = arith.addf %465, %468 : vector<16x1xf32>
    %470 = math.rsqrt %469 : vector<16x1xf32>
    %471 = vector.broadcast %470 : vector<16x1xf32> to vector<16x32xf32>
    %472 = arith.mulf %467, %471 : vector<16x32xf32>
    %473 = vector.broadcast %452 : vector<1x32xf32> to vector<16x32xf32>
    %474 = arith.mulf %472, %473 : vector<16x32xf32>
    %475 = vector.broadcast %454 : vector<1x32xf32> to vector<16x32xf32>
    %476 = arith.addf %474, %475 : vector<16x32xf32>
    %c0_212 = arith.constant 0 : index
    %c0_213 = arith.constant 0 : index
    %477 = vector.load %arg17[%c0_212, %c0_213] : memref<16x32xf32, #tpu.memory_space<vmem>>, vector<16x32xf32>
    tpu.vector_store %arg17[%c0_212, %c0_213], %476 {strides = array<i32>} : memref<16x32xf32, #tpu.memory_space<vmem>>, vector<16x32xf32>,
    %c0_214 = arith.constant 0 : index
    %c0_215 = arith.constant 0 : index
    %478 = vector.load %arg16[%c0_214, %c0_215] : memref<32x128xf32, #tpu.memory_space<vmem>>, vector<32x128xf32>
    %cst_216 = arith.constant dense<0.000000e+00> : vector<16x128xf32>
    %479 = tpu.matmul %476, %478, %cst_216 {dimension_numbers = #tpu.dot_dimension_numbers<[1], [0], [0], [1], [0, 0, 1, 1], [], []>} : vector<16x32xf32>, vector<32x128xf32>, vector<16x128xf32> -> vector<16x128xf32>
    %c0_217 = arith.constant 0 : index
    %c0_218 = arith.constant 0 : index
    %480 = vector.load %arg18[%c0_217, %c0_218] : memref<16x128xf32, #tpu.memory_space<vmem>>, vector<16x128xf32>
    tpu.vector_store %arg18[%c0_217, %c0_218], %479 {strides = array<i32>} : memref<16x128xf32, #tpu.memory_space<vmem>>, vector<16x128xf32>,
    return
  }
}

</mosaic_0001>

<llo_original>
// kernel: cwsb_forward.1
$region0: #{cwsb_forward.1}
  #allocation0 [shape = 'u32[]', space=smem, size = 0x4, offset = 0x4, fixed_abs, tag = 'smem constant byte address 0x4 - core index']
  #allocation1 [shape = 'u32[144,128]{1,0:T(1,128)}', space=vmem, size = 0x12000, scoped, tag = 'internal scratch']
  %s0 = inlined_call_operand.vmem [shape: f32[16,32], index: 0, kind: input, shape index: {}]
  %s1 = inlined_call_operand.vmem [shape: f32[2,8], index: 1, kind: input, shape index: {}]
  %s2 = inlined_call_operand.vmem [shape: f32[1,32], index: 2, kind: input, shape index: {}]
  %s3 = inlined_call_operand.vmem [shape: f32[1,32], index: 3, kind: input, shape index: {}]
  %s4 = inlined_call_operand.vmem [shape: f32[2,32,96], index: 4, kind: input, shape index: {}]
  %s5 = inlined_call_operand.vmem [shape: f32[2,1,96], index: 5, kind: input, shape index: {}]
  %s6 = inlined_call_operand.vmem [shape: f32[2,4,8,32], index: 6, kind: input, shape index: {}]
  %s7 = inlined_call_operand.vmem [shape: f32[2,1,32], index: 7, kind: input, shape index: {}]
  %s8 = inlined_call_operand.vmem [shape: f32[2,1,32], index: 8, kind: input, shape index: {}]
  %s9 = inlined_call_operand.vmem [shape: f32[2,1,32], index: 9, kind: input, shape index: {}]
  %s10 = inlined_call_operand.vmem [shape: f32[2,32,64], index: 10, kind: input, shape index: {}]
  %s11 = inlined_call_operand.vmem [shape: f32[2,1,64], index: 11, kind: input, shape index: {}]
  %s12 = inlined_call_operand.vmem [shape: f32[2,64,32], index: 12, kind: input, shape index: {}]
  %s13 = inlined_call_operand.vmem [shape: f32[2,1,32], index: 13, kind: input, shape index: {}]
  %s14 = inlined_call_operand.vmem [shape: f32[2,1,32], index: 14, kind: input, shape index: {}]
  %s15 = inlined_call_operand.vmem [shape: f32[2,1,32], index: 15, kind: input, shape index: {}]
  %s16 = inlined_call_operand.vmem [shape: f32[32,128], index: 16, kind: input, shape index: {}]
  %s17 = inlined_call_operand.hbm [shape: f32[16,32], index: 17, kind: output, shape index: {0}]
  %s18 = inlined_call_operand.vmem [shape: f32[16,128], index: 18, kind: output, shape index: {1}]
  %19 = xla_tuple %s17, %s18
  %s20 = sld [smem:[#allocation0]]
  $region86: #{cwsb_forward.1} parent=0
    _
  %s22 = ssub.s32 1, %s20
  %s23 = scalar_select 0, %s22, %s20
  $region1: #{cwsb_forward.1} parent=0
    #allocation2 [shape = 'u8[8192]{0}', space=vmem, size = 0x2000, scoped, tag = 'output window, operand 0, single buffered']
    #allocation3 [shape = 's32[1]{0}', space=sflag, size = 0x4, scoped, tag = 'scoped memory for cwsb_forward.1']
    %24 = vsyncpa [#allocation3], 0
    // Predicated region
    $region2: #{cwsb_forward.1} parent=1 // pred_check
      _
    $region3: #{cwsb_forward.1} parent=1 // pred_check_branch
      %26 = sbr.rel (0) target = $region5
    $region4: #{cwsb_forward.1} parent=1 // pred_region
      _
    $region5: #{cwsb_forward.1} parent=1 // pred_fallthru
      _
    // Predicated region
    $region6: #{cwsb_forward.1} parent=1 // pred_check
      _
    $region7: #{cwsb_forward.1} parent=1 // pred_check_branch
      %28 = sbr.rel (0) target = $region9
    $region8: #{cwsb_forward.1} parent=1 // pred_region
      _
    $region9: #{cwsb_forward.1} parent=1 // pred_fallthru
      _
    // Predicated region
    $region10: #{cwsb_forward.1} parent=1 // pred_check
      _
    $region11: #{cwsb_forward.1} parent=1 // pred_check_branch
      %30 = sbr.rel (0) target = $region13
    $region12: #{cwsb_forward.1} parent=1 // pred_region
      _
    $region13: #{cwsb_forward.1} parent=1 // pred_fallthru
      _
    // Predicated region
    $region14: #{cwsb_forward.1} parent=1 // pred_check
      _
    $region15: #{cwsb_forward.1} parent=1 // pred_check_branch
      %32 = sbr.rel (0) target = $region17
    $region16: #{cwsb_forward.1} parent=1 // pred_region
      _
    $region17: #{cwsb_forward.1} parent=1 // pred_fallthru
      _
    // Predicated region
    $region18: #{cwsb_forward.1} parent=1 // pred_check
      _
    $region19: #{cwsb_forward.1} parent=1 // pred_check_branch
      %34 = sbr.rel (0) target = $region21
    $region20: #{cwsb_forward.1} parent=1 // pred_region
      _
    $region21: #{cwsb_forward.1} parent=1 // pred_fallthru
      _
    // Predicated region
    $region22: #{cwsb_forward.1} parent=1 // pred_check
      _
    $region23: #{cwsb_forward.1} parent=1 // pred_check_branch
      %36 = sbr.rel (0) target = $region25
    $region24: #{cwsb_forward.1} parent=1 // pred_region
      _
    $region25: #{cwsb_forward.1} parent=1 // pred_fallthru
      _
    // Predicated region
    $region26: #{cwsb_forward.1} parent=1 // pred_check
      _
    $region27: #{cwsb_forward.1} parent=1 // pred_check_branch
      %38 = sbr.rel (0) target = $region29
    $region28: #{cwsb_forward.1} parent=1 // pred_region
      _
    $region29: #{cwsb_forward.1} parent=1 // pred_fallthru
      _
    // Predicated region
    $region30: #{cwsb_forward.1} parent=1 // pred_check
      _
    $region31: #{cwsb_forward.1} parent=1 // pred_check_branch
      %40 = sbr.rel (0) target = $region33
    $region32: #{cwsb_forward.1} parent=1 // pred_region
      _
    $region33: #{cwsb_forward.1} parent=1 // pred_fallthru
      _
    // Predicated region
    $region34: #{cwsb_forward.1} parent=1 // pred_check
      _
    $region35: #{cwsb_forward.1} parent=1 // pred_check_branch
      %42 = sbr.rel (0) target = $region37
    $region36: #{cwsb_forward.1} parent=1 // pred_region
      _
    $region37: #{cwsb_forward.1} parent=1 // pred_fallthru
      _
    // Predicated region
    $region38: #{cwsb_forward.1} parent=1 // pred_check
      _
    $region39: #{cwsb_forward.1} parent=1 // pred_check_branch
      %44 = sbr.rel (0) target = $region41
    $region40: #{cwsb_forward.1} parent=1 // pred_region
      _
    $region41: #{cwsb_forward.1} parent=1 // pred_fallthru
      _
    // Predicated region
    $region42: #{cwsb_forward.1} parent=1 // pred_check
      _
    $region43: #{cwsb_forward.1} parent=1 // pred_check_branch
      %46 = sbr.rel (0) target = $region45
    $region44: #{cwsb_forward.1} parent=1 // pred_region
      _
    $region45: #{cwsb_forward.1} parent=1 // pred_fallthru
      _
    // Predicated region
    $region46: #{cwsb_forward.1} parent=1 // pred_check
      _
    $region47: #{cwsb_forward.1} parent=1 // pred_check_branch
      %48 = sbr.rel (0) target = $region49
    $region48: #{cwsb_forward.1} parent=1 // pred_region
      _
    $region49: #{cwsb_forward.1} parent=1 // pred_fallthru
      _
    // Predicated region
    $region50: #{cwsb_forward.1} parent=1 // pred_check
      _
    $region51: #{cwsb_forward.1} parent=1 // pred_check_branch
      %50 = sbr.rel (0) target = $region53
    $region52: #{cwsb_forward.1} parent=1 // pred_region
      _
    $region53: #{cwsb_forward.1} parent=1 // pred_fallthru
      _
    // Predicated region
    $region54: #{cwsb_forward.1} parent=1 // pred_check
      _
    $region55: #{cwsb_forward.1} parent=1 // pred_check_branch
      %52 = sbr.rel (0) target = $region57
    $region56: #{cwsb_forward.1} parent=1 // pred_region
      _
    $region57: #{cwsb_forward.1} parent=1 // pred_fallthru
      _
    // Predicated region
    $region58: #{cwsb_forward.1} parent=1 // pred_check
      _
    $region59: #{cwsb_forward.1} parent=1 // pred_check_branch
      %54 = sbr.rel (0) target = $region61
    $region60: #{cwsb_forward.1} parent=1 // pred_region
      _
    $region61: #{cwsb_forward.1} parent=1 // pred_fallthru
      _
    // Predicated region
    $region62: #{cwsb_forward.1} parent=1 // pred_check
      _
    $region63: #{cwsb_forward.1} parent=1 // pred_check_branch
      %56 = sbr.rel (0) target = $region65
    $region64: #{cwsb_forward.1} parent=1 // pred_region
      _
    $region65: #{cwsb_forward.1} parent=1 // pred_fallthru
      _
    // Predicated region
    $region66: #{cwsb_forward.1} parent=1 // pred_check
      _
    $region67: #{cwsb_forward.1} parent=1 // pred_check_branch
      %58 = sbr.rel (0) target = $region69
    $region68: #{cwsb_forward.1} parent=1 // pred_region
      _
    $region69: #{cwsb_forward.1} parent=1 // pred_fallthru
      _
    %v59 = vld [vmem:[%s0] sm:$0xff]
    %v60 = vld [vmem:[%s0 + $0x8] sm:$0xff]
    %v61 = vld [vmem:[%s2] sm:$0x1]
    %v62 = vld [vmem:[%s3] sm:$0x1]
    %vm63 = vcmask 261120
    %v64 = vsel %vm63, %v59, 0.0
    %65 = vadd.xlane.f32.xlu0 %v64
    %v66 = vpop.xlane.xlu0 %65
    %v67 = vsel %vm63, %v60, 0.0
    %68 = vadd.xlane.f32.xlu0 %v67
    %v69 = vpop.xlane.xlu0 %68
    %v70 = vrcp.pop 32.0
    %v71 = vmul.f32 %v66, %v70
    %v72 = vmul.f32 %v69, %v70
    %v73 = vsub.f32 %v59, %v71
    %v74 = vsub.f32 %v60, %v72
    %v75 = vmul.f32 %v73, %v73
    %v76 = vmul.f32 %v74, %v74
    %v77 = vsel %vm63, %v75, 0.0
    %78 = vadd.xlane.f32.xlu0 %v77
    %v79 = vpop.xlane.xlu0 %78
    %v80 = vsel %vm63, %v76, 0.0
    %81 = vadd.xlane.f32.xlu0 %v80
    %v82 = vpop.xlane.xlu0 %81
    %v83 = vmul.f32 %v79, %v70
    %v84 = vmul.f32 %v82, %v70
    %v85 = vadd.f32 %v83, 1e-12
    %v86 = vadd.f32 %v84, 1e-12
    %v87 = vrsqrt.pop %v85
    %v88 = vrsqrt.pop %v86
    %v89 = vmul.f32 %v73, %v87
    %v90 = vmul.f32 %v74, %v88
    %v92 = vlaneseq
    %v93 = vshrl.u32 %v92, 7
    %v94 = vsub.s32 0, %v93
    %v95 = vrot.slane %v61, %v94
    %v97 = vmul.f32 %v89, %v95
    %v98 = vmul.f32 %v90, %v95
    %v100 = vlaneseq
    %v101 = vshrl.u32 %v100, 7
    %v102 = vsub.s32 0, %v101
    %v103 = vrot.slane %v62, %v102
    %v105 = vadd.f32 %v97, %v103
    %v106 = vadd.f32 %v98, %v103
    %v107 = vld [vmem:[%s1] sm:$0x3]
    %v108 = vsub.f32 1.0, %v107
    %v109 = vmul.f32 %v108, -10000.0
    %v112 = vunpack.c.l.s4 1966171168
    %v113 = vunpack.c.0.s8 %v112
    %v114 = vlaneseq
    %v115 = vshrl.u32 %v114, 7
    %v116 = vsub.s32 %v113, %v115
    %v117 = vrot.slane %v109, %v116
    %v118 = vcombine.high %v117, %v117
    %v120 = vunpack.c.l.s4 1966171168
    %v121 = vunpack.c.0.s8 %v120
    %v122 = vlaneseq
    %v123 = vshrl.u32 %v122, 7
    %v124 = vsub.s32 %v121, %v123
    %v125 = vrot.slane %v117, %v124
    %v127 = vunpack.c.l.s4 1966171168
    %v128 = vunpack.c.0.s8 %v127
    %v129 = vlaneseq
    %v130 = vshrl.u32 %v129, 7
    %v131 = vsub.s32 %v128, %v130
    %v132 = vrot.slane %v118, %v131
    %v133 = vlaneseq
    %v134 = vshrl.u32 %v133, 7
    %v135 = vsub.s32 0, %v134
    %v136 = vrot.slane %v125, %v135
    %v137 = vlaneseq
    %v138 = vshrl.u32 %v137, 7
    %v139 = vsub.s32 0, %v138
    %v140 = vrot.slane %v132, %v139
    %v143 = vld [vmem:[%s4] sm:$0xff]
    %v144 = vld [vmem:[%s4 + $0x8] sm:$0xff]
    %v145 = vld [vmem:[%s4 + $0x10] sm:$0xff]
    %v146 = vld [vmem:[%s4 + $0x18] sm:$0xff]
    %v147 = vld [vmem:[%s5] sm:$0x1]
    %v149 = vlaneseq
    %v150 = vshrl.u32 %v149, 7
    %v151 = vsub.s32 0, %v150
    %v152 = vrot.slane %v147, %v151
    %v155 = vsel %vm63, %v105, 0
    %v158 = vsel %vm63, %v106, 0
    %160 = vmatprep.subr.mxu0 0.0
    %161 = vmatpush1.msra.mxu0 0.0
    %162 = vmatprep.subr.mxu0 0.0
    %163 = vmatpush1.msra.mxu0 0.0
    %164 = vmatprep.subr.mxu0 0.0
    %165 = vmatpush1.msra.mxu0 0.0
    %166 = vmatprep.subr.mxu0 0.0
    %167 = vmatpush1.msra.mxu0 0.0
    %168 = vmatprep.subr.mxu0 0.0
    %169 = vmatpush1.msra.mxu0 0.0
    %170 = vmatprep.subr.mxu0 0.0
    %171 = vmatpush1.msra.mxu0 0.0
    %172 = vmatprep.subr.mxu0 0.0
    %173 = vmatpush1.msra.mxu0 0.0
    %174 = vmatprep.subr.mxu0 0.0
    %175 = vmatpush1.msra.mxu0 0.0
    %176 = vmatprep.subr.mxu0 0.0
    %177 = vmatpush1.msra.mxu0 0.0
    %178 = vmatprep.subr.mxu0 0.0
    %179 = vmatpush1.msra.mxu0 0.0
    %180 = vmatprep.subr.mxu0 0.0
    %181 = vmatpush1.msra.mxu0 0.0
    %182 = vmatprep.subr.mxu0 0.0
    %183 = vmatpush1.msra.mxu0 0.0
    %184 = vmatprep.subr.mxu0 0.0
    %185 = vmatpush1.msra.mxu0 %v146
    %186 = vmatprep.subr.mxu0 0.0
    %187 = vmatpush1.msra.mxu0 %v145
    %188 = vmatprep.subr.mxu0 0.0
    %189 = vmatpush1.msra.mxu0 %v144
    %190 = vmatprep.subr.mxu0 0.0
    %191 = vmatpush1.msra.mxu0 %v143
    %192 = vmatprep.subr.mxu0 0.0
    %193 = vmatpush2.msra.mxu0 0.0
    %194 = vmatprep.subr.mxu0 0.0
    %195 = vmatpush2.msra.mxu0 0.0
    %196 = vmatprep.subr.mxu0 0.0
    %197 = vmatpush2.msra.mxu0 0.0
    %198 = vmatprep.subr.mxu0 0.0
    %199 = vmatpush2.msra.mxu0 0.0
    %200 = vmatprep.subr.mxu0 0.0
    %201 = vmatpush2.msra.mxu0 0.0
    %202 = vmatprep.subr.mxu0 0.0
    %203 = vmatpush2.msra.mxu0 0.0
    %204 = vmatprep.subr.mxu0 0.0
    %205 = vmatpush2.msra.mxu0 0.0
    %206 = vmatprep.subr.mxu0 0.0
    %207 = vmatpush2.msra.mxu0 0.0
    %208 = vmatprep.subr.mxu0 0.0
    %209 = vmatpush2.msra.mxu0 0.0
    %210 = vmatprep.subr.mxu0 0.0
    %211 = vmatpush2.msra.mxu0 0.0
    %212 = vmatprep.subr.mxu0 0.0
    %213 = vmatpush2.msra.mxu0 0.0
    %214 = vmatprep.subr.mxu0 0.0
    %215 = vmatpush2.msra.mxu0 0.0
    %216 = vmatprep.subr.mxu0 0.0
    %217 = vmatpush2.msra.mxu0 0.0
    %218 = vmatprep.subr.mxu0 0.0
    %219 = vmatpush2.msra.mxu0 0.0
    %220 = vmatprep.subr.mxu0 0.0
    %221 = vmatpush2.msra.mxu0 0.0
    %222 = vmatprep.subr.mxu0 0.0
    %223 = vmatpush2.msra.mxu0 0.0
    %224 = vmatprep.mubr.f32.mxu0 0.0
    %225 = vmatmul.mubr.f32.gmra.mxu0 %v155
    %v226 = vpop.f32.mrf.mxu0
    %v227 = vadd.f32 %v152, %v226
    %v228 = vpop.f32.mrf.mxu0
    %229 = vmatprep.mubr.f32.mxu0 0.0
    %230 = vmatmul.mubr.f32.gmra.mxu0 %v158
    %v231 = vpop.f32.mrf.mxu0
    %v232 = vadd.f32 %v152, %v231
    %v233 = vpop.f32.mrf.mxu0
    %234 = vdwg.mxu0
    %236 = vrot.lane.b32.xlu0 %v227, 96
    %v237 = vpop.permute.xlu0 %236
    %vm238 = vcmask 64512
    %v239 = vsel %vm238, %v227, 0
    %v241 = vsel %vm238, %v237, 0
    %243 = vmatprep.subr.mxu0 0.0
    %244 = vmatpush1.xpose.msra.mxu0 0.0
    %245 = vmatprep.subr.mxu0 0.0
    %246 = vmatpush1.xpose.msra.mxu0 0.0
    %247 = vmatprep.subr.mxu0 0.0
    %248 = vmatpush1.xpose.msra.mxu0 0.0
    %249 = vmatprep.subr.mxu0 0.0
    %250 = vmatpush1.xpose.msra.mxu0 0.0
    %251 = vmatprep.subr.mxu0 0.0
    %252 = vmatpush1.xpose.msra.mxu0 0.0
    %253 = vmatprep.subr.mxu0 0.0
    %254 = vmatpush1.xpose.msra.mxu0 0.0
    %255 = vmatprep.subr.mxu0 0.0
    %256 = vmatpush1.xpose.msra.mxu0 0.0
    %257 = vmatprep.subr.mxu0 0.0
    %258 = vmatpush1.xpose.msra.mxu0 0.0
    %259 = vmatprep.subr.mxu0 0.0
    %260 = vmatpush1.xpose.msra.mxu0 0.0
    %261 = vmatprep.subr.mxu0 0.0
    %262 = vmatpush1.xpose.msra.mxu0 0.0
    %263 = vmatprep.subr.mxu0 0.0
    %264 = vmatpush1.xpose.msra.mxu0 0.0
    %265 = vmatprep.subr.mxu0 0.0
    %266 = vmatpush1.xpose.msra.mxu0 0.0
    %267 = vmatprep.subr.mxu0 0.0
    %268 = vmatpush1.xpose.msra.mxu0 0.0
    %269 = vmatprep.subr.mxu0 0.0
    %270 = vmatpush1.xpose.msra.mxu0 0.0
    %271 = vmatprep.subr.mxu0 0.0
    %272 = vmatpush1.xpose.msra.mxu0 0.0
    %273 = vmatprep.subr.mxu0 0.0
    %274 = vmatpush1.xpose.msra.mxu0 %v241
    %275 = vmatprep.subr.mxu0 0.0
    %276 = vmatpush2.xpose.msra.mxu0 0.0
    %277 = vmatprep.subr.mxu0 0.0
    %278 = vmatpush2.xpose.msra.mxu0 0.0
    %279 = vmatprep.subr.mxu0 0.0
    %280 = vmatpush2.xpose.msra.mxu0 0.0
    %281 = vmatprep.subr.mxu0 0.0
    %282 = vmatpush2.xpose.msra.mxu0 0.0
    %283 = vmatprep.subr.mxu0 0.0
    %284 = vmatpush2.xpose.msra.mxu0 0.0
    %285 = vmatprep.subr.mxu0 0.0
    %286 = vmatpush2.xpose.msra.mxu0 0.0
    %287 = vmatprep.subr.mxu0 0.0
    %288 = vmatpush2.xpose.msra.mxu0 0.0
    %289 = vmatprep.subr.mxu0 0.0
    %290 = vmatpush2.xpose.msra.mxu0 0.0
    %291 = vmatprep.subr.mxu0 0.0
    %292 = vmatpush2.xpose.msra.mxu0 0.0
    %293 = vmatprep.subr.mxu0 0.0
    %294 = vmatpush2.xpose.msra.mxu0 0.0
    %295 = vmatprep.subr.mxu0 0.0
    %296 = vmatpush2.xpose.msra.mxu0 0.0
    %297 = vmatprep.subr.mxu0 0.0
    %298 = vmatpush2.xpose.msra.mxu0 0.0
    %299 = vmatprep.subr.mxu0 0.0
    %300 = vmatpush2.xpose.msra.mxu0 0.0
    %301 = vmatprep.subr.mxu0 0.0
    %302 = vmatpush2.xpose.msra.mxu0 0.0
    %303 = vmatprep.subr.mxu0 0.0
    %304 = vmatpush2.xpose.msra.mxu0 0.0
    %305 = vmatprep.subr.mxu0 0.0
    %306 = vmatpush2.xpose.msra.mxu0 0.0
    %307 = vmatprep.mubr.f32.mxu0 0.0
    %308 = vmatmul.mubr.f32.gmra.mxu0 %v239
    %v309 = vpop.f32.mrf.mxu0
    %v310 = vadd.f32 0.0, %v309
    %v311 = vpop.f32.mrf.mxu0
    %312 = vdwg.mxu0
    %314 = vrot.lane.b32.xlu0 %v232, 96
    %v315 = vpop.permute.xlu0 %314
    %v316 = vsel %vm238, %v232, 0
    %v318 = vsel %vm238, %v315, 0
    %320 = vmatprep.subr.mxu0 0.0
    %321 = vmatpush1.xpose.msra.mxu0 0.0
    %322 = vmatprep.subr.mxu0 0.0
    %323 = vmatpush1.xpose.msra.mxu0 0.0
    %324 = vmatprep.subr.mxu0 0.0
    %325 = vmatpush1.xpose.msra.mxu0 0.0
    %326 = vmatprep.subr.mxu0 0.0
    %327 = vmatpush1.xpose.msra.mxu0 0.0
    %328 = vmatprep.subr.mxu0 0.0
    %329 = vmatpush1.xpose.msra.mxu0 0.0
    %330 = vmatprep.subr.mxu0 0.0
    %331 = vmatpush1.xpose.msra.mxu0 0.0
    %332 = vmatprep.subr.mxu0 0.0
    %333 = vmatpush1.xpose.msra.mxu0 0.0
    %334 = vmatprep.subr.mxu0 0.0
    %335 = vmatpush1.xpose.msra.mxu0 0.0
    %336 = vmatprep.subr.mxu0 0.0
    %337 = vmatpush1.xpose.msra.mxu0 0.0
    %338 = vmatprep.subr.mxu0 0.0
    %339 = vmatpush1.xpose.msra.mxu0 0.0
    %340 = vmatprep.subr.mxu0 0.0
    %341 = vmatpush1.xpose.msra.mxu0 0.0
    %342 = vmatprep.subr.mxu0 0.0
    %343 = vmatpush1.xpose.msra.mxu0 0.0
    %344 = vmatprep.subr.mxu0 0.0
    %345 = vmatpush1.xpose.msra.mxu0 0.0
    %346 = vmatprep.subr.mxu0 0.0
    %347 = vmatpush1.xpose.msra.mxu0 0.0
    %348 = vmatprep.subr.mxu0 0.0
    %349 = vmatpush1.xpose.msra.mxu0 0.0
    %350 = vmatprep.subr.mxu0 0.0
    %351 = vmatpush1.xpose.msra.mxu0 %v318
    %352 = vmatprep.subr.mxu0 0.0
    %353 = vmatpush2.xpose.msra.mxu0 0.0
    %354 = vmatprep.subr.mxu0 0.0
    %355 = vmatpush2.xpose.msra.mxu0 0.0
    %356 = vmatprep.subr.mxu0 0.0
    %357 = vmatpush2.xpose.msra.mxu0 0.0
    %358 = vmatprep.subr.mxu0 0.0
    %359 = vmatpush2.xpose.msra.mxu0 0.0
    %360 = vmatprep.subr.mxu0 0.0
    %361 = vmatpush2.xpose.msra.mxu0 0.0
    %362 = vmatprep.subr.mxu0 0.0
    %363 = vmatpush2.xpose.msra.mxu0 0.0
    %364 = vmatprep.subr.mxu0 0.0
    %365 = vmatpush2.xpose.msra.mxu0 0.0
    %366 = vmatprep.subr.mxu0 0.0
    %367 = vmatpush2.xpose.msra.mxu0 0.0
    %368 = vmatprep.subr.mxu0 0.0
    %369 = vmatpush2.xpose.msra.mxu0 0.0
    %370 = vmatprep.subr.mxu0 0.0
    %371 = vmatpush2.xpose.msra.mxu0 0.0
    %372 = vmatprep.subr.mxu0 0.0
    %373 = vmatpush2.xpose.msra.mxu0 0.0
    %374 = vmatprep.subr.mxu0 0.0
    %375 = vmatpush2.xpose.msra.mxu0 0.0
    %376 = vmatprep.subr.mxu0 0.0
    %377 = vmatpush2.xpose.msra.mxu0 0.0
    %378 = vmatprep.subr.mxu0 0.0
    %379 = vmatpush2.xpose.msra.mxu0 0.0
    %380 = vmatprep.subr.mxu0 0.0
    %381 = vmatpush2.xpose.msra.mxu0 0.0
    %382 = vmatprep.subr.mxu0 0.0
    %383 = vmatpush2.xpose.msra.mxu0 0.0
    %384 = vmatprep.mubr.f32.mxu0 0.0
    %385 = vmatmul.mubr.f32.gmra.mxu0 %v316
    %v386 = vpop.f32.mrf.mxu0
    %v387 = vadd.f32 0.0, %v386
    %v388 = vpop.f32.mrf.mxu0
    %389 = vdwg.mxu0
    %v390 = vmul.f32 %v310, 0.35355338
    %v391 = vmul.f32 %v387, 0.35355338
    %v392 = vadd.f32 %v390, %v136
    %v393 = vadd.f32 %v391, %v140
    %v394 = vsel %vm238, %v392, -inf
    %395 = vmax.xlane.f32.xlu0 %v394
    %v396 = vpop.xlane.xlu0 %395
    %v397 = vsel %vm238, %v393, -inf
    %398 = vmax.xlane.f32.xlu0 %v397
    %v399 = vpop.xlane.xlu0 %398
    %v400 = vsub.f32 %v392, %v396
    %v401 = vsub.f32 %v393, %v399
    %v402 = vmul.f32 %v400, 1.442695
    %v403 = vpow.pop %v402
    %v404 = vmul.f32 %v401, 1.442695
    %v405 = vpow.pop %v404
    %v406 = vsel %vm238, %v403, 0.0
    %407 = vadd.xlane.f32.xlu0 %v406
    %v408 = vpop.xlane.xlu0 %407
    %v409 = vsel %vm238, %v405, 0.0
    %410 = vadd.xlane.f32.xlu0 %v409
    %v411 = vpop.xlane.xlu0 %410
    %v412 = vrcp.pop %v408
    %v413 = vrcp.pop %v411
    %v414 = vmul.f32 %v403, %v412
    %v415 = vmul.f32 %v405, %v413
    %416 = vrot.lane.b32.xlu0 %v227, 64
    %v417 = vpop.permute.xlu0 %416
    %v420 = vsel %vm238, %v414, 0
    %422 = vmatprep.subr.mxu0 0.0
    %423 = vmatpush1.msra.mxu0 0.0
    %424 = vmatprep.subr.mxu0 0.0
    %425 = vmatpush1.msra.mxu0 0.0
    %426 = vmatprep.subr.mxu0 0.0
    %427 = vmatpush1.msra.mxu0 0.0
    %428 = vmatprep.subr.mxu0 0.0
    %429 = vmatpush1.msra.mxu0 0.0
    %430 = vmatprep.subr.mxu0 0.0
    %431 = vmatpush1.msra.mxu0 0.0
    %432 = vmatprep.subr.mxu0 0.0
    %433 = vmatpush1.msra.mxu0 0.0
    %434 = vmatprep.subr.mxu0 0.0
    %435 = vmatpush1.msra.mxu0 0.0
    %436 = vmatprep.subr.mxu0 0.0
    %437 = vmatpush1.msra.mxu0 0.0
    %438 = vmatprep.subr.mxu0 0.0
    %439 = vmatpush1.msra.mxu0 0.0
    %440 = vmatprep.subr.mxu0 0.0
    %441 = vmatpush1.msra.mxu0 0.0
    %442 = vmatprep.subr.mxu0 0.0
    %443 = vmatpush1.msra.mxu0 0.0
    %444 = vmatprep.subr.mxu0 0.0
    %445 = vmatpush1.msra.mxu0 0.0
    %446 = vmatprep.subr.mxu0 0.0
    %447 = vmatpush1.msra.mxu0 0.0
    %448 = vmatprep.subr.mxu0 0.0
    %449 = vmatpush1.msra.mxu0 0.0
    %450 = vmatprep.subr.mxu0 0.0
    %451 = vmatpush1.msra.mxu0 0.0
    %452 = vmatprep.subr.mxu0 0.0
    %453 = vmatpush1.msra.mxu0 %v417
    %454 = vmatprep.subr.mxu0 0.0
    %455 = vmatpush2.msra.mxu0 0.0
    %456 = vmatprep.subr.mxu0 0.0
    %457 = vmatpush2.msra.mxu0 0.0
    %458 = vmatprep.subr.mxu0 0.0
    %459 = vmatpush2.msra.mxu0 0.0
    %460 = vmatprep.subr.mxu0 0.0
    %461 = vmatpush2.msra.mxu0 0.0
    %462 = vmatprep.subr.mxu0 0.0
    %463 = vmatpush2.msra.mxu0 0.0
    %464 = vmatprep.subr.mxu0 0.0
    %465 = vmatpush2.msra.mxu0 0.0
    %466 = vmatprep.subr.mxu0 0.0
    %467 = vmatpush2.msra.mxu0 0.0
    %468 = vmatprep.subr.mxu0 0.0
    %469 = vmatpush2.msra.mxu0 0.0
    %470 = vmatprep.subr.mxu0 0.0
    %471 = vmatpush2.msra.mxu0 0.0
    %472 = vmatprep.subr.mxu0 0.0
    %473 = vmatpush2.msra.mxu0 0.0
    %474 = vmatprep.subr.mxu0 0.0
    %475 = vmatpush2.msra.mxu0 0.0
    %476 = vmatprep.subr.mxu0 0.0
    %477 = vmatpush2.msra.mxu0 0.0
    %478 = vmatprep.subr.mxu0 0.0
    %479 = vmatpush2.msra.mxu0 0.0
    %480 = vmatprep.subr.mxu0 0.0
    %481 = vmatpush2.msra.mxu0 0.0
    %482 = vmatprep.subr.mxu0 0.0
    %483 = vmatpush2.msra.mxu0 0.0
    %484 = vmatprep.subr.mxu0 0.0
    %485 = vmatpush2.msra.mxu0 0.0
    %486 = vmatprep.mubr.f32.mxu0 0.0
    %487 = vmatmul.mubr.f32.gmra.mxu0 %v420
    %v488 = vpop.f32.mrf.mxu0
    %v489 = vadd.f32 0.0, %v488
    %v490 = vpop.f32.mrf.mxu0
    %491 = vdwg.mxu0
    %492 = vrot.lane.b32.xlu0 %v232, 64
    %v493 = vpop.permute.xlu0 %492
    %v496 = vsel %vm238, %v415, 0
    %498 = vmatprep.subr.mxu0 0.0
    %499 = vmatpush1.msra.mxu0 0.0
    %500 = vmatprep.subr.mxu0 0.0
    %501 = vmatpush1.msra.mxu0 0.0
    %502 = vmatprep.subr.mxu0 0.0
    %503 = vmatpush1.msra.mxu0 0.0
    %504 = vmatprep.subr.mxu0 0.0
    %505 = vmatpush1.msra.mxu0 0.0
    %506 = vmatprep.subr.mxu0 0.0
    %507 = vmatpush1.msra.mxu0 0.0
    %508 = vmatprep.subr.mxu0 0.0
    %509 = vmatpush1.msra.mxu0 0.0
    %510 = vmatprep.subr.mxu0 0.0
    %511 = vmatpush1.msra.mxu0 0.0
    %512 = vmatprep.subr.mxu0 0.0
    %513 = vmatpush1.msra.mxu0 0.0
    %514 = vmatprep.subr.mxu0 0.0
    %515 = vmatpush1.msra.mxu0 0.0
    %516 = vmatprep.subr.mxu0 0.0
    %517 = vmatpush1.msra.mxu0 0.0
    %518 = vmatprep.subr.mxu0 0.0
    %519 = vmatpush1.msra.mxu0 0.0
    %520 = vmatprep.subr.mxu0 0.0
    %521 = vmatpush1.msra.mxu0 0.0
    %522 = vmatprep.subr.mxu0 0.0
    %523 = vmatpush1.msra.mxu0 0.0
    %524 = vmatprep.subr.mxu0 0.0
    %525 = vmatpush1.msra.mxu0 0.0
    %526 = vmatprep.subr.mxu0 0.0
    %527 = vmatpush1.msra.mxu0 0.0
    %528 = vmatprep.subr.mxu0 0.0
    %529 = vmatpush1.msra.mxu0 %v493
    %530 = vmatprep.subr.mxu0 0.0
    %531 = vmatpush2.msra.mxu0 0.0
    %532 = vmatprep.subr.mxu0 0.0
    %533 = vmatpush2.msra.mxu0 0.0
    %534 = vmatprep.subr.mxu0 0.0
    %535 = vmatpush2.msra.mxu0 0.0
    %536 = vmatprep.subr.mxu0 0.0
    %537 = vmatpush2.msra.mxu0 0.0
    %538 = vmatprep.subr.mxu0 0.0
    %539 = vmatpush2.msra.mxu0 0.0
    %540 = vmatprep.subr.mxu0 0.0
    %541 = vmatpush2.msra.mxu0 0.0
    %542 = vmatprep.subr.mxu0 0.0
    %543 = vmatpush2.msra.mxu0 0.0
    %544 = vmatprep.subr.mxu0 0.0
    %545 = vmatpush2.msra.mxu0 0.0
    %546 = vmatprep.subr.mxu0 0.0
    %547 = vmatpush2.msra.mxu0 0.0
    %548 = vmatprep.subr.mxu0 0.0
    %549 = vmatpush2.msra.mxu0 0.0
    %550 = vmatprep.subr.mxu0 0.0
    %551 = vmatpush2.msra.mxu0 0.0
    %552 = vmatprep.subr.mxu0 0.0
    %553 = vmatpush2.msra.mxu0 0.0
    %554 = vmatprep.subr.mxu0 0.0
    %555 = vmatpush2.msra.mxu0 0.0
    %556 = vmatprep.subr.mxu0 0.0
    %557 = vmatpush2.msra.mxu0 0.0
    %558 = vmatprep.subr.mxu0 0.0
    %559 = vmatpush2.msra.mxu0 0.0
    %560 = vmatprep.subr.mxu0 0.0
    %561 = vmatpush2.msra.mxu0 0.0
    %562 = vmatprep.mubr.f32.mxu0 0.0
    %563 = vmatmul.mubr.f32.gmra.mxu0 %v496
    %v564 = vpop.f32.mrf.mxu0
    %v565 = vadd.f32 0.0, %v564
    %v566 = vpop.f32.mrf.mxu0
    %567 = vdwg.mxu0
    %v568 = vld [vmem:[%s6] sm:$0xff]
    %569 = vrot.lane.b32.xlu0 %v227, 120
    %v570 = vpop.permute.xlu0 %569
    %571 = vrot.lane.b32.xlu0 %v227, 88
    %v572 = vpop.permute.xlu0 %571
    %v573 = vsel %vm238, %v570, 0
    %v575 = vsel %vm238, %v572, 0
    %577 = vmatprep.subr.mxu0 0.0
    %578 = vmatpush1.xpose.msra.mxu0 0.0
    %579 = vmatprep.subr.mxu0 0.0
    %580 = vmatpush1.xpose.msra.mxu0 0.0
    %581 = vmatprep.subr.mxu0 0.0
    %582 = vmatpush1.xpose.msra.mxu0 0.0
    %583 = vmatprep.subr.mxu0 0.0
    %584 = vmatpush1.xpose.msra.mxu0 0.0
    %585 = vmatprep.subr.mxu0 0.0
    %586 = vmatpush1.xpose.msra.mxu0 0.0
    %587 = vmatprep.subr.mxu0 0.0
    %588 = vmatpush1.xpose.msra.mxu0 0.0
    %589 = vmatprep.subr.mxu0 0.0
    %590 = vmatpush1.xpose.msra.mxu0 0.0
    %591 = vmatprep.subr.mxu0 0.0
    %592 = vmatpush1.xpose.msra.mxu0 0.0
    %593 = vmatprep.subr.mxu0 0.0
    %594 = vmatpush1.xpose.msra.mxu0 0.0
    %595 = vmatprep.subr.mxu0 0.0
    %596 = vmatpush1.xpose.msra.mxu0 0.0
    %597 = vmatprep.subr.mxu0 0.0
    %598 = vmatpush1.xpose.msra.mxu0 0.0
    %599 = vmatprep.subr.mxu0 0.0
    %600 = vmatpush1.xpose.msra.mxu0 0.0
    %601 = vmatprep.subr.mxu0 0.0
    %602 = vmatpush1.xpose.msra.mxu0 0.0
    %603 = vmatprep.subr.mxu0 0.0
    %604 = vmatpush1.xpose.msra.mxu0 0.0
    %605 = vmatprep.subr.mxu0 0.0
    %606 = vmatpush1.xpose.msra.mxu0 0.0
    %607 = vmatprep.subr.mxu0 0.0
    %608 = vmatpush1.xpose.msra.mxu0 %v575
    %609 = vmatprep.subr.mxu0 0.0
    %610 = vmatpush2.xpose.msra.mxu0 0.0
    %611 = vmatprep.subr.mxu0 0.0
    %612 = vmatpush2.xpose.msra.mxu0 0.0
    %613 = vmatprep.subr.mxu0 0.0
    %614 = vmatpush2.xpose.msra.mxu0 0.0
    %615 = vmatprep.subr.mxu0 0.0
    %616 = vmatpush2.xpose.msra.mxu0 0.0
    %617 = vmatprep.subr.mxu0 0.0
    %618 = vmatpush2.xpose.msra.mxu0 0.0
    %619 = vmatprep.subr.mxu0 0.0
    %620 = vmatpush2.xpose.msra.mxu0 0.0
    %621 = vmatprep.subr.mxu0 0.0
    %622 = vmatpush2.xpose.msra.mxu0 0.0
    %623 = vmatprep.subr.mxu0 0.0
    %624 = vmatpush2.xpose.msra.mxu0 0.0
    %625 = vmatprep.subr.mxu0 0.0
    %626 = vmatpush2.xpose.msra.mxu0 0.0
    %627 = vmatprep.subr.mxu0 0.0
    %628 = vmatpush2.xpose.msra.mxu0 0.0
    %629 = vmatprep.subr.mxu0 0.0
    %630 = vmatpush2.xpose.msra.mxu0 0.0
    %631 = vmatprep.subr.mxu0 0.0
    %632 = vmatpush2.xpose.msra.mxu0 0.0
    %633 = vmatprep.subr.mxu0 0.0
    %634 = vmatpush2.xpose.msra.mxu0 0.0
    %635 = vmatprep.subr.mxu0 0.0
    %636 = vmatpush2.xpose.msra.mxu0 0.0
    %637 = vmatprep.subr.mxu0 0.0
    %638 = vmatpush2.xpose.msra.mxu0 0.0
    %639 = vmatprep.subr.mxu0 0.0
    %640 = vmatpush2.xpose.msra.mxu0 0.0
    %641 = vmatprep.mubr.f32.mxu0 0.0
    %642 = vmatmul.mubr.f32.gmra.mxu0 %v573
    %v643 = vpop.f32.mrf.mxu0
    %v644 = vadd.f32 0.0, %v643
    %v645 = vpop.f32.mrf.mxu0
    %646 = vdwg.mxu0
    %647 = vrot.lane.b32.xlu0 %v232, 120
    %v648 = vpop.permute.xlu0 %647
    %649 = vrot.lane.b32.xlu0 %v232, 88
    %v650 = vpop.permute.xlu0 %649
    %v651 = vsel %vm238, %v648, 0
    %v653 = vsel %vm238, %v650, 0
    %655 = vmatprep.subr.mxu0 0.0
    %656 = vmatpush1.xpose.msra.mxu0 0.0
    %657 = vmatprep.subr.mxu0 0.0
    %658 = vmatpush1.xpose.msra.mxu0 0.0
    %659 = vmatprep.subr.mxu0 0.0
    %660 = vmatpush1.xpose.msra.mxu0 0.0
    %661 = vmatprep.subr.mxu0 0.0
    %662 = vmatpush1.xpose.msra.mxu0 0.0
    %663 = vmatprep.subr.mxu0 0.0
    %664 = vmatpush1.xpose.msra.mxu0 0.0
    %665 = vmatprep.subr.mxu0 0.0
    %666 = vmatpush1.xpose.msra.mxu0 0.0
    %667 = vmatprep.subr.mxu0 0.0
    %668 = vmatpush1.xpose.msra.mxu0 0.0
    %669 = vmatprep.subr.mxu0 0.0
    %670 = vmatpush1.xpose.msra.mxu0 0.0
    %671 = vmatprep.subr.mxu0 0.0
    %672 = vmatpush1.xpose.msra.mxu0 0.0
    %673 = vmatprep.subr.mxu0 0.0
    %674 = vmatpush1.xpose.msra.mxu0 0.0
    %675 = vmatprep.subr.mxu0 0.0
    %676 = vmatpush1.xpose.msra.mxu0 0.0
    %677 = vmatprep.subr.mxu0 0.0
    %678 = vmatpush1.xpose.msra.mxu0 0.0
    %679 = vmatprep.subr.mxu0 0.0
    %680 = vmatpush1.xpose.msra.mxu0 0.0
    %681 = vmatprep.subr.mxu0 0.0
    %682 = vmatpush1.xpose.msra.mxu0 0.0
    %683 = vmatprep.subr.mxu0 0.0
    %684 = vmatpush1.xpose.msra.mxu0 0.0
    %685 = vmatprep.subr.mxu0 0.0
    %686 = vmatpush1.xpose.msra.mxu0 %v653
    %687 = vmatprep.subr.mxu0 0.0
    %688 = vmatpush2.xpose.msra.mxu0 0.0
    %689 = vmatprep.subr.mxu0 0.0
    %690 = vmatpush2.xpose.msra.mxu0 0.0
    %691 = vmatprep.subr.mxu0 0.0
    %692 = vmatpush2.xpose.msra.mxu0 0.0
    %693 = vmatprep.subr.mxu0 0.0
    %694 = vmatpush2.xpose.msra.mxu0 0.0
    %695 = vmatprep.subr.mxu0 0.0
    %696 = vmatpush2.xpose.msra.mxu0 0.0
    %697 = vmatprep.subr.mxu0 0.0
    %698 = vmatpush2.xpose.msra.mxu0 0.0
    %699 = vmatprep.subr.mxu0 0.0
    %700 = vmatpush2.xpose.msra.mxu0 0.0
    %701 = vmatprep.subr.mxu0 0.0
    %702 = vmatpush2.xpose.msra.mxu0 0.0
    %703 = vmatprep.subr.mxu0 0.0
    %704 = vmatpush2.xpose.msra.mxu0 0.0
    %705 = vmatprep.subr.mxu0 0.0
    %706 = vmatpush2.xpose.msra.mxu0 0.0
    %707 = vmatprep.subr.mxu0 0.0
    %708 = vmatpush2.xpose.msra.mxu0 0.0
    %709 = vmatprep.subr.mxu0 0.0
    %710 = vmatpush2.xpose.msra.mxu0 0.0
    %711 = vmatprep.subr.mxu0 0.0
    %712 = vmatpush2.xpose.msra.mxu0 0.0
    %713 = vmatprep.subr.mxu0 0.0
    %714 = vmatpush2.xpose.msra.mxu0 0.0
    %715 = vmatprep.subr.mxu0 0.0
    %716 = vmatpush2.xpose.msra.mxu0 0.0
    %717 = vmatprep.subr.mxu0 0.0
    %718 = vmatpush2.xpose.msra.mxu0 0.0
    %719 = vmatprep.mubr.f32.mxu0 0.0
    %720 = vmatmul.mubr.f32.gmra.mxu0 %v651
    %v721 = vpop.f32.mrf.mxu0
    %v722 = vadd.f32 0.0, %v721
    %v723 = vpop.f32.mrf.mxu0
    %724 = vdwg.mxu0
    %v725 = vmul.f32 %v644, 0.35355338
    %v726 = vmul.f32 %v722, 0.35355338
    %v727 = vadd.f32 %v725, %v136
    %v728 = vadd.f32 %v726, %v140
    %v729 = vsel %vm238, %v727, -inf
    %730 = vmax.xlane.f32.xlu0 %v729
    %v731 = vpop.xlane.xlu0 %730
    %v732 = vsel %vm238, %v728, -inf
    %733 = vmax.xlane.f32.xlu0 %v732
    %v734 = vpop.xlane.xlu0 %733
    %v735 = vsub.f32 %v727, %v731
    %v736 = vsub.f32 %v728, %v734
    %v737 = vmul.f32 %v735, 1.442695
    %v738 = vpow.pop %v737
    %v739 = vmul.f32 %v736, 1.442695
    %v740 = vpow.pop %v739
    %v741 = vsel %vm238, %v738, 0.0
    %742 = vadd.xlane.f32.xlu0 %v741
    %v743 = vpop.xlane.xlu0 %742
    %v744 = vsel %vm238, %v740, 0.0
    %745 = vadd.xlane.f32.xlu0 %v744
    %v746 = vpop.xlane.xlu0 %745
    %v747 = vrcp.pop %v743
    %v748 = vrcp.pop %v746
    %v749 = vmul.f32 %v738, %v747
    %v750 = vmul.f32 %v740, %v748
    %751 = vrot.lane.b32.xlu0 %v227, 56
    %v752 = vpop.permute.xlu0 %751
    %v755 = vsel %vm238, %v749, 0
    %757 = vmatprep.subr.mxu0 0.0
    %758 = vmatpush1.msra.mxu0 0.0
    %759 = vmatprep.subr.mxu0 0.0
    %760 = vmatpush1.msra.mxu0 0.0
    %761 = vmatprep.subr.mxu0 0.0
    %762 = vmatpush1.msra.mxu0 0.0
    %763 = vmatprep.subr.mxu0 0.0
    %764 = vmatpush1.msra.mxu0 0.0
    %765 = vmatprep.subr.mxu0 0.0
    %766 = vmatpush1.msra.mxu0 0.0
    %767 = vmatprep.subr.mxu0 0.0
    %768 = vmatpush1.msra.mxu0 0.0
    %769 = vmatprep.subr.mxu0 0.0
    %770 = vmatpush1.msra.mxu0 0.0
    %771 = vmatprep.subr.mxu0 0.0
    %772 = vmatpush1.msra.mxu0 0.0
    %773 = vmatprep.subr.mxu0 0.0
    %774 = vmatpush1.msra.mxu0 0.0
    %775 = vmatprep.subr.mxu0 0.0
    %776 = vmatpush1.msra.mxu0 0.0
    %777 = vmatprep.subr.mxu0 0.0
    %778 = vmatpush1.msra.mxu0 0.0
    %779 = vmatprep.subr.mxu0 0.0
    %780 = vmatpush1.msra.mxu0 0.0
    %781 = vmatprep.subr.mxu0 0.0
    %782 = vmatpush1.msra.mxu0 0.0
    %783 = vmatprep.subr.mxu0 0.0
    %784 = vmatpush1.msra.mxu0 0.0
    %785 = vmatprep.subr.mxu0 0.0
    %786 = vmatpush1.msra.mxu0 0.0
    %787 = vmatprep.subr.mxu0 0.0
    %788 = vmatpush1.msra.mxu0 %v752
    %789 = vmatprep.subr.mxu0 0.0
    %790 = vmatpush2.msra.mxu0 0.0
    %791 = vmatprep.subr.mxu0 0.0
    %792 = vmatpush2.msra.mxu0 0.0
    %793 = vmatprep.subr.mxu0 0.0
    %794 = vmatpush2.msra.mxu0 0.0
    %795 = vmatprep.subr.mxu0 0.0
    %796 = vmatpush2.msra.mxu0 0.0
    %797 = vmatprep.subr.mxu0 0.0
    %798 = vmatpush2.msra.mxu0 0.0
    %799 = vmatprep.subr.mxu0 0.0
    %800 = vmatpush2.msra.mxu0 0.0
    %801 = vmatprep.subr.mxu0 0.0
    %802 = vmatpush2.msra.mxu0 0.0
    %803 = vmatprep.subr.mxu0 0.0
    %804 = vmatpush2.msra.mxu0 0.0
    %805 = vmatprep.subr.mxu0 0.0
    %806 = vmatpush2.msra.mxu0 0.0
    %807 = vmatprep.subr.mxu0 0.0
    %808 = vmatpush2.msra.mxu0 0.0
    %809 = vmatprep.subr.mxu0 0.0
    %810 = vmatpush2.msra.mxu0 0.0
    %811 = vmatprep.subr.mxu0 0.0
    %812 = vmatpush2.msra.mxu0 0.0
    %813 = vmatprep.subr.mxu0 0.0
    %814 = vmatpush2.msra.mxu0 0.0
    %815 = vmatprep.subr.mxu0 0.0
    %816 = vmatpush2.msra.mxu0 0.0
    %817 = vmatprep.subr.mxu0 0.0
    %818 = vmatpush2.msra.mxu0 0.0
    %819 = vmatprep.subr.mxu0 0.0
    %820 = vmatpush2.msra.mxu0 0.0
    %821 = vmatprep.mubr.f32.mxu0 0.0
    %822 = vmatmul.mubr.f32.gmra.mxu0 %v755
    %v823 = vpop.f32.mrf.mxu0
    %v824 = vadd.f32 0.0, %v823
    %v825 = vpop.f32.mrf.mxu0
    %826 = vdwg.mxu0
    %827 = vrot.lane.b32.xlu0 %v232, 56
    %v828 = vpop.permute.xlu0 %827
    %v831 = vsel %vm238, %v750, 0
    %833 = vmatprep.subr.mxu0 0.0
    %834 = vmatpush1.msra.mxu0 0.0
    %835 = vmatprep.subr.mxu0 0.0
    %836 = vmatpush1.msra.mxu0 0.0
    %837 = vmatprep.subr.mxu0 0.0
    %838 = vmatpush1.msra.mxu0 0.0
    %839 = vmatprep.subr.mxu0 0.0
    %840 = vmatpush1.msra.mxu0 0.0
    %841 = vmatprep.subr.mxu0 0.0
    %842 = vmatpush1.msra.mxu0 0.0
    %843 = vmatprep.subr.mxu0 0.0
    %844 = vmatpush1.msra.mxu0 0.0
    %845 = vmatprep.subr.mxu0 0.0
    %846 = vmatpush1.msra.mxu0 0.0
    %847 = vmatprep.subr.mxu0 0.0
    %848 = vmatpush1.msra.mxu0 0.0
    %849 = vmatprep.subr.mxu0 0.0
    %850 = vmatpush1.msra.mxu0 0.0
    %851 = vmatprep.subr.mxu0 0.0
    %852 = vmatpush1.msra.mxu0 0.0
    %853 = vmatprep.subr.mxu0 0.0
    %854 = vmatpush1.msra.mxu0 0.0
    %855 = vmatprep.subr.mxu0 0.0
    %856 = vmatpush1.msra.mxu0 0.0
    %857 = vmatprep.subr.mxu0 0.0
    %858 = vmatpush1.msra.mxu0 0.0
    %859 = vmatprep.subr.mxu0 0.0
    %860 = vmatpush1.msra.mxu0 0.0
    %861 = vmatprep.subr.mxu0 0.0
    %862 = vmatpush1.msra.mxu0 0.0
    %863 = vmatprep.subr.mxu0 0.0
    %864 = vmatpush1.msra.mxu0 %v828
    %865 = vmatprep.subr.mxu0 0.0
    %866 = vmatpush2.msra.mxu0 0.0
    %867 = vmatprep.subr.mxu0 0.0
    %868 = vmatpush2.msra.mxu0 0.0
    %869 = vmatprep.subr.mxu0 0.0
    %870 = vmatpush2.msra.mxu0 0.0
    %871 = vmatprep.subr.mxu0 0.0
    %872 = vmatpush2.msra.mxu0 0.0
    %873 = vmatprep.subr.mxu0 0.0
    %874 = vmatpush2.msra.mxu0 0.0
    %875 = vmatprep.subr.mxu0 0.0
    %876 = vmatpush2.msra.mxu0 0.0
    %877 = vmatprep.subr.mxu0 0.0
    %878 = vmatpush2.msra.mxu0 0.0
    %879 = vmatprep.subr.mxu0 0.0
    %880 = vmatpush2.msra.mxu0 0.0
    %881 = vmatprep.subr.mxu0 0.0
    %882 = vmatpush2.msra.mxu0 0.0
    %883 = vmatprep.subr.mxu0 0.0
    %884 = vmatpush2.msra.mxu0 0.0
    %885 = vmatprep.subr.mxu0 0.0
    %886 = vmatpush2.msra.mxu0 0.0
    %887 = vmatprep.subr.mxu0 0.0
    %888 = vmatpush2.msra.mxu0 0.0
    %889 = vmatprep.subr.mxu0 0.0
    %890 = vmatpush2.msra.mxu0 0.0
    %891 = vmatprep.subr.mxu0 0.0
    %892 = vmatpush2.msra.mxu0 0.0
    %893 = vmatprep.subr.mxu0 0.0
    %894 = vmatpush2.msra.mxu0 0.0
    %895 = vmatprep.subr.mxu0 0.0
    %896 = vmatpush2.msra.mxu0 0.0
    %897 = vmatprep.mubr.f32.mxu0 0.0
    %898 = vmatmul.mubr.f32.gmra.mxu0 %v831
    %v899 = vpop.f32.mrf.mxu0
    %v900 = vadd.f32 0.0, %v899
    %v901 = vpop.f32.mrf.mxu0
    %902 = vdwg.mxu0
    %s903 = scalar_lea.vmem %s6, 8
    %v904 = vld [vmem:[%s903] sm:$0xff]
    %v906 = vsel %vm238, %v824, 0
    %v909 = vsel %vm238, %v900, 0
    %911 = vmatprep.subr.mxu0 0.0
    %912 = vmatpush1.msra.mxu0 0.0
    %913 = vmatprep.subr.mxu0 0.0
    %914 = vmatpush1.msra.mxu0 0.0
    %915 = vmatprep.subr.mxu0 0.0
    %916 = vmatpush1.msra.mxu0 0.0
    %917 = vmatprep.subr.mxu0 0.0
    %918 = vmatpush1.msra.mxu0 0.0
    %919 = vmatprep.subr.mxu0 0.0
    %920 = vmatpush1.msra.mxu0 0.0
    %921 = vmatprep.subr.mxu0 0.0
    %922 = vmatpush1.msra.mxu0 0.0
    %923 = vmatprep.subr.mxu0 0.0
    %924 = vmatpush1.msra.mxu0 0.0
    %925 = vmatprep.subr.mxu0 0.0
    %926 = vmatpush1.msra.mxu0 0.0
    %927 = vmatprep.subr.mxu0 0.0
    %928 = vmatpush1.msra.mxu0 0.0
    %929 = vmatprep.subr.mxu0 0.0
    %930 = vmatpush1.msra.mxu0 0.0
    %931 = vmatprep.subr.mxu0 0.0
    %932 = vmatpush1.msra.mxu0 0.0
    %933 = vmatprep.subr.mxu0 0.0
    %934 = vmatpush1.msra.mxu0 0.0
    %935 = vmatprep.subr.mxu0 0.0
    %936 = vmatpush1.msra.mxu0 0.0
    %937 = vmatprep.subr.mxu0 0.0
    %938 = vmatpush1.msra.mxu0 0.0
    %939 = vmatprep.subr.mxu0 0.0
    %940 = vmatpush1.msra.mxu0 0.0
    %941 = vmatprep.subr.mxu0 0.0
    %942 = vmatpush1.msra.mxu0 %v904
    %943 = vmatprep.subr.mxu0 0.0
    %944 = vmatpush2.msra.mxu0 0.0
    %945 = vmatprep.subr.mxu0 0.0
    %946 = vmatpush2.msra.mxu0 0.0
    %947 = vmatprep.subr.mxu0 0.0
    %948 = vmatpush2.msra.mxu0 0.0
    %949 = vmatprep.subr.mxu0 0.0
    %950 = vmatpush2.msra.mxu0 0.0
    %951 = vmatprep.subr.mxu0 0.0
    %952 = vmatpush2.msra.mxu0 0.0
    %953 = vmatprep.subr.mxu0 0.0
    %954 = vmatpush2.msra.mxu0 0.0
    %955 = vmatprep.subr.mxu0 0.0
    %956 = vmatpush2.msra.mxu0 0.0
    %957 = vmatprep.subr.mxu0 0.0
    %958 = vmatpush2.msra.mxu0 0.0
    %959 = vmatprep.subr.mxu0 0.0
    %960 = vmatpush2.msra.mxu0 0.0
    %961 = vmatprep.subr.mxu0 0.0
    %962 = vmatpush2.msra.mxu0 0.0
    %963 = vmatprep.subr.mxu0 0.0
    %964 = vmatpush2.msra.mxu0 0.0
    %965 = vmatprep.subr.mxu0 0.0
    %966 = vmatpush2.msra.mxu0 0.0
    %967 = vmatprep.subr.mxu0 0.0
    %968 = vmatpush2.msra.mxu0 0.0
    %969 = vmatprep.subr.mxu0 0.0
    %970 = vmatpush2.msra.mxu0 0.0
    %971 = vmatprep.subr.mxu0 0.0
    %972 = vmatpush2.msra.mxu0 0.0
    %973 = vmatprep.subr.mxu0 0.0
    %974 = vmatpush2.msra.mxu0 0.0
    %975 = vmatprep.mubr.f32.mxu0 0.0
    %976 = vmatmul.mubr.f32.gmra.mxu0 %v906
    %v977 = vpop.f32.mrf.mxu0
    %v978 = vadd.f32 0.0, %v977
    %v979 = vpop.f32.mrf.mxu0
    %980 = vmatprep.mubr.f32.mxu0 0.0
    %981 = vmatmul.mubr.f32.gmra.mxu0 %v909
    %v982 = vpop.f32.mrf.mxu0
    %v983 = vadd.f32 0.0, %v982
    %v984 = vpop.f32.mrf.mxu0
    %985 = vdwg.mxu0
    %v987 = vsel %vm238, %v489, 0
    %v990 = vsel %vm238, %v565, 0
    %992 = vmatprep.subr.mxu0 0.0
    %993 = vmatpush1.msra.mxu0 0.0
    %994 = vmatprep.subr.mxu0 0.0
    %995 = vmatpush1.msra.mxu0 0.0
    %996 = vmatprep.subr.mxu0 0.0
    %997 = vmatpush1.msra.mxu0 0.0
    %998 = vmatprep.subr.mxu0 0.0
    %999 = vmatpush1.msra.mxu0 0.0
    %1000 = vmatprep.subr.mxu0 0.0
    %1001 = vmatpush1.msra.mxu0 0.0
    %1002 = vmatprep.subr.mxu0 0.0
    %1003 = vmatpush1.msra.mxu0 0.0
    %1004 = vmatprep.subr.mxu0 0.0
    %1005 = vmatpush1.msra.mxu0 0.0
    %1006 = vmatprep.subr.mxu0 0.0
    %1007 = vmatpush1.msra.mxu0 0.0
    %1008 = vmatprep.subr.mxu0 0.0
    %1009 = vmatpush1.msra.mxu0 0.0
    %1010 = vmatprep.subr.mxu0 0.0
    %1011 = vmatpush1.msra.mxu0 0.0
    %1012 = vmatprep.subr.mxu0 0.0
    %1013 = vmatpush1.msra.mxu0 0.0
    %1014 = vmatprep.subr.mxu0 0.0
    %1015 = vmatpush1.msra.mxu0 0.0
    %1016 = vmatprep.subr.mxu0 0.0
    %1017 = vmatpush1.msra.mxu0 0.0
    %1018 = vmatprep.subr.mxu0 0.0
    %1019 = vmatpush1.msra.mxu0 0.0
    %1020 = vmatprep.subr.mxu0 0.0
    %1021 = vmatpush1.msra.mxu0 0.0
    %1022 = vmatprep.subr.mxu0 0.0
    %1023 = vmatpush1.msra.mxu0 %v568
    %1024 = vmatprep.subr.mxu0 0.0
    %1025 = vmatpush2.msra.mxu0 0.0
    %1026 = vmatprep.subr.mxu0 0.0
    %1027 = vmatpush2.msra.mxu0 0.0
    %1028 = vmatprep.subr.mxu0 0.0
    %1029 = vmatpush2.msra.mxu0 0.0
    %1030 = vmatprep.subr.mxu0 0.0
    %1031 = vmatpush2.msra.mxu0 0.0
    %1032 = vmatprep.subr.mxu0 0.0
    %1033 = vmatpush2.msra.mxu0 0.0
    %1034 = vmatprep.subr.mxu0 0.0
    %1035 = vmatpush2.msra.mxu0 0.0
    %1036 = vmatprep.subr.mxu0 0.0
    %1037 = vmatpush2.msra.mxu0 0.0
    %1038 = vmatprep.subr.mxu0 0.0
    %1039 = vmatpush2.msra.mxu0 0.0
    %1040 = vmatprep.subr.mxu0 0.0
    %1041 = vmatpush2.msra.mxu0 0.0
    %1042 = vmatprep.subr.mxu0 0.0
    %1043 = vmatpush2.msra.mxu0 0.0
    %1044 = vmatprep.subr.mxu0 0.0
    %1045 = vmatpush2.msra.mxu0 0.0
    %1046 = vmatprep.subr.mxu0 0.0
    %1047 = vmatpush2.msra.mxu0 0.0
    %1048 = vmatprep.subr.mxu0 0.0
    %1049 = vmatpush2.msra.mxu0 0.0
    %1050 = vmatprep.subr.mxu0 0.0
    %1051 = vmatpush2.msra.mxu0 0.0
    %1052 = vmatprep.subr.mxu0 0.0
    %1053 = vmatpush2.msra.mxu0 0.0
    %1054 = vmatprep.subr.mxu0 0.0
    %1055 = vmatpush2.msra.mxu0 0.0
    %1056 = vmatprep.mubr.f32.mxu0 0.0
    %1057 = vmatmul.mubr.f32.gmra.mxu0 %v987
    %v1058 = vpop.f32.mrf.mxu0
    %v1059 = vadd.f32 %v978, %v1058
    %v1060 = vpop.f32.mrf.mxu0
    %1061 = vmatprep.mubr.f32.mxu0 0.0
    %1062 = vmatmul.mubr.f32.gmra.mxu0 %v990
    %v1063 = vpop.f32.mrf.mxu0
    %v1064 = vadd.f32 %v983, %v1063
    %v1065 = vpop.f32.mrf.mxu0
    %1066 = vdwg.mxu0
    %1067 = vrot.lane.b32.xlu0 %v227, 112
    %v1068 = vpop.permute.xlu0 %1067
    %1069 = vrot.lane.b32.xlu0 %v227, 80
    %v1070 = vpop.permute.xlu0 %1069
    %v1071 = vsel %vm238, %v1068, 0
    %v1073 = vsel %vm238, %v1070, 0
    %1075 = vmatprep.subr.mxu0 0.0
    %1076 = vmatpush1.xpose.msra.mxu0 0.0
    %1077 = vmatprep.subr.mxu0 0.0
    %1078 = vmatpush1.xpose.msra.mxu0 0.0
    %1079 = vmatprep.subr.mxu0 0.0
    %1080 = vmatpush1.xpose.msra.mxu0 0.0
    %1081 = vmatprep.subr.mxu0 0.0
    %1082 = vmatpush1.xpose.msra.mxu0 0.0
    %1083 = vmatprep.subr.mxu0 0.0
    %1084 = vmatpush1.xpose.msra.mxu0 0.0
    %1085 = vmatprep.subr.mxu0 0.0
    %1086 = vmatpush1.xpose.msra.mxu0 0.0
    %1087 = vmatprep.subr.mxu0 0.0
    %1088 = vmatpush1.xpose.msra.mxu0 0.0
    %1089 = vmatprep.subr.mxu0 0.0
    %1090 = vmatpush1.xpose.msra.mxu0 0.0
    %1091 = vmatprep.subr.mxu0 0.0
    %1092 = vmatpush1.xpose.msra.mxu0 0.0
    %1093 = vmatprep.subr.mxu0 0.0
    %1094 = vmatpush1.xpose.msra.mxu0 0.0
    %1095 = vmatprep.subr.mxu0 0.0
    %1096 = vmatpush1.xpose.msra.mxu0 0.0
    %1097 = vmatprep.subr.mxu0 0.0
    %1098 = vmatpush1.xpose.msra.mxu0 0.0
    %1099 = vmatprep.subr.mxu0 0.0
    %1100 = vmatpush1.xpose.msra.mxu0 0.0
    %1101 = vmatprep.subr.mxu0 0.0
    %1102 = vmatpush1.xpose.msra.mxu0 0.0
    %1103 = vmatprep.subr.mxu0 0.0
    %1104 = vmatpush1.xpose.msra.mxu0 0.0
    %1105 = vmatprep.subr.mxu0 0.0
    %1106 = vmatpush1.xpose.msra.mxu0 %v1073
    %1107 = vmatprep.subr.mxu0 0.0
    %1108 = vmatpush2.xpose.msra.mxu0 0.0
    %1109 = vmatprep.subr.mxu0 0.0
    %1110 = vmatpush2.xpose.msra.mxu0 0.0
    %1111 = vmatprep.subr.mxu0 0.0
    %1112 = vmatpush2.xpose.msra.mxu0 0.0
    %1113 = vmatprep.subr.mxu0 0.0
    %1114 = vmatpush2.xpose.msra.mxu0 0.0
    %1115 = vmatprep.subr.mxu0 0.0
    %1116 = vmatpush2.xpose.msra.mxu0 0.0
    %1117 = vmatprep.subr.mxu0 0.0
    %1118 = vmatpush2.xpose.msra.mxu0 0.0
    %1119 = vmatprep.subr.mxu0 0.0
    %1120 = vmatpush2.xpose.msra.mxu0 0.0
    %1121 = vmatprep.subr.mxu0 0.0
    %1122 = vmatpush2.xpose.msra.mxu0 0.0
    %1123 = vmatprep.subr.mxu0 0.0
    %1124 = vmatpush2.xpose.msra.mxu0 0.0
    %1125 = vmatprep.subr.mxu0 0.0
    %1126 = vmatpush2.xpose.msra.mxu0 0.0
    %1127 = vmatprep.subr.mxu0 0.0
    %1128 = vmatpush2.xpose.msra.mxu0 0.0
    %1129 = vmatprep.subr.mxu0 0.0
    %1130 = vmatpush2.xpose.msra.mxu0 0.0
    %1131 = vmatprep.subr.mxu0 0.0
    %1132 = vmatpush2.xpose.msra.mxu0 0.0
    %1133 = vmatprep.subr.mxu0 0.0
    %1134 = vmatpush2.xpose.msra.mxu0 0.0
    %1135 = vmatprep.subr.mxu0 0.0
    %1136 = vmatpush2.xpose.msra.mxu0 0.0
    %1137 = vmatprep.subr.mxu0 0.0
    %1138 = vmatpush2.xpose.msra.mxu0 0.0
    %1139 = vmatprep.mubr.f32.mxu0 0.0
    %1140 = vmatmul.mubr.f32.gmra.mxu0 %v1071
    %v1141 = vpop.f32.mrf.mxu0
    %v1142 = vadd.f32 0.0, %v1141
    %v1143 = vpop.f32.mrf.mxu0
    %1144 = vdwg.mxu0
    %1145 = vrot.lane.b32.xlu0 %v232, 112
    %v1146 = vpop.permute.xlu0 %1145
    %1147 = vrot.lane.b32.xlu0 %v232, 80
    %v1148 = vpop.permute.xlu0 %1147
    %v1149 = vsel %vm238, %v1146, 0
    %v1151 = vsel %vm238, %v1148, 0
    %1153 = vmatprep.subr.mxu0 0.0
    %1154 = vmatpush1.xpose.msra.mxu0 0.0
    %1155 = vmatprep.subr.mxu0 0.0
    %1156 = vmatpush1.xpose.msra.mxu0 0.0
    %1157 = vmatprep.subr.mxu0 0.0
    %1158 = vmatpush1.xpose.msra.mxu0 0.0
    %1159 = vmatprep.subr.mxu0 0.0
    %1160 = vmatpush1.xpose.msra.mxu0 0.0
    %1161 = vmatprep.subr.mxu0 0.0
    %1162 = vmatpush1.xpose.msra.mxu0 0.0
    %1163 = vmatprep.subr.mxu0 0.0
    %1164 = vmatpush1.xpose.msra.mxu0 0.0
    %1165 = vmatprep.subr.mxu0 0.0
    %1166 = vmatpush1.xpose.msra.mxu0 0.0
    %1167 = vmatprep.subr.mxu0 0.0
    %1168 = vmatpush1.xpose.msra.mxu0 0.0
    %1169 = vmatprep.subr.mxu0 0.0
    %1170 = vmatpush1.xpose.msra.mxu0 0.0
    %1171 = vmatprep.subr.mxu0 0.0
    %1172 = vmatpush1.xpose.msra.mxu0 0.0
    %1173 = vmatprep.subr.mxu0 0.0
    %1174 = vmatpush1.xpose.msra.mxu0 0.0
    %1175 = vmatprep.subr.mxu0 0.0
    %1176 = vmatpush1.xpose.msra.mxu0 0.0
    %1177 = vmatprep.subr.mxu0 0.0
    %1178 = vmatpush1.xpose.msra.mxu0 0.0
    %1179 = vmatprep.subr.mxu0 0.0
    %1180 = vmatpush1.xpose.msra.mxu0 0.0
    %1181 = vmatprep.subr.mxu0 0.0
    %1182 = vmatpush1.xpose.msra.mxu0 0.0
    %1183 = vmatprep.subr.mxu0 0.0
    %1184 = vmatpush1.xpose.msra.mxu0 %v1151
    %1185 = vmatprep.subr.mxu0 0.0
    %1186 = vmatpush2.xpose.msra.mxu0 0.0
    %1187 = vmatprep.subr.mxu0 0.0
    %1188 = vmatpush2.xpose.msra.mxu0 0.0
    %1189 = vmatprep.subr.mxu0 0.0
    %1190 = vmatpush2.xpose.msra.mxu0 0.0
    %1191 = vmatprep.subr.mxu0 0.0
    %1192 = vmatpush2.xpose.msra.mxu0 0.0
    %1193 = vmatprep.subr.mxu0 0.0
    %1194 = vmatpush2.xpose.msra.mxu0 0.0
    %1195 = vmatprep.subr.mxu0 0.0
    %1196 = vmatpush2.xpose.msra.mxu0 0.0
    %1197 = vmatprep.subr.mxu0 0.0
    %1198 = vmatpush2.xpose.msra.mxu0 0.0
    %1199 = vmatprep.subr.mxu0 0.0
    %1200 = vmatpush2.xpose.msra.mxu0 0.0
    %1201 = vmatprep.subr.mxu0 0.0
    %1202 = vmatpush2.xpose.msra.mxu0 0.0
    %1203 = vmatprep.subr.mxu0 0.0
    %1204 = vmatpush2.xpose.msra.mxu0 0.0
    %1205 = vmatprep.subr.mxu0 0.0
    %1206 = vmatpush2.xpose.msra.mxu0 0.0
    %1207 = vmatprep.subr.mxu0 0.0
    %1208 = vmatpush2.xpose.msra.mxu0 0.0
    %1209 = vmatprep.subr.mxu0 0.0
    %1210 = vmatpush2.xpose.msra.mxu0 0.0
    %1211 = vmatprep.subr.mxu0 0.0
    %1212 = vmatpush2.xpose.msra.mxu0 0.0
    %1213 = vmatprep.subr.mxu0 0.0
    %1214 = vmatpush2.xpose.msra.mxu0 0.0
    %1215 = vmatprep.subr.mxu0 0.0
    %1216 = vmatpush2.xpose.msra.mxu0 0.0
    %1217 = vmatprep.mubr.f32.mxu0 0.0
    %1218 = vmatmul.mubr.f32.gmra.mxu0 %v1149
    %v1219 = vpop.f32.mrf.mxu0
    %v1220 = vadd.f32 0.0, %v1219
    %v1221 = vpop.f32.mrf.mxu0
    %1222 = vdwg.mxu0
    %v1223 = vmul.f32 %v1142, 0.35355338
    %v1224 = vmul.f32 %v1220, 0.35355338
    %v1225 = vadd.f32 %v1223, %v136
    %v1226 = vadd.f32 %v1224, %v140
    %v1227 = vsel %vm238, %v1225, -inf
    %1228 = vmax.xlane.f32.xlu0 %v1227
    %v1229 = vpop.xlane.xlu0 %1228
    %v1230 = vsel %vm238, %v1226, -inf
    %1231 = vmax.xlane.f32.xlu0 %v1230
    %v1232 = vpop.xlane.xlu0 %1231
    %v1233 = vsub.f32 %v1225, %v1229
    %v1234 = vsub.f32 %v1226, %v1232
    %v1235 = vmul.f32 %v1233, 1.442695
    %v1236 = vpow.pop %v1235
    %v1237 = vmul.f32 %v1234, 1.442695
    %v1238 = vpow.pop %v1237
    %v1239 = vsel %vm238, %v1236, 0.0
    %1240 = vadd.xlane.f32.xlu0 %v1239
    %v1241 = vpop.xlane.xlu0 %1240
    %v1242 = vsel %vm238, %v1238, 0.0
    %1243 = vadd.xlane.f32.xlu0 %v1242
    %v1244 = vpop.xlane.xlu0 %1243
    %v1245 = vrcp.pop %v1241
    %v1246 = vrcp.pop %v1244
    %v1247 = vmul.f32 %v1236, %v1245
    %v1248 = vmul.f32 %v1238, %v1246
    %1249 = vrot.lane.b32.xlu0 %v227, 48
    %v1250 = vpop.permute.xlu0 %1249
    %v1253 = vsel %vm238, %v1247, 0
    %1255 = vmatprep.subr.mxu0 0.0
    %1256 = vmatpush1.msra.mxu0 0.0
    %1257 = vmatprep.subr.mxu0 0.0
    %1258 = vmatpush1.msra.mxu0 0.0
    %1259 = vmatprep.subr.mxu0 0.0
    %1260 = vmatpush1.msra.mxu0 0.0
    %1261 = vmatprep.subr.mxu0 0.0
    %1262 = vmatpush1.msra.mxu0 0.0
    %1263 = vmatprep.subr.mxu0 0.0
    %1264 = vmatpush1.msra.mxu0 0.0
    %1265 = vmatprep.subr.mxu0 0.0
    %1266 = vmatpush1.msra.mxu0 0.0
    %1267 = vmatprep.subr.mxu0 0.0
    %1268 = vmatpush1.msra.mxu0 0.0
    %1269 = vmatprep.subr.mxu0 0.0
    %1270 = vmatpush1.msra.mxu0 0.0
    %1271 = vmatprep.subr.mxu0 0.0
    %1272 = vmatpush1.msra.mxu0 0.0
    %1273 = vmatprep.subr.mxu0 0.0
    %1274 = vmatpush1.msra.mxu0 0.0
    %1275 = vmatprep.subr.mxu0 0.0
    %1276 = vmatpush1.msra.mxu0 0.0
    %1277 = vmatprep.subr.mxu0 0.0
    %1278 = vmatpush1.msra.mxu0 0.0
    %1279 = vmatprep.subr.mxu0 0.0
    %1280 = vmatpush1.msra.mxu0 0.0
    %1281 = vmatprep.subr.mxu0 0.0
    %1282 = vmatpush1.msra.mxu0 0.0
    %1283 = vmatprep.subr.mxu0 0.0
    %1284 = vmatpush1.msra.mxu0 0.0
    %1285 = vmatprep.subr.mxu0 0.0
    %1286 = vmatpush1.msra.mxu0 %v1250
    %1287 = vmatprep.subr.mxu0 0.0
    %1288 = vmatpush2.msra.mxu0 0.0
    %1289 = vmatprep.subr.mxu0 0.0
    %1290 = vmatpush2.msra.mxu0 0.0
    %1291 = vmatprep.subr.mxu0 0.0
    %1292 = vmatpush2.msra.mxu0 0.0
    %1293 = vmatprep.subr.mxu0 0.0
    %1294 = vmatpush2.msra.mxu0 0.0
    %1295 = vmatprep.subr.mxu0 0.0
    %1296 = vmatpush2.msra.mxu0 0.0
    %1297 = vmatprep.subr.mxu0 0.0
    %1298 = vmatpush2.msra.mxu0 0.0
    %1299 = vmatprep.subr.mxu0 0.0
    %1300 = vmatpush2.msra.mxu0 0.0
    %1301 = vmatprep.subr.mxu0 0.0
    %1302 = vmatpush2.msra.mxu0 0.0
    %1303 = vmatprep.subr.mxu0 0.0
    %1304 = vmatpush2.msra.mxu0 0.0
    %1305 = vmatprep.subr.mxu0 0.0
    %1306 = vmatpush2.msra.mxu0 0.0
    %1307 = vmatprep.subr.mxu0 0.0
    %1308 = vmatpush2.msra.mxu0 0.0
    %1309 = vmatprep.subr.mxu0 0.0
    %1310 = vmatpush2.msra.mxu0 0.0
    %1311 = vmatprep.subr.mxu0 0.0
    %1312 = vmatpush2.msra.mxu0 0.0
    %1313 = vmatprep.subr.mxu0 0.0
    %1314 = vmatpush2.msra.mxu0 0.0
    %1315 = vmatprep.subr.mxu0 0.0
    %1316 = vmatpush2.msra.mxu0 0.0
    %1317 = vmatprep.subr.mxu0 0.0
    %1318 = vmatpush2.msra.mxu0 0.0
    %1319 = vmatprep.mubr.f32.mxu0 0.0
    %1320 = vmatmul.mubr.f32.gmra.mxu0 %v1253
    %v1321 = vpop.f32.mrf.mxu0
    %v1322 = vadd.f32 0.0, %v1321
    %v1323 = vpop.f32.mrf.mxu0
    %1324 = vdwg.mxu0
    %1325 = vrot.lane.b32.xlu0 %v232, 48
    %v1326 = vpop.permute.xlu0 %1325
    %v1329 = vsel %vm238, %v1248, 0
    %1331 = vmatprep.subr.mxu0 0.0
    %1332 = vmatpush1.msra.mxu0 0.0
    %1333 = vmatprep.subr.mxu0 0.0
    %1334 = vmatpush1.msra.mxu0 0.0
    %1335 = vmatprep.subr.mxu0 0.0
    %1336 = vmatpush1.msra.mxu0 0.0
    %1337 = vmatprep.subr.mxu0 0.0
    %1338 = vmatpush1.msra.mxu0 0.0
    %1339 = vmatprep.subr.mxu0 0.0
    %1340 = vmatpush1.msra.mxu0 0.0
    %1341 = vmatprep.subr.mxu0 0.0
    %1342 = vmatpush1.msra.mxu0 0.0
    %1343 = vmatprep.subr.mxu0 0.0
    %1344 = vmatpush1.msra.mxu0 0.0
    %1345 = vmatprep.subr.mxu0 0.0
    %1346 = vmatpush1.msra.mxu0 0.0
    %1347 = vmatprep.subr.mxu0 0.0
    %1348 = vmatpush1.msra.mxu0 0.0
    %1349 = vmatprep.subr.mxu0 0.0
    %1350 = vmatpush1.msra.mxu0 0.0
    %1351 = vmatprep.subr.mxu0 0.0
    %1352 = vmatpush1.msra.mxu0 0.0
    %1353 = vmatprep.subr.mxu0 0.0
    %1354 = vmatpush1.msra.mxu0 0.0
    %1355 = vmatprep.subr.mxu0 0.0
    %1356 = vmatpush1.msra.mxu0 0.0
    %1357 = vmatprep.subr.mxu0 0.0
    %1358 = vmatpush1.msra.mxu0 0.0
    %1359 = vmatprep.subr.mxu0 0.0
    %1360 = vmatpush1.msra.mxu0 0.0
    %1361 = vmatprep.subr.mxu0 0.0
    %1362 = vmatpush1.msra.mxu0 %v1326
    %1363 = vmatprep.subr.mxu0 0.0
    %1364 = vmatpush2.msra.mxu0 0.0
    %1365 = vmatprep.subr.mxu0 0.0
    %1366 = vmatpush2.msra.mxu0 0.0
    %1367 = vmatprep.subr.mxu0 0.0
    %1368 = vmatpush2.msra.mxu0 0.0
    %1369 = vmatprep.subr.mxu0 0.0
    %1370 = vmatpush2.msra.mxu0 0.0
    %1371 = vmatprep.subr.mxu0 0.0
    %1372 = vmatpush2.msra.mxu0 0.0
    %1373 = vmatprep.subr.mxu0 0.0
    %1374 = vmatpush2.msra.mxu0 0.0
    %1375 = vmatprep.subr.mxu0 0.0
    %1376 = vmatpush2.msra.mxu0 0.0
    %1377 = vmatprep.subr.mxu0 0.0
    %1378 = vmatpush2.msra.mxu0 0.0
    %1379 = vmatprep.subr.mxu0 0.0
    %1380 = vmatpush2.msra.mxu0 0.0
    %1381 = vmatprep.subr.mxu0 0.0
    %1382 = vmatpush2.msra.mxu0 0.0
    %1383 = vmatprep.subr.mxu0 0.0
    %1384 = vmatpush2.msra.mxu0 0.0
    %1385 = vmatprep.subr.mxu0 0.0
    %1386 = vmatpush2.msra.mxu0 0.0
    %1387 = vmatprep.subr.mxu0 0.0
    %1388 = vmatpush2.msra.mxu0 0.0
    %1389 = vmatprep.subr.mxu0 0.0
    %1390 = vmatpush2.msra.mxu0 0.0
    %1391 = vmatprep.subr.mxu0 0.0
    %1392 = vmatpush2.msra.mxu0 0.0
    %1393 = vmatprep.subr.mxu0 0.0
    %1394 = vmatpush2.msra.mxu0 0.0
    %1395 = vmatprep.mubr.f32.mxu0 0.0
    %1396 = vmatmul.mubr.f32.gmra.mxu0 %v1329
    %v1397 = vpop.f32.mrf.mxu0
    %v1398 = vadd.f32 0.0, %v1397
    %v1399 = vpop.f32.mrf.mxu0
    %1400 = vdwg.mxu0
    %s1401 = scalar_lea.vmem %s6, 16
    %v1402 = vld [vmem:[%s1401] sm:$0xff]
    %v1404 = vsel %vm238, %v1322, 0
    %v1407 = vsel %vm238, %v1398, 0
    %1409 = vmatprep.subr.mxu0 0.0
    %1410 = vmatpush1.msra.mxu0 0.0
    %1411 = vmatprep.subr.mxu0 0.0
    %1412 = vmatpush1.msra.mxu0 0.0
    %1413 = vmatprep.subr.mxu0 0.0
    %1414 = vmatpush1.msra.mxu0 0.0
    %1415 = vmatprep.subr.mxu0 0.0
    %1416 = vmatpush1.msra.mxu0 0.0
    %1417 = vmatprep.subr.mxu0 0.0
    %1418 = vmatpush1.msra.mxu0 0.0
    %1419 = vmatprep.subr.mxu0 0.0
    %1420 = vmatpush1.msra.mxu0 0.0
    %1421 = vmatprep.subr.mxu0 0.0
    %1422 = vmatpush1.msra.mxu0 0.0
    %1423 = vmatprep.subr.mxu0 0.0
    %1424 = vmatpush1.msra.mxu0 0.0
    %1425 = vmatprep.subr.mxu0 0.0
    %1426 = vmatpush1.msra.mxu0 0.0
    %1427 = vmatprep.subr.mxu0 0.0
    %1428 = vmatpush1.msra.mxu0 0.0
    %1429 = vmatprep.subr.mxu0 0.0
    %1430 = vmatpush1.msra.mxu0 0.0
    %1431 = vmatprep.subr.mxu0 0.0
    %1432 = vmatpush1.msra.mxu0 0.0
    %1433 = vmatprep.subr.mxu0 0.0
    %1434 = vmatpush1.msra.mxu0 0.0
    %1435 = vmatprep.subr.mxu0 0.0
    %1436 = vmatpush1.msra.mxu0 0.0
    %1437 = vmatprep.subr.mxu0 0.0
    %1438 = vmatpush1.msra.mxu0 0.0
    %1439 = vmatprep.subr.mxu0 0.0
    %1440 = vmatpush1.msra.mxu0 %v1402
    %1441 = vmatprep.subr.mxu0 0.0
    %1442 = vmatpush2.msra.mxu0 0.0
    %1443 = vmatprep.subr.mxu0 0.0
    %1444 = vmatpush2.msra.mxu0 0.0
    %1445 = vmatprep.subr.mxu0 0.0
    %1446 = vmatpush2.msra.mxu0 0.0
    %1447 = vmatprep.subr.mxu0 0.0
    %1448 = vmatpush2.msra.mxu0 0.0
    %1449 = vmatprep.subr.mxu0 0.0
    %1450 = vmatpush2.msra.mxu0 0.0
    %1451 = vmatprep.subr.mxu0 0.0
    %1452 = vmatpush2.msra.mxu0 0.0
    %1453 = vmatprep.subr.mxu0 0.0
    %1454 = vmatpush2.msra.mxu0 0.0
    %1455 = vmatprep.subr.mxu0 0.0
    %1456 = vmatpush2.msra.mxu0 0.0
    %1457 = vmatprep.subr.mxu0 0.0
    %1458 = vmatpush2.msra.mxu0 0.0
    %1459 = vmatprep.subr.mxu0 0.0
    %1460 = vmatpush2.msra.mxu0 0.0
    %1461 = vmatprep.subr.mxu0 0.0
    %1462 = vmatpush2.msra.mxu0 0.0
    %1463 = vmatprep.subr.mxu0 0.0
    %1464 = vmatpush2.msra.mxu0 0.0
    %1465 = vmatprep.subr.mxu0 0.0
    %1466 = vmatpush2.msra.mxu0 0.0
    %1467 = vmatprep.subr.mxu0 0.0
    %1468 = vmatpush2.msra.mxu0 0.0
    %1469 = vmatprep.subr.mxu0 0.0
    %1470 = vmatpush2.msra.mxu0 0.0
    %1471 = vmatprep.subr.mxu0 0.0
    %1472 = vmatpush2.msra.mxu0 0.0
    %1473 = vmatprep.mubr.f32.mxu0 0.0
    %1474 = vmatmul.mubr.f32.gmra.mxu0 %v1404
    %v1475 = vpop.f32.mrf.mxu0
    %v1476 = vadd.f32 0.0, %v1475
    %v1477 = vpop.f32.mrf.mxu0
    %1478 = vmatprep.mubr.f32.mxu0 0.0
    %1479 = vmatmul.mubr.f32.gmra.mxu0 %v1407
    %v1480 = vpop.f32.mrf.mxu0
    %v1481 = vadd.f32 0.0, %v1480
    %v1482 = vpop.f32.mrf.mxu0
    %1483 = vdwg.mxu0
    %v1484 = vadd.f32 %v1059, %v1476
    %v1485 = vadd.f32 %v1064, %v1481
    %1486 = vrot.lane.b32.xlu0 %v227, 104
    %v1487 = vpop.permute.xlu0 %1486
    %1488 = vrot.lane.b32.xlu0 %v227, 72
    %v1489 = vpop.permute.xlu0 %1488
    %v1490 = vsel %vm238, %v1487, 0
    %v1492 = vsel %vm238, %v1489, 0
    %1494 = vmatprep.subr.mxu0 0.0
    %1495 = vmatpush1.xpose.msra.mxu0 0.0
    %1496 = vmatprep.subr.mxu0 0.0
    %1497 = vmatpush1.xpose.msra.mxu0 0.0
    %1498 = vmatprep.subr.mxu0 0.0
    %1499 = vmatpush1.xpose.msra.mxu0 0.0
    %1500 = vmatprep.subr.mxu0 0.0
    %1501 = vmatpush1.xpose.msra.mxu0 0.0
    %1502 = vmatprep.subr.mxu0 0.0
    %1503 = vmatpush1.xpose.msra.mxu0 0.0
    %1504 = vmatprep.subr.mxu0 0.0
    %1505 = vmatpush1.xpose.msra.mxu0 0.0
    %1506 = vmatprep.subr.mxu0 0.0
    %1507 = vmatpush1.xpose.msra.mxu0 0.0
    %1508 = vmatprep.subr.mxu0 0.0
    %1509 = vmatpush1.xpose.msra.mxu0 0.0
    %1510 = vmatprep.subr.mxu0 0.0
    %1511 = vmatpush1.xpose.msra.mxu0 0.0
    %1512 = vmatprep.subr.mxu0 0.0
    %1513 = vmatpush1.xpose.msra.mxu0 0.0
    %1514 = vmatprep.subr.mxu0 0.0
    %1515 = vmatpush1.xpose.msra.mxu0 0.0
    %1516 = vmatprep.subr.mxu0 0.0
    %1517 = vmatpush1.xpose.msra.mxu0 0.0
    %1518 = vmatprep.subr.mxu0 0.0
    %1519 = vmatpush1.xpose.msra.mxu0 0.0
    %1520 = vmatprep.subr.mxu0 0.0
    %1521 = vmatpush1.xpose.msra.mxu0 0.0
    %1522 = vmatprep.subr.mxu0 0.0
    %1523 = vmatpush1.xpose.msra.mxu0 0.0
    %1524 = vmatprep.subr.mxu0 0.0
    %1525 = vmatpush1.xpose.msra.mxu0 %v1492
    %1526 = vmatprep.subr.mxu0 0.0
    %1527 = vmatpush2.xpose.msra.mxu0 0.0
    %1528 = vmatprep.subr.mxu0 0.0
    %1529 = vmatpush2.xpose.msra.mxu0 0.0
    %1530 = vmatprep.subr.mxu0 0.0
    %1531 = vmatpush2.xpose.msra.mxu0 0.0
    %1532 = vmatprep.subr.mxu0 0.0
    %1533 = vmatpush2.xpose.msra.mxu0 0.0
    %1534 = vmatprep.subr.mxu0 0.0
    %1535 = vmatpush2.xpose.msra.mxu0 0.0
    %1536 = vmatprep.subr.mxu0 0.0
    %1537 = vmatpush2.xpose.msra.mxu0 0.0
    %1538 = vmatprep.subr.mxu0 0.0
    %1539 = vmatpush2.xpose.msra.mxu0 0.0
    %1540 = vmatprep.subr.mxu0 0.0
    %1541 = vmatpush2.xpose.msra.mxu0 0.0
    %1542 = vmatprep.subr.mxu0 0.0
    %1543 = vmatpush2.xpose.msra.mxu0 0.0
    %1544 = vmatprep.subr.mxu0 0.0
    %1545 = vmatpush2.xpose.msra.mxu0 0.0
    %1546 = vmatprep.subr.mxu0 0.0
    %1547 = vmatpush2.xpose.msra.mxu0 0.0
    %1548 = vmatprep.subr.mxu0 0.0
    %1549 = vmatpush2.xpose.msra.mxu0 0.0
    %1550 = vmatprep.subr.mxu0 0.0
    %1551 = vmatpush2.xpose.msra.mxu0 0.0
    %1552 = vmatprep.subr.mxu0 0.0
    %1553 = vmatpush2.xpose.msra.mxu0 0.0
    %1554 = vmatprep.subr.mxu0 0.0
    %1555 = vmatpush2.xpose.msra.mxu0 0.0
    %1556 = vmatprep.subr.mxu0 0.0
    %1557 = vmatpush2.xpose.msra.mxu0 0.0
    %1558 = vmatprep.mubr.f32.mxu0 0.0
    %1559 = vmatmul.mubr.f32.gmra.mxu0 %v1490
    %v1560 = vpop.f32.mrf.mxu0
    %v1561 = vadd.f32 0.0, %v1560
    %v1562 = vpop.f32.mrf.mxu0
    %1563 = vdwg.mxu0
    %1564 = vrot.lane.b32.xlu0 %v232, 104
    %v1565 = vpop.permute.xlu0 %1564
    %1566 = vrot.lane.b32.xlu0 %v232, 72
    %v1567 = vpop.permute.xlu0 %1566
    %v1568 = vsel %vm238, %v1565, 0
    %v1570 = vsel %vm238, %v1567, 0
    %1572 = vmatprep.subr.mxu0 0.0
    %1573 = vmatpush1.xpose.msra.mxu0 0.0
    %1574 = vmatprep.subr.mxu0 0.0
    %1575 = vmatpush1.xpose.msra.mxu0 0.0
    %1576 = vmatprep.subr.mxu0 0.0
    %1577 = vmatpush1.xpose.msra.mxu0 0.0
    %1578 = vmatprep.subr.mxu0 0.0
    %1579 = vmatpush1.xpose.msra.mxu0 0.0
    %1580 = vmatprep.subr.mxu0 0.0
    %1581 = vmatpush1.xpose.msra.mxu0 0.0
    %1582 = vmatprep.subr.mxu0 0.0
    %1583 = vmatpush1.xpose.msra.mxu0 0.0
    %1584 = vmatprep.subr.mxu0 0.0
    %1585 = vmatpush1.xpose.msra.mxu0 0.0
    %1586 = vmatprep.subr.mxu0 0.0
    %1587 = vmatpush1.xpose.msra.mxu0 0.0
    %1588 = vmatprep.subr.mxu0 0.0
    %1589 = vmatpush1.xpose.msra.mxu0 0.0
    %1590 = vmatprep.subr.mxu0 0.0
    %1591 = vmatpush1.xpose.msra.mxu0 0.0
    %1592 = vmatprep.subr.mxu0 0.0
    %1593 = vmatpush1.xpose.msra.mxu0 0.0
    %1594 = vmatprep.subr.mxu0 0.0
    %1595 = vmatpush1.xpose.msra.mxu0 0.0
    %1596 = vmatprep.subr.mxu0 0.0
    %1597 = vmatpush1.xpose.msra.mxu0 0.0
    %1598 = vmatprep.subr.mxu0 0.0
    %1599 = vmatpush1.xpose.msra.mxu0 0.0
    %1600 = vmatprep.subr.mxu0 0.0
    %1601 = vmatpush1.xpose.msra.mxu0 0.0
    %1602 = vmatprep.subr.mxu0 0.0
    %1603 = vmatpush1.xpose.msra.mxu0 %v1570
    %1604 = vmatprep.subr.mxu0 0.0
    %1605 = vmatpush2.xpose.msra.mxu0 0.0
    %1606 = vmatprep.subr.mxu0 0.0
    %1607 = vmatpush2.xpose.msra.mxu0 0.0
    %1608 = vmatprep.subr.mxu0 0.0
    %1609 = vmatpush2.xpose.msra.mxu0 0.0
    %1610 = vmatprep.subr.mxu0 0.0
    %1611 = vmatpush2.xpose.msra.mxu0 0.0
    %1612 = vmatprep.subr.mxu0 0.0
    %1613 = vmatpush2.xpose.msra.mxu0 0.0
    %1614 = vmatprep.subr.mxu0 0.0
    %1615 = vmatpush2.xpose.msra.mxu0 0.0
    %1616 = vmatprep.subr.mxu0 0.0
    %1617 = vmatpush2.xpose.msra.mxu0 0.0
    %1618 = vmatprep.subr.mxu0 0.0
    %1619 = vmatpush2.xpose.msra.mxu0 0.0
    %1620 = vmatprep.subr.mxu0 0.0
    %1621 = vmatpush2.xpose.msra.mxu0 0.0
    %1622 = vmatprep.subr.mxu0 0.0
    %1623 = vmatpush2.xpose.msra.mxu0 0.0
    %1624 = vmatprep.subr.mxu0 0.0
    %1625 = vmatpush2.xpose.msra.mxu0 0.0
    %1626 = vmatprep.subr.mxu0 0.0
    %1627 = vmatpush2.xpose.msra.mxu0 0.0
    %1628 = vmatprep.subr.mxu0 0.0
    %1629 = vmatpush2.xpose.msra.mxu0 0.0
    %1630 = vmatprep.subr.mxu0 0.0
    %1631 = vmatpush2.xpose.msra.mxu0 0.0
    %1632 = vmatprep.subr.mxu0 0.0
    %1633 = vmatpush2.xpose.msra.mxu0 0.0
    %1634 = vmatprep.subr.mxu0 0.0
    %1635 = vmatpush2.xpose.msra.mxu0 0.0
    %1636 = vmatprep.mubr.f32.mxu0 0.0
    %1637 = vmatmul.mubr.f32.gmra.mxu0 %v1568
    %v1638 = vpop.f32.mrf.mxu0
    %v1639 = vadd.f32 0.0, %v1638
    %v1640 = vpop.f32.mrf.mxu0
    %1641 = vdwg.mxu0
    %v1642 = vmul.f32 %v1561, 0.35355338
    %v1643 = vmul.f32 %v1639, 0.35355338
    %v1644 = vadd.f32 %v1642, %v136
    %v1645 = vadd.f32 %v1643, %v140
    %v1646 = vsel %vm238, %v1644, -inf
    %1647 = vmax.xlane.f32.xlu0 %v1646
    %v1648 = vpop.xlane.xlu0 %1647
    %v1649 = vsel %vm238, %v1645, -inf
    %1650 = vmax.xlane.f32.xlu0 %v1649
    %v1651 = vpop.xlane.xlu0 %1650
    %v1652 = vsub.f32 %v1644, %v1648
    %v1653 = vsub.f32 %v1645, %v1651
    %v1654 = vmul.f32 %v1652, 1.442695
    %v1655 = vpow.pop %v1654
    %v1656 = vmul.f32 %v1653, 1.442695
    %v1657 = vpow.pop %v1656
    %v1658 = vsel %vm238, %v1655, 0.0
    %1659 = vadd.xlane.f32.xlu0 %v1658
    %v1660 = vpop.xlane.xlu0 %1659
    %v1661 = vsel %vm238, %v1657, 0.0
    %1662 = vadd.xlane.f32.xlu0 %v1661
    %v1663 = vpop.xlane.xlu0 %1662
    %v1664 = vrcp.pop %v1660
    %v1665 = vrcp.pop %v1663
    %v1666 = vmul.f32 %v1655, %v1664
    %v1667 = vmul.f32 %v1657, %v1665
    %1668 = vrot.lane.b32.xlu0 %v227, 40
    %v1669 = vpop.permute.xlu0 %1668
    %v1672 = vsel %vm238, %v1666, 0
    %1674 = vmatprep.subr.mxu0 0.0
    %1675 = vmatpush1.msra.mxu0 0.0
    %1676 = vmatprep.subr.mxu0 0.0
    %1677 = vmatpush1.msra.mxu0 0.0
    %1678 = vmatprep.subr.mxu0 0.0
    %1679 = vmatpush1.msra.mxu0 0.0
    %1680 = vmatprep.subr.mxu0 0.0
    %1681 = vmatpush1.msra.mxu0 0.0
    %1682 = vmatprep.subr.mxu0 0.0
    %1683 = vmatpush1.msra.mxu0 0.0
    %1684 = vmatprep.subr.mxu0 0.0
    %1685 = vmatpush1.msra.mxu0 0.0
    %1686 = vmatprep.subr.mxu0 0.0
    %1687 = vmatpush1.msra.mxu0 0.0
    %1688 = vmatprep.subr.mxu0 0.0
    %1689 = vmatpush1.msra.mxu0 0.0
    %1690 = vmatprep.subr.mxu0 0.0
    %1691 = vmatpush1.msra.mxu0 0.0
    %1692 = vmatprep.subr.mxu0 0.0
    %1693 = vmatpush1.msra.mxu0 0.0
    %1694 = vmatprep.subr.mxu0 0.0
    %1695 = vmatpush1.msra.mxu0 0.0
    %1696 = vmatprep.subr.mxu0 0.0
    %1697 = vmatpush1.msra.mxu0 0.0
    %1698 = vmatprep.subr.mxu0 0.0
    %1699 = vmatpush1.msra.mxu0 0.0
    %1700 = vmatprep.subr.mxu0 0.0
    %1701 = vmatpush1.msra.mxu0 0.0
    %1702 = vmatprep.subr.mxu0 0.0
    %1703 = vmatpush1.msra.mxu0 0.0
    %1704 = vmatprep.subr.mxu0 0.0
    %1705 = vmatpush1.msra.mxu0 %v1669
    %1706 = vmatprep.subr.mxu0 0.0
    %1707 = vmatpush2.msra.mxu0 0.0
    %1708 = vmatprep.subr.mxu0 0.0
    %1709 = vmatpush2.msra.mxu0 0.0
    %1710 = vmatprep.subr.mxu0 0.0
    %1711 = vmatpush2.msra.mxu0 0.0
    %1712 = vmatprep.subr.mxu0 0.0
    %1713 = vmatpush2.msra.mxu0 0.0
    %1714 = vmatprep.subr.mxu0 0.0
    %1715 = vmatpush2.msra.mxu0 0.0
    %1716 = vmatprep.subr.mxu0 0.0
    %1717 = vmatpush2.msra.mxu0 0.0
    %1718 = vmatprep.subr.mxu0 0.0
    %1719 = vmatpush2.msra.mxu0 0.0
    %1720 = vmatprep.subr.mxu0 0.0
    %1721 = vmatpush2.msra.mxu0 0.0
    %1722 = vmatprep.subr.mxu0 0.0
    %1723 = vmatpush2.msra.mxu0 0.0
    %1724 = vmatprep.subr.mxu0 0.0
    %1725 = vmatpush2.msra.mxu0 0.0
    %1726 = vmatprep.subr.mxu0 0.0
    %1727 = vmatpush2.msra.mxu0 0.0
    %1728 = vmatprep.subr.mxu0 0.0
    %1729 = vmatpush2.msra.mxu0 0.0
    %1730 = vmatprep.subr.mxu0 0.0
    %1731 = vmatpush2.msra.mxu0 0.0
    %1732 = vmatprep.subr.mxu0 0.0
    %1733 = vmatpush2.msra.mxu0 0.0
    %1734 = vmatprep.subr.mxu0 0.0
    %1735 = vmatpush2.msra.mxu0 0.0
    %1736 = vmatprep.subr.mxu0 0.0
    %1737 = vmatpush2.msra.mxu0 0.0
    %1738 = vmatprep.mubr.f32.mxu0 0.0
    %1739 = vmatmul.mubr.f32.gmra.mxu0 %v1672
    %v1740 = vpop.f32.mrf.mxu0
    %v1741 = vadd.f32 0.0, %v1740
    %v1742 = vpop.f32.mrf.mxu0
    %1743 = vdwg.mxu0
    %1744 = vrot.lane.b32.xlu0 %v232, 40
    %v1745 = vpop.permute.xlu0 %1744
    %v1748 = vsel %vm238, %v1667, 0
    %1750 = vmatprep.subr.mxu0 0.0
    %1751 = vmatpush1.msra.mxu0 0.0
    %1752 = vmatprep.subr.mxu0 0.0
    %1753 = vmatpush1.msra.mxu0 0.0
    %1754 = vmatprep.subr.mxu0 0.0
    %1755 = vmatpush1.msra.mxu0 0.0
    %1756 = vmatprep.subr.mxu0 0.0
    %1757 = vmatpush1.msra.mxu0 0.0
    %1758 = vmatprep.subr.mxu0 0.0
    %1759 = vmatpush1.msra.mxu0 0.0
    %1760 = vmatprep.subr.mxu0 0.0
    %1761 = vmatpush1.msra.mxu0 0.0
    %1762 = vmatprep.subr.mxu0 0.0
    %1763 = vmatpush1.msra.mxu0 0.0
    %1764 = vmatprep.subr.mxu0 0.0
    %1765 = vmatpush1.msra.mxu0 0.0
    %1766 = vmatprep.subr.mxu0 0.0
    %1767 = vmatpush1.msra.mxu0 0.0
    %1768 = vmatprep.subr.mxu0 0.0
    %1769 = vmatpush1.msra.mxu0 0.0
    %1770 = vmatprep.subr.mxu0 0.0
    %1771 = vmatpush1.msra.mxu0 0.0
    %1772 = vmatprep.subr.mxu0 0.0
    %1773 = vmatpush1.msra.mxu0 0.0
    %1774 = vmatprep.subr.mxu0 0.0
    %1775 = vmatpush1.msra.mxu0 0.0
    %1776 = vmatprep.subr.mxu0 0.0
    %1777 = vmatpush1.msra.mxu0 0.0
    %1778 = vmatprep.subr.mxu0 0.0
    %1779 = vmatpush1.msra.mxu0 0.0
    %1780 = vmatprep.subr.mxu0 0.0
    %1781 = vmatpush1.msra.mxu0 %v1745
    %1782 = vmatprep.subr.mxu0 0.0
    %1783 = vmatpush2.msra.mxu0 0.0
    %1784 = vmatprep.subr.mxu0 0.0
    %1785 = vmatpush2.msra.mxu0 0.0
    %1786 = vmatprep.subr.mxu0 0.0
    %1787 = vmatpush2.msra.mxu0 0.0
    %1788 = vmatprep.subr.mxu0 0.0
    %1789 = vmatpush2.msra.mxu0 0.0
    %1790 = vmatprep.subr.mxu0 0.0
    %1791 = vmatpush2.msra.mxu0 0.0
    %1792 = vmatprep.subr.mxu0 0.0
    %1793 = vmatpush2.msra.mxu0 0.0
    %1794 = vmatprep.subr.mxu0 0.0
    %1795 = vmatpush2.msra.mxu0 0.0
    %1796 = vmatprep.subr.mxu0 0.0
    %1797 = vmatpush2.msra.mxu0 0.0
    %1798 = vmatprep.subr.mxu0 0.0
    %1799 = vmatpush2.msra.mxu0 0.0
    %1800 = vmatprep.subr.mxu0 0.0
    %1801 = vmatpush2.msra.mxu0 0.0
    %1802 = vmatprep.subr.mxu0 0.0
    %1803 = vmatpush2.msra.mxu0 0.0
    %1804 = vmatprep.subr.mxu0 0.0
    %1805 = vmatpush2.msra.mxu0 0.0
    %1806 = vmatprep.subr.mxu0 0.0
    %1807 = vmatpush2.msra.mxu0 0.0
    %1808 = vmatprep.subr.mxu0 0.0
    %1809 = vmatpush2.msra.mxu0 0.0
    %1810 = vmatprep.subr.mxu0 0.0
    %1811 = vmatpush2.msra.mxu0 0.0
    %1812 = vmatprep.subr.mxu0 0.0
    %1813 = vmatpush2.msra.mxu0 0.0
    %1814 = vmatprep.mubr.f32.mxu0 0.0
    %1815 = vmatmul.mubr.f32.gmra.mxu0 %v1748
    %v1816 = vpop.f32.mrf.mxu0
    %v1817 = vadd.f32 0.0, %v1816
    %v1818 = vpop.f32.mrf.mxu0
    %1819 = vdwg.mxu0
    %s1820 = scalar_lea.vmem %s6, 24
    %v1821 = vld [vmem:[%s1820] sm:$0xff]
    %v1823 = vsel %vm238, %v1741, 0
    %v1826 = vsel %vm238, %v1817, 0
    %1828 = vmatprep.subr.mxu0 0.0
    %1829 = vmatpush1.msra.mxu0 0.0
    %1830 = vmatprep.subr.mxu0 0.0
    %1831 = vmatpush1.msra.mxu0 0.0
    %1832 = vmatprep.subr.mxu0 0.0
    %1833 = vmatpush1.msra.mxu0 0.0
    %1834 = vmatprep.subr.mxu0 0.0
    %1835 = vmatpush1.msra.mxu0 0.0
    %1836 = vmatprep.subr.mxu0 0.0
    %1837 = vmatpush1.msra.mxu0 0.0
    %1838 = vmatprep.subr.mxu0 0.0
    %1839 = vmatpush1.msra.mxu0 0.0
    %1840 = vmatprep.subr.mxu0 0.0
    %1841 = vmatpush1.msra.mxu0 0.0
    %1842 = vmatprep.subr.mxu0 0.0
    %1843 = vmatpush1.msra.mxu0 0.0
    %1844 = vmatprep.subr.mxu0 0.0
    %1845 = vmatpush1.msra.mxu0 0.0
    %1846 = vmatprep.subr.mxu0 0.0
    %1847 = vmatpush1.msra.mxu0 0.0
    %1848 = vmatprep.subr.mxu0 0.0
    %1849 = vmatpush1.msra.mxu0 0.0
    %1850 = vmatprep.subr.mxu0 0.0
    %1851 = vmatpush1.msra.mxu0 0.0
    %1852 = vmatprep.subr.mxu0 0.0
    %1853 = vmatpush1.msra.mxu0 0.0
    %1854 = vmatprep.subr.mxu0 0.0
    %1855 = vmatpush1.msra.mxu0 0.0
    %1856 = vmatprep.subr.mxu0 0.0
    %1857 = vmatpush1.msra.mxu0 0.0
    %1858 = vmatprep.subr.mxu0 0.0
    %1859 = vmatpush1.msra.mxu0 %v1821
    %1860 = vmatprep.subr.mxu0 0.0
    %1861 = vmatpush2.msra.mxu0 0.0
    %1862 = vmatprep.subr.mxu0 0.0
    %1863 = vmatpush2.msra.mxu0 0.0
    %1864 = vmatprep.subr.mxu0 0.0
    %1865 = vmatpush2.msra.mxu0 0.0
    %1866 = vmatprep.subr.mxu0 0.0
    %1867 = vmatpush2.msra.mxu0 0.0
    %1868 = vmatprep.subr.mxu0 0.0
    %1869 = vmatpush2.msra.mxu0 0.0
    %1870 = vmatprep.subr.mxu0 0.0
    %1871 = vmatpush2.msra.mxu0 0.0
    %1872 = vmatprep.subr.mxu0 0.0
    %1873 = vmatpush2.msra.mxu0 0.0
    %1874 = vmatprep.subr.mxu0 0.0
    %1875 = vmatpush2.msra.mxu0 0.0
    %1876 = vmatprep.subr.mxu0 0.0
    %1877 = vmatpush2.msra.mxu0 0.0
    %1878 = vmatprep.subr.mxu0 0.0
    %1879 = vmatpush2.msra.mxu0 0.0
    %1880 = vmatprep.subr.mxu0 0.0
    %1881 = vmatpush2.msra.mxu0 0.0
    %1882 = vmatprep.subr.mxu0 0.0
    %1883 = vmatpush2.msra.mxu0 0.0
    %1884 = vmatprep.subr.mxu0 0.0
    %1885 = vmatpush2.msra.mxu0 0.0
    %1886 = vmatprep.subr.mxu0 0.0
    %1887 = vmatpush2.msra.mxu0 0.0
    %1888 = vmatprep.subr.mxu0 0.0
    %1889 = vmatpush2.msra.mxu0 0.0
    %1890 = vmatprep.subr.mxu0 0.0
    %1891 = vmatpush2.msra.mxu0 0.0
    %1892 = vmatprep.mubr.f32.mxu0 0.0
    %1893 = vmatmul.mubr.f32.gmra.mxu0 %v1823
    %v1894 = vpop.f32.mrf.mxu0
    %v1895 = vadd.f32 0.0, %v1894
    %v1896 = vpop.f32.mrf.mxu0
    %1897 = vmatprep.mubr.f32.mxu0 0.0
    %1898 = vmatmul.mubr.f32.gmra.mxu0 %v1826
    %v1899 = vpop.f32.mrf.mxu0
    %v1900 = vadd.f32 0.0, %v1899
    %v1901 = vpop.f32.mrf.mxu0
    %1902 = vdwg.mxu0
    %v1903 = vadd.f32 %v1484, %v1895
    %v1904 = vadd.f32 %v1485, %v1900
    %v1905 = vld [vmem:[%s7] sm:$0x1]
    %v1907 = vlaneseq
    %v1908 = vshrl.u32 %v1907, 7
    %v1909 = vsub.s32 0, %v1908
    %v1910 = vrot.slane %v1905, %v1909
    %v1912 = vadd.f32 %v1903, %v1910
    %v1913 = vadd.f32 %v1904, %v1910
    %v1914 = vadd.f32 %v1912, %v105
    %v1915 = vadd.f32 %v1913, %v106
    %v1916 = vld [vmem:[%s8] sm:$0x1]
    %v1917 = vld [vmem:[%s9] sm:$0x1]
    %v1918 = vsel %vm63, %v1914, 0.0
    %1919 = vadd.xlane.f32.xlu0 %v1918
    %v1920 = vpop.xlane.xlu0 %1919
    %v1921 = vsel %vm63, %v1915, 0.0
    %1922 = vadd.xlane.f32.xlu0 %v1921
    %v1923 = vpop.xlane.xlu0 %1922
    %v1924 = vmul.f32 %v1920, %v70
    %v1925 = vmul.f32 %v1923, %v70
    %v1926 = vsub.f32 %v1914, %v1924
    %v1927 = vsub.f32 %v1915, %v1925
    %v1928 = vmul.f32 %v1926, %v1926
    %v1929 = vmul.f32 %v1927, %v1927
    %v1930 = vsel %vm63, %v1928, 0.0
    %1931 = vadd.xlane.f32.xlu0 %v1930
    %v1932 = vpop.xlane.xlu0 %1931
    %v1933 = vsel %vm63, %v1929, 0.0
    %1934 = vadd.xlane.f32.xlu0 %v1933
    %v1935 = vpop.xlane.xlu0 %1934
    %v1936 = vmul.f32 %v1932, %v70
    %v1937 = vmul.f32 %v1935, %v70
    %v1938 = vadd.f32 %v1936, 1e-12
    %v1939 = vadd.f32 %v1937, 1e-12
    %v1940 = vrsqrt.pop %v1938
    %v1941 = vrsqrt.pop %v1939
    %v1942 = vmul.f32 %v1926, %v1940
    %v1943 = vmul.f32 %v1927, %v1941
    %v1945 = vlaneseq
    %v1946 = vshrl.u32 %v1945, 7
    %v1947 = vsub.s32 0, %v1946
    %v1948 = vrot.slane %v1916, %v1947
    %v1950 = vmul.f32 %v1942, %v1948
    %v1951 = vmul.f32 %v1943, %v1948
    %v1953 = vlaneseq
    %v1954 = vshrl.u32 %v1953, 7
    %v1955 = vsub.s32 0, %v1954
    %v1956 = vrot.slane %v1917, %v1955
    %v1958 = vadd.f32 %v1950, %v1956
    %v1959 = vadd.f32 %v1951, %v1956
    %v1960 = vld [vmem:[%s10] sm:$0xff]
    %v1961 = vld [vmem:[%s10 + $0x8] sm:$0xff]
    %v1962 = vld [vmem:[%s10 + $0x10] sm:$0xff]
    %v1963 = vld [vmem:[%s10 + $0x18] sm:$0xff]
    %v1964 = vld [vmem:[%s11] sm:$0x1]
    %v1966 = vlaneseq
    %v1967 = vshrl.u32 %v1966, 7
    %v1968 = vsub.s32 0, %v1967
    %v1969 = vrot.slane %v1964, %v1968
    %v1972 = vsel %vm63, %v1958, 0
    %v1975 = vsel %vm63, %v1959, 0
    %1977 = vmatprep.subr.mxu0 0.0
    %1978 = vmatpush1.msra.mxu0 0.0
    %1979 = vmatprep.subr.mxu0 0.0
    %1980 = vmatpush1.msra.mxu0 0.0
    %1981 = vmatprep.subr.mxu0 0.0
    %1982 = vmatpush1.msra.mxu0 0.0
    %1983 = vmatprep.subr.mxu0 0.0
    %1984 = vmatpush1.msra.mxu0 0.0
    %1985 = vmatprep.subr.mxu0 0.0
    %1986 = vmatpush1.msra.mxu0 0.0
    %1987 = vmatprep.subr.mxu0 0.0
    %1988 = vmatpush1.msra.mxu0 0.0
    %1989 = vmatprep.subr.mxu0 0.0
    %1990 = vmatpush1.msra.mxu0 0.0
    %1991 = vmatprep.subr.mxu0 0.0
    %1992 = vmatpush1.msra.mxu0 0.0
    %1993 = vmatprep.subr.mxu0 0.0
    %1994 = vmatpush1.msra.mxu0 0.0
    %1995 = vmatprep.subr.mxu0 0.0
    %1996 = vmatpush1.msra.mxu0 0.0
    %1997 = vmatprep.subr.mxu0 0.0
    %1998 = vmatpush1.msra.mxu0 0.0
    %1999 = vmatprep.subr.mxu0 0.0
    %2000 = vmatpush1.msra.mxu0 0.0
    %2001 = vmatprep.subr.mxu0 0.0
    %2002 = vmatpush1.msra.mxu0 %v1963
    %2003 = vmatprep.subr.mxu0 0.0
    %2004 = vmatpush1.msra.mxu0 %v1962
    %2005 = vmatprep.subr.mxu0 0.0
    %2006 = vmatpush1.msra.mxu0 %v1961
    %2007 = vmatprep.subr.mxu0 0.0
    %2008 = vmatpush1.msra.mxu0 %v1960
    %2009 = vmatprep.subr.mxu0 0.0
    %2010 = vmatpush2.msra.mxu0 0.0
    %2011 = vmatprep.subr.mxu0 0.0
    %2012 = vmatpush2.msra.mxu0 0.0
    %2013 = vmatprep.subr.mxu0 0.0
    %2014 = vmatpush2.msra.mxu0 0.0
    %2015 = vmatprep.subr.mxu0 0.0
    %2016 = vmatpush2.msra.mxu0 0.0
    %2017 = vmatprep.subr.mxu0 0.0
    %2018 = vmatpush2.msra.mxu0 0.0
    %2019 = vmatprep.subr.mxu0 0.0
    %2020 = vmatpush2.msra.mxu0 0.0
    %2021 = vmatprep.subr.mxu0 0.0
    %2022 = vmatpush2.msra.mxu0 0.0
    %2023 = vmatprep.subr.mxu0 0.0
    %2024 = vmatpush2.msra.mxu0 0.0
    %2025 = vmatprep.subr.mxu0 0.0
    %2026 = vmatpush2.msra.mxu0 0.0
    %2027 = vmatprep.subr.mxu0 0.0
    %2028 = vmatpush2.msra.mxu0 0.0
    %2029 = vmatprep.subr.mxu0 0.0
    %2030 = vmatpush2.msra.mxu0 0.0
    %2031 = vmatprep.subr.mxu0 0.0
    %2032 = vmatpush2.msra.mxu0 0.0
    %2033 = vmatprep.subr.mxu0 0.0
    %2034 = vmatpush2.msra.mxu0 0.0
    %2035 = vmatprep.subr.mxu0 0.0
    %2036 = vmatpush2.msra.mxu0 0.0
    %2037 = vmatprep.subr.mxu0 0.0
    %2038 = vmatpush2.msra.mxu0 0.0
    %2039 = vmatprep.subr.mxu0 0.0
    %2040 = vmatpush2.msra.mxu0 0.0
    %2041 = vmatprep.mubr.f32.mxu0 0.0
    %2042 = vmatmul.mubr.f32.gmra.mxu0 %v1972
    %v2043 = vpop.f32.mrf.mxu0
    %v2044 = vadd.f32 %v1969, %v2043
    %v2045 = vpop.f32.mrf.mxu0
    %2046 = vmatprep.mubr.f32.mxu0 0.0
    %2047 = vmatmul.mubr.f32.gmra.mxu0 %v1975
    %v2048 = vpop.f32.mrf.mxu0
    %v2049 = vadd.f32 %v1969, %v2048
    %v2050 = vpop.f32.mrf.mxu0
    %2051 = vdwg.mxu0
    %v2052 = vmul.f32 %v2044, 0.5
    %v2053 = vmul.f32 %v2049, 0.5
    %v2054 = vmul.f32 %v2044, 0.70710677
    %v2055 = vmul.f32 %v2049, 0.70710677
    %v2056 = vand.u32 2147483647, %v2054
    %v2057 = vand.u32 2147483647, %v2055
    %v2058 = vmul.f32 %v2056, 0.3275911
    %v2059 = vmul.f32 %v2057, 0.3275911
    %v2060 = vadd.f32 %v2058, 1.0
    %v2061 = vadd.f32 %v2059, 1.0
    %v2062 = vrcp.pop %v2060
    %v2063 = vmul.f32 1.0, %v2062
    %v2064 = vrcp.pop %v2061
    %v2065 = vmul.f32 1.0, %v2064
    %v2066 = vmul.f32 %v2063, 1.0614054
    %v2067 = vmul.f32 %v2065, 1.0614054
    %v2068 = vadd.f32 %v2066, -1.4531521
    %v2069 = vadd.f32 %v2067, -1.4531521
    %v2070 = vmul.f32 %v2068, %v2063
    %v2071 = vmul.f32 %v2069, %v2065
    %v2072 = vadd.f32 %v2070, 1.4214138
    %v2073 = vadd.f32 %v2071, 1.4214138
    %v2074 = vmul.f32 %v2072, %v2063
    %v2075 = vmul.f32 %v2073, %v2065
    %v2076 = vadd.f32 %v2074, -0.28449672
    %v2077 = vadd.f32 %v2075, -0.28449672
    %v2078 = vmul.f32 %v2076, %v2063
    %v2079 = vmul.f32 %v2077, %v2065
    %v2080 = vadd.f32 %v2078, 0.2548296
    %v2081 = vadd.f32 %v2079, 0.2548296
    %v2082 = vmul.f32 %v2080, %v2063
    %v2083 = vmul.f32 %v2081, %v2065
    %v2084 = vsub.f32 0.0, %v2056
    %v2085 = vsub.f32 0.0, %v2057
    %v2086 = vmul.f32 %v2084, %v2056
    %v2087 = vmul.f32 %v2085, %v2057
    %v2088 = vmul.f32 %v2086, 1.442695
    %v2089 = vpow.pop %v2088
    %v2090 = vmul.f32 %v2087, 1.442695
    %v2091 = vpow.pop %v2090
    %v2092 = vmul.f32 %v2082, %v2089
    %v2093 = vmul.f32 %v2083, %v2091
    %v2094 = vsub.f32 1.0, %v2092
    %v2095 = vsub.f32 1.0, %v2093
    %vm2096 = vcmp.ge.f32.partialorder %v2054, 0.0
    %vm2097 = vcmp.ge.f32.partialorder %v2055, 0.0
    %v2098 = vsub.f32 0.0, %v2094
    %v2099 = vsub.f32 0.0, %v2095
    %v2100 = vsel %vm2096, %v2094, %v2098
    %v2101 = vsel %vm2097, %v2095, %v2099
    %v2102 = vadd.f32 %v2100, 1.0
    %v2103 = vadd.f32 %v2101, 1.0
    %v2104 = vmul.f32 %v2052, %v2102
    %v2105 = vmul.f32 %v2053, %v2103
    %v2106 = vld [vmem:[%s12] sm:$0xff]
    %v2107 = vld [vmem:[%s12 + $0x8] sm:$0xff]
    %v2108 = vld [vmem:[%s12 + $0x10] sm:$0xff]
    %v2109 = vld [vmem:[%s12 + $0x18] sm:$0xff]
    %v2110 = vld [vmem:[%s12 + $0x20] sm:$0xff]
    %v2111 = vld [vmem:[%s12 + $0x28] sm:$0xff]
    %v2112 = vld [vmem:[%s12 + $0x30] sm:$0xff]
    %v2113 = vld [vmem:[%s12 + $0x38] sm:$0xff]
    %v2114 = vld [vmem:[%s13] sm:$0x1]
    %v2116 = vlaneseq
    %v2117 = vshrl.u32 %v2116, 7
    %v2118 = vsub.s32 0, %v2117
    %v2119 = vrot.slane %v2114, %v2118
    %vm2121 = vcmask 523264
    %v2123 = vsel %vm2121, %v2104, 0
    %v2126 = vsel %vm2121, %v2105, 0
    %2128 = vmatprep.subr.mxu0 0.0
    %2129 = vmatpush1.msra.mxu0 0.0
    %2130 = vmatprep.subr.mxu0 0.0
    %2131 = vmatpush1.msra.mxu0 0.0
    %2132 = vmatprep.subr.mxu0 0.0
    %2133 = vmatpush1.msra.mxu0 0.0
    %2134 = vmatprep.subr.mxu0 0.0
    %2135 = vmatpush1.msra.mxu0 0.0
    %2136 = vmatprep.subr.mxu0 0.0
    %2137 = vmatpush1.msra.mxu0 0.0
    %2138 = vmatprep.subr.mxu0 0.0
    %2139 = vmatpush1.msra.mxu0 0.0
    %2140 = vmatprep.subr.mxu0 0.0
    %2141 = vmatpush1.msra.mxu0 0.0
    %2142 = vmatprep.subr.mxu0 0.0
    %2143 = vmatpush1.msra.mxu0 0.0
    %2144 = vmatprep.subr.mxu0 0.0
    %2145 = vmatpush1.msra.mxu0 %v2113
    %2146 = vmatprep.subr.mxu0 0.0
    %2147 = vmatpush1.msra.mxu0 %v2112
    %2148 = vmatprep.subr.mxu0 0.0
    %2149 = vmatpush1.msra.mxu0 %v2111
    %2150 = vmatprep.subr.mxu0 0.0
    %2151 = vmatpush1.msra.mxu0 %v2110
    %2152 = vmatprep.subr.mxu0 0.0
    %2153 = vmatpush1.msra.mxu0 %v2109
    %2154 = vmatprep.subr.mxu0 0.0
    %2155 = vmatpush1.msra.mxu0 %v2108
    %2156 = vmatprep.subr.mxu0 0.0
    %2157 = vmatpush1.msra.mxu0 %v2107
    %2158 = vmatprep.subr.mxu0 0.0
    %2159 = vmatpush1.msra.mxu0 %v2106
    %2160 = vmatprep.subr.mxu0 0.0
    %2161 = vmatpush2.msra.mxu0 0.0
    %2162 = vmatprep.subr.mxu0 0.0
    %2163 = vmatpush2.msra.mxu0 0.0
    %2164 = vmatprep.subr.mxu0 0.0
    %2165 = vmatpush2.msra.mxu0 0.0
    %2166 = vmatprep.subr.mxu0 0.0
    %2167 = vmatpush2.msra.mxu0 0.0
    %2168 = vmatprep.subr.mxu0 0.0
    %2169 = vmatpush2.msra.mxu0 0.0
    %2170 = vmatprep.subr.mxu0 0.0
    %2171 = vmatpush2.msra.mxu0 0.0
    %2172 = vmatprep.subr.mxu0 0.0
    %2173 = vmatpush2.msra.mxu0 0.0
    %2174 = vmatprep.subr.mxu0 0.0
    %2175 = vmatpush2.msra.mxu0 0.0
    %2176 = vmatprep.subr.mxu0 0.0
    %2177 = vmatpush2.msra.mxu0 0.0
    %2178 = vmatprep.subr.mxu0 0.0
    %2179 = vmatpush2.msra.mxu0 0.0
    %2180 = vmatprep.subr.mxu0 0.0
    %2181 = vmatpush2.msra.mxu0 0.0
    %2182 = vmatprep.subr.mxu0 0.0
    %2183 = vmatpush2.msra.mxu0 0.0
    %2184 = vmatprep.subr.mxu0 0.0
    %2185 = vmatpush2.msra.mxu0 0.0
    %2186 = vmatprep.subr.mxu0 0.0
    %2187 = vmatpush2.msra.mxu0 0.0
    %2188 = vmatprep.subr.mxu0 0.0
    %2189 = vmatpush2.msra.mxu0 0.0
    %2190 = vmatprep.subr.mxu0 0.0
    %2191 = vmatpush2.msra.mxu0 0.0
    %2192 = vmatprep.mubr.f32.mxu0 0.0
    %2193 = vmatmul.mubr.f32.gmra.mxu0 %v2123
    %v2194 = vpop.f32.mrf.mxu0
    %v2195 = vadd.f32 %v2119, %v2194
    %v2196 = vpop.f32.mrf.mxu0
    %2197 = vmatprep.mubr.f32.mxu0 0.0
    %2198 = vmatmul.mubr.f32.gmra.mxu0 %v2126
    %v2199 = vpop.f32.mrf.mxu0
    %v2200 = vadd.f32 %v2119, %v2199
    %v2201 = vpop.f32.mrf.mxu0
    %2202 = vdwg.mxu0
    %v2203 = vadd.f32 %v2195, %v1958
    %v2204 = vadd.f32 %v2200, %v1959
    %v2205 = vld [vmem:[%s14] sm:$0x1]
    %v2206 = vld [vmem:[%s15] sm:$0x1]
    %v2207 = vsel %vm63, %v2203, 0.0
    %2208 = vadd.xlane.f32.xlu0 %v2207
    %v2209 = vpop.xlane.xlu0 %2208
    %v2210 = vsel %vm63, %v2204, 0.0
    %2211 = vadd.xlane.f32.xlu0 %v2210
    %v2212 = vpop.xlane.xlu0 %2211
    %v2213 = vmul.f32 %v2209, %v70
    %v2214 = vmul.f32 %v2212, %v70
    %v2215 = vsub.f32 %v2203, %v2213
    %v2216 = vsub.f32 %v2204, %v2214
    %v2217 = vmul.f32 %v2215, %v2215
    %v2218 = vmul.f32 %v2216, %v2216
    %v2219 = vsel %vm63, %v2217, 0.0
    %2220 = vadd.xlane.f32.xlu0 %v2219
    %v2221 = vpop.xlane.xlu0 %2220
    %v2222 = vsel %vm63, %v2218, 0.0
    %2223 = vadd.xlane.f32.xlu0 %v2222
    %v2224 = vpop.xlane.xlu0 %2223
    %v2225 = vmul.f32 %v2221, %v70
    %v2226 = vmul.f32 %v2224, %v70
    %v2227 = vadd.f32 %v2225, 1e-12
    %v2228 = vadd.f32 %v2226, 1e-12
    %v2229 = vrsqrt.pop %v2227
    %v2230 = vrsqrt.pop %v2228
    %v2231 = vmul.f32 %v2215, %v2229
    %v2232 = vmul.f32 %v2216, %v2230
    %v2234 = vlaneseq
    %v2235 = vshrl.u32 %v2234, 7
    %v2236 = vsub.s32 0, %v2235
    %v2237 = vrot.slane %v2205, %v2236
    %v2239 = vmul.f32 %v2231, %v2237
    %v2240 = vmul.f32 %v2232, %v2237
    %v2242 = vlaneseq
    %v2243 = vshrl.u32 %v2242, 7
    %v2244 = vsub.s32 0, %v2243
    %v2245 = vrot.slane %v2206, %v2244
    %v2247 = vadd.f32 %v2239, %v2245
    %v2248 = vadd.f32 %v2240, %v2245
    %s2249 = scalar_lea.vmem %s4, 32
    %v2250 = vld [vmem:[%s2249] sm:$0xff]
    %v2251 = vld [vmem:[%s2249 + $0x8] sm:$0xff]
    %v2252 = vld [vmem:[%s2249 + $0x10] sm:$0xff]
    %v2253 = vld [vmem:[%s2249 + $0x18] sm:$0xff]
    %s2254 = scalar_lea.vmem %s5, 1
    %v2255 = vld [vmem:[%s2254] sm:$0x1]
    %v2257 = vlaneseq
    %v2258 = vshrl.u32 %v2257, 7
    %v2259 = vsub.s32 0, %v2258
    %v2260 = vrot.slane %v2255, %v2259
    %v2263 = vsel %vm63, %v2247, 0
    %v2266 = vsel %vm63, %v2248, 0
    %2268 = vmatprep.subr.mxu0 0.0
    %2269 = vmatpush1.msra.mxu0 0.0
    %2270 = vmatprep.subr.mxu0 0.0
    %2271 = vmatpush1.msra.mxu0 0.0
    %2272 = vmatprep.subr.mxu0 0.0
    %2273 = vmatpush1.msra.mxu0 0.0
    %2274 = vmatprep.subr.mxu0 0.0
    %2275 = vmatpush1.msra.mxu0 0.0
    %2276 = vmatprep.subr.mxu0 0.0
    %2277 = vmatpush1.msra.mxu0 0.0
    %2278 = vmatprep.subr.mxu0 0.0
    %2279 = vmatpush1.msra.mxu0 0.0
    %2280 = vmatprep.subr.mxu0 0.0
    %2281 = vmatpush1.msra.mxu0 0.0
    %2282 = vmatprep.subr.mxu0 0.0
    %2283 = vmatpush1.msra.mxu0 0.0
    %2284 = vmatprep.subr.mxu0 0.0
    %2285 = vmatpush1.msra.mxu0 0.0
    %2286 = vmatprep.subr.mxu0 0.0
    %2287 = vmatpush1.msra.mxu0 0.0
    %2288 = vmatprep.subr.mxu0 0.0
    %2289 = vmatpush1.msra.mxu0 0.0
    %2290 = vmatprep.subr.mxu0 0.0
    %2291 = vmatpush1.msra.mxu0 0.0
    %2292 = vmatprep.subr.mxu0 0.0
    %2293 = vmatpush1.msra.mxu0 %v2253
    %2294 = vmatprep.subr.mxu0 0.0
    %2295 = vmatpush1.msra.mxu0 %v2252
    %2296 = vmatprep.subr.mxu0 0.0
    %2297 = vmatpush1.msra.mxu0 %v2251
    %2298 = vmatprep.subr.mxu0 0.0
    %2299 = vmatpush1.msra.mxu0 %v2250
    %2300 = vmatprep.subr.mxu0 0.0
    %2301 = vmatpush2.msra.mxu0 0.0
    %2302 = vmatprep.subr.mxu0 0.0
    %2303 = vmatpush2.msra.mxu0 0.0
    %2304 = vmatprep.subr.mxu0 0.0
    %2305 = vmatpush2.msra.mxu0 0.0
    %2306 = vmatprep.subr.mxu0 0.0
    %2307 = vmatpush2.msra.mxu0 0.0
    %2308 = vmatprep.subr.mxu0 0.0
    %2309 = vmatpush2.msra.mxu0 0.0
    %2310 = vmatprep.subr.mxu0 0.0
    %2311 = vmatpush2.msra.mxu0 0.0
    %2312 = vmatprep.subr.mxu0 0.0
    %2313 = vmatpush2.msra.mxu0 0.0
    %2314 = vmatprep.subr.mxu0 0.0
    %2315 = vmatpush2.msra.mxu0 0.0
    %2316 = vmatprep.subr.mxu0 0.0
    %2317 = vmatpush2.msra.mxu0 0.0
    %2318 = vmatprep.subr.mxu0 0.0
    %2319 = vmatpush2.msra.mxu0 0.0
    %2320 = vmatprep.subr.mxu0 0.0
    %2321 = vmatpush2.msra.mxu0 0.0
    %2322 = vmatprep.subr.mxu0 0.0
    %2323 = vmatpush2.msra.mxu0 0.0
    %2324 = vmatprep.subr.mxu0 0.0
    %2325 = vmatpush2.msra.mxu0 0.0
    %2326 = vmatprep.subr.mxu0 0.0
    %2327 = vmatpush2.msra.mxu0 0.0
    %2328 = vmatprep.subr.mxu0 0.0
    %2329 = vmatpush2.msra.mxu0 0.0
    %2330 = vmatprep.subr.mxu0 0.0
    %2331 = vmatpush2.msra.mxu0 0.0
    %2332 = vmatprep.mubr.f32.mxu0 0.0
    %2333 = vmatmul.mubr.f32.gmra.mxu0 %v2263
    %v2334 = vpop.f32.mrf.mxu0
    %v2335 = vadd.f32 %v2260, %v2334
    %v2336 = vpop.f32.mrf.mxu0
    %2337 = vmatprep.mubr.f32.mxu0 0.0
    %2338 = vmatmul.mubr.f32.gmra.mxu0 %v2266
    %v2339 = vpop.f32.mrf.mxu0
    %v2340 = vadd.f32 %v2260, %v2339
    %v2341 = vpop.f32.mrf.mxu0
    %2342 = vdwg.mxu0
    %2344 = vrot.lane.b32.xlu0 %v2335, 96
    %v2345 = vpop.permute.xlu0 %2344
    %v2346 = vsel %vm238, %v2335, 0
    %v2348 = vsel %vm238, %v2345, 0
    %2350 = vmatprep.subr.mxu0 0.0
    %2351 = vmatpush1.xpose.msra.mxu0 0.0
    %2352 = vmatprep.subr.mxu0 0.0
    %2353 = vmatpush1.xpose.msra.mxu0 0.0
    %2354 = vmatprep.subr.mxu0 0.0
    %2355 = vmatpush1.xpose.msra.mxu0 0.0
    %2356 = vmatprep.subr.mxu0 0.0
    %2357 = vmatpush1.xpose.msra.mxu0 0.0
    %2358 = vmatprep.subr.mxu0 0.0
    %2359 = vmatpush1.xpose.msra.mxu0 0.0
    %2360 = vmatprep.subr.mxu0 0.0
    %2361 = vmatpush1.xpose.msra.mxu0 0.0
    %2362 = vmatprep.subr.mxu0 0.0
    %2363 = vmatpush1.xpose.msra.mxu0 0.0
    %2364 = vmatprep.subr.mxu0 0.0
    %2365 = vmatpush1.xpose.msra.mxu0 0.0
    %2366 = vmatprep.subr.mxu0 0.0
    %2367 = vmatpush1.xpose.msra.mxu0 0.0
    %2368 = vmatprep.subr.mxu0 0.0
    %2369 = vmatpush1.xpose.msra.mxu0 0.0
    %2370 = vmatprep.subr.mxu0 0.0
    %2371 = vmatpush1.xpose.msra.mxu0 0.0
    %2372 = vmatprep.subr.mxu0 0.0
    %2373 = vmatpush1.xpose.msra.mxu0 0.0
    %2374 = vmatprep.subr.mxu0 0.0
    %2375 = vmatpush1.xpose.msra.mxu0 0.0
    %2376 = vmatprep.subr.mxu0 0.0
    %2377 = vmatpush1.xpose.msra.mxu0 0.0
    %2378 = vmatprep.subr.mxu0 0.0
    %2379 = vmatpush1.xpose.msra.mxu0 0.0
    %2380 = vmatprep.subr.mxu0 0.0
    %2381 = vmatpush1.xpose.msra.mxu0 %v2348
    %2382 = vmatprep.subr.mxu0 0.0
    %2383 = vmatpush2.xpose.msra.mxu0 0.0
    %2384 = vmatprep.subr.mxu0 0.0
    %2385 = vmatpush2.xpose.msra.mxu0 0.0
    %2386 = vmatprep.subr.mxu0 0.0
    %2387 = vmatpush2.xpose.msra.mxu0 0.0
    %2388 = vmatprep.subr.mxu0 0.0
    %2389 = vmatpush2.xpose.msra.mxu0 0.0
    %2390 = vmatprep.subr.mxu0 0.0
    %2391 = vmatpush2.xpose.msra.mxu0 0.0
    %2392 = vmatprep.subr.mxu0 0.0
    %2393 = vmatpush2.xpose.msra.mxu0 0.0
    %2394 = vmatprep.subr.mxu0 0.0
    %2395 = vmatpush2.xpose.msra.mxu0 0.0
    %2396 = vmatprep.subr.mxu0 0.0
    %2397 = vmatpush2.xpose.msra.mxu0 0.0
    %2398 = vmatprep.subr.mxu0 0.0
    %2399 = vmatpush2.xpose.msra.mxu0 0.0
    %2400 = vmatprep.subr.mxu0 0.0
    %2401 = vmatpush2.xpose.msra.mxu0 0.0
    %2402 = vmatprep.subr.mxu0 0.0
    %2403 = vmatpush2.xpose.msra.mxu0 0.0
    %2404 = vmatprep.subr.mxu0 0.0
    %2405 = vmatpush2.xpose.msra.mxu0 0.0
    %2406 = vmatprep.subr.mxu0 0.0
    %2407 = vmatpush2.xpose.msra.mxu0 0.0
    %2408 = vmatprep.subr.mxu0 0.0
    %2409 = vmatpush2.xpose.msra.mxu0 0.0
    %2410 = vmatprep.subr.mxu0 0.0
    %2411 = vmatpush2.xpose.msra.mxu0 0.0
    %2412 = vmatprep.subr.mxu0 0.0
    %2413 = vmatpush2.xpose.msra.mxu0 0.0
    %2414 = vmatprep.mubr.f32.mxu0 0.0
    %2415 = vmatmul.mubr.f32.gmra.mxu0 %v2346
    %v2416 = vpop.f32.mrf.mxu0
    %v2417 = vadd.f32 0.0, %v2416
    %v2418 = vpop.f32.mrf.mxu0
    %2419 = vdwg.mxu0
    %2421 = vrot.lane.b32.xlu0 %v2340, 96
    %v2422 = vpop.permute.xlu0 %2421
    %v2423 = vsel %vm238, %v2340, 0
    %v2425 = vsel %vm238, %v2422, 0
    %2427 = vmatprep.subr.mxu0 0.0
    %2428 = vmatpush1.xpose.msra.mxu0 0.0
    %2429 = vmatprep.subr.mxu0 0.0
    %2430 = vmatpush1.xpose.msra.mxu0 0.0
    %2431 = vmatprep.subr.mxu0 0.0
    %2432 = vmatpush1.xpose.msra.mxu0 0.0
    %2433 = vmatprep.subr.mxu0 0.0
    %2434 = vmatpush1.xpose.msra.mxu0 0.0
    %2435 = vmatprep.subr.mxu0 0.0
    %2436 = vmatpush1.xpose.msra.mxu0 0.0
    %2437 = vmatprep.subr.mxu0 0.0
    %2438 = vmatpush1.xpose.msra.mxu0 0.0
    %2439 = vmatprep.subr.mxu0 0.0
    %2440 = vmatpush1.xpose.msra.mxu0 0.0
    %2441 = vmatprep.subr.mxu0 0.0
    %2442 = vmatpush1.xpose.msra.mxu0 0.0
    %2443 = vmatprep.subr.mxu0 0.0
    %2444 = vmatpush1.xpose.msra.mxu0 0.0
    %2445 = vmatprep.subr.mxu0 0.0
    %2446 = vmatpush1.xpose.msra.mxu0 0.0
    %2447 = vmatprep.subr.mxu0 0.0
    %2448 = vmatpush1.xpose.msra.mxu0 0.0
    %2449 = vmatprep.subr.mxu0 0.0
    %2450 = vmatpush1.xpose.msra.mxu0 0.0
    %2451 = vmatprep.subr.mxu0 0.0
    %2452 = vmatpush1.xpose.msra.mxu0 0.0
    %2453 = vmatprep.subr.mxu0 0.0
    %2454 = vmatpush1.xpose.msra.mxu0 0.0
    %2455 = vmatprep.subr.mxu0 0.0
    %2456 = vmatpush1.xpose.msra.mxu0 0.0
    %2457 = vmatprep.subr.mxu0 0.0
    %2458 = vmatpush1.xpose.msra.mxu0 %v2425
    %2459 = vmatprep.subr.mxu0 0.0
    %2460 = vmatpush2.xpose.msra.mxu0 0.0
    %2461 = vmatprep.subr.mxu0 0.0
    %2462 = vmatpush2.xpose.msra.mxu0 0.0
    %2463 = vmatprep.subr.mxu0 0.0
    %2464 = vmatpush2.xpose.msra.mxu0 0.0
    %2465 = vmatprep.subr.mxu0 0.0
    %2466 = vmatpush2.xpose.msra.mxu0 0.0
    %2467 = vmatprep.subr.mxu0 0.0
    %2468 = vmatpush2.xpose.msra.mxu0 0.0
    %2469 = vmatprep.subr.mxu0 0.0
    %2470 = vmatpush2.xpose.msra.mxu0 0.0
    %2471 = vmatprep.subr.mxu0 0.0
    %2472 = vmatpush2.xpose.msra.mxu0 0.0
    %2473 = vmatprep.subr.mxu0 0.0
    %2474 = vmatpush2.xpose.msra.mxu0 0.0
    %2475 = vmatprep.subr.mxu0 0.0
    %2476 = vmatpush2.xpose.msra.mxu0 0.0
    %2477 = vmatprep.subr.mxu0 0.0
    %2478 = vmatpush2.xpose.msra.mxu0 0.0
    %2479 = vmatprep.subr.mxu0 0.0
    %2480 = vmatpush2.xpose.msra.mxu0 0.0
    %2481 = vmatprep.subr.mxu0 0.0
    %2482 = vmatpush2.xpose.msra.mxu0 0.0
    %2483 = vmatprep.subr.mxu0 0.0
    %2484 = vmatpush2.xpose.msra.mxu0 0.0
    %2485 = vmatprep.subr.mxu0 0.0
    %2486 = vmatpush2.xpose.msra.mxu0 0.0
    %2487 = vmatprep.subr.mxu0 0.0
    %2488 = vmatpush2.xpose.msra.mxu0 0.0
    %2489 = vmatprep.subr.mxu0 0.0
    %2490 = vmatpush2.xpose.msra.mxu0 0.0
    %2491 = vmatprep.mubr.f32.mxu0 0.0
    %2492 = vmatmul.mubr.f32.gmra.mxu0 %v2423
    %v2493 = vpop.f32.mrf.mxu0
    %v2494 = vadd.f32 0.0, %v2493
    %v2495 = vpop.f32.mrf.mxu0
    %2496 = vdwg.mxu0
    %v2497 = vmul.f32 %v2417, 0.35355338
    %v2498 = vmul.f32 %v2494, 0.35355338
    %v2499 = vadd.f32 %v2497, %v136
    %v2500 = vadd.f32 %v2498, %v140
    %v2501 = vsel %vm238, %v2499, -inf
    %2502 = vmax.xlane.f32.xlu0 %v2501
    %v2503 = vpop.xlane.xlu0 %2502
    %v2504 = vsel %vm238, %v2500, -inf
    %2505 = vmax.xlane.f32.xlu0 %v2504
    %v2506 = vpop.xlane.xlu0 %2505
    %v2507 = vsub.f32 %v2499, %v2503
    %v2508 = vsub.f32 %v2500, %v2506
    %v2509 = vmul.f32 %v2507, 1.442695
    %v2510 = vpow.pop %v2509
    %v2511 = vmul.f32 %v2508, 1.442695
    %v2512 = vpow.pop %v2511
    %v2513 = vsel %vm238, %v2510, 0.0
    %2514 = vadd.xlane.f32.xlu0 %v2513
    %v2515 = vpop.xlane.xlu0 %2514
    %v2516 = vsel %vm238, %v2512, 0.0
    %2517 = vadd.xlane.f32.xlu0 %v2516
    %v2518 = vpop.xlane.xlu0 %2517
    %v2519 = vrcp.pop %v2515
    %v2520 = vrcp.pop %v2518
    %v2521 = vmul.f32 %v2510, %v2519
    %v2522 = vmul.f32 %v2512, %v2520
    %2523 = vrot.lane.b32.xlu0 %v2335, 64
    %v2524 = vpop.permute.xlu0 %2523
    %v2527 = vsel %vm238, %v2521, 0
    %2529 = vmatprep.subr.mxu0 0.0
    %2530 = vmatpush1.msra.mxu0 0.0
    %2531 = vmatprep.subr.mxu0 0.0
    %2532 = vmatpush1.msra.mxu0 0.0
    %2533 = vmatprep.subr.mxu0 0.0
    %2534 = vmatpush1.msra.mxu0 0.0
    %2535 = vmatprep.subr.mxu0 0.0
    %2536 = vmatpush1.msra.mxu0 0.0
    %2537 = vmatprep.subr.mxu0 0.0
    %2538 = vmatpush1.msra.mxu0 0.0
    %2539 = vmatprep.subr.mxu0 0.0
    %2540 = vmatpush1.msra.mxu0 0.0
    %2541 = vmatprep.subr.mxu0 0.0
    %2542 = vmatpush1.msra.mxu0 0.0
    %2543 = vmatprep.subr.mxu0 0.0
    %2544 = vmatpush1.msra.mxu0 0.0
    %2545 = vmatprep.subr.mxu0 0.0
    %2546 = vmatpush1.msra.mxu0 0.0
    %2547 = vmatprep.subr.mxu0 0.0
    %2548 = vmatpush1.msra.mxu0 0.0
    %2549 = vmatprep.subr.mxu0 0.0
    %2550 = vmatpush1.msra.mxu0 0.0
    %2551 = vmatprep.subr.mxu0 0.0
    %2552 = vmatpush1.msra.mxu0 0.0
    %2553 = vmatprep.subr.mxu0 0.0
    %2554 = vmatpush1.msra.mxu0 0.0
    %2555 = vmatprep.subr.mxu0 0.0
    %2556 = vmatpush1.msra.mxu0 0.0
    %2557 = vmatprep.subr.mxu0 0.0
    %2558 = vmatpush1.msra.mxu0 0.0
    %2559 = vmatprep.subr.mxu0 0.0
    %2560 = vmatpush1.msra.mxu0 %v2524
    %2561 = vmatprep.subr.mxu0 0.0
    %2562 = vmatpush2.msra.mxu0 0.0
    %2563 = vmatprep.subr.mxu0 0.0
    %2564 = vmatpush2.msra.mxu0 0.0
    %2565 = vmatprep.subr.mxu0 0.0
    %2566 = vmatpush2.msra.mxu0 0.0
    %2567 = vmatprep.subr.mxu0 0.0
    %2568 = vmatpush2.msra.mxu0 0.0
    %2569 = vmatprep.subr.mxu0 0.0
    %2570 = vmatpush2.msra.mxu0 0.0
    %2571 = vmatprep.subr.mxu0 0.0
    %2572 = vmatpush2.msra.mxu0 0.0
    %2573 = vmatprep.subr.mxu0 0.0
    %2574 = vmatpush2.msra.mxu0 0.0
    %2575 = vmatprep.subr.mxu0 0.0
    %2576 = vmatpush2.msra.mxu0 0.0
    %2577 = vmatprep.subr.mxu0 0.0
    %2578 = vmatpush2.msra.mxu0 0.0
    %2579 = vmatprep.subr.mxu0 0.0
    %2580 = vmatpush2.msra.mxu0 0.0
    %2581 = vmatprep.subr.mxu0 0.0
    %2582 = vmatpush2.msra.mxu0 0.0
    %2583 = vmatprep.subr.mxu0 0.0
    %2584 = vmatpush2.msra.mxu0 0.0
    %2585 = vmatprep.subr.mxu0 0.0
    %2586 = vmatpush2.msra.mxu0 0.0
    %2587 = vmatprep.subr.mxu0 0.0
    %2588 = vmatpush2.msra.mxu0 0.0
    %2589 = vmatprep.subr.mxu0 0.0
    %2590 = vmatpush2.msra.mxu0 0.0
    %2591 = vmatprep.subr.mxu0 0.0
    %2592 = vmatpush2.msra.mxu0 0.0
    %2593 = vmatprep.mubr.f32.mxu0 0.0
    %2594 = vmatmul.mubr.f32.gmra.mxu0 %v2527
    %v2595 = vpop.f32.mrf.mxu0
    %v2596 = vadd.f32 0.0, %v2595
    %v2597 = vpop.f32.mrf.mxu0
    %2598 = vdwg.mxu0
    %2599 = vrot.lane.b32.xlu0 %v2340, 64
    %v2600 = vpop.permute.xlu0 %2599
    %v2603 = vsel %vm238, %v2522, 0
    %2605 = vmatprep.subr.mxu0 0.0
    %2606 = vmatpush1.msra.mxu0 0.0
    %2607 = vmatprep.subr.mxu0 0.0
    %2608 = vmatpush1.msra.mxu0 0.0
    %2609 = vmatprep.subr.mxu0 0.0
    %2610 = vmatpush1.msra.mxu0 0.0
    %2611 = vmatprep.subr.mxu0 0.0
    %2612 = vmatpush1.msra.mxu0 0.0
    %2613 = vmatprep.subr.mxu0 0.0
    %2614 = vmatpush1.msra.mxu0 0.0
    %2615 = vmatprep.subr.mxu0 0.0
    %2616 = vmatpush1.msra.mxu0 0.0
    %2617 = vmatprep.subr.mxu0 0.0
    %2618 = vmatpush1.msra.mxu0 0.0
    %2619 = vmatprep.subr.mxu0 0.0
    %2620 = vmatpush1.msra.mxu0 0.0
    %2621 = vmatprep.subr.mxu0 0.0
    %2622 = vmatpush1.msra.mxu0 0.0
    %2623 = vmatprep.subr.mxu0 0.0
    %2624 = vmatpush1.msra.mxu0 0.0
    %2625 = vmatprep.subr.mxu0 0.0
    %2626 = vmatpush1.msra.mxu0 0.0
    %2627 = vmatprep.subr.mxu0 0.0
    %2628 = vmatpush1.msra.mxu0 0.0
    %2629 = vmatprep.subr.mxu0 0.0
    %2630 = vmatpush1.msra.mxu0 0.0
    %2631 = vmatprep.subr.mxu0 0.0
    %2632 = vmatpush1.msra.mxu0 0.0
    %2633 = vmatprep.subr.mxu0 0.0
    %2634 = vmatpush1.msra.mxu0 0.0
    %2635 = vmatprep.subr.mxu0 0.0
    %2636 = vmatpush1.msra.mxu0 %v2600
    %2637 = vmatprep.subr.mxu0 0.0
    %2638 = vmatpush2.msra.mxu0 0.0
    %2639 = vmatprep.subr.mxu0 0.0
    %2640 = vmatpush2.msra.mxu0 0.0
    %2641 = vmatprep.subr.mxu0 0.0
    %2642 = vmatpush2.msra.mxu0 0.0
    %2643 = vmatprep.subr.mxu0 0.0
    %2644 = vmatpush2.msra.mxu0 0.0
    %2645 = vmatprep.subr.mxu0 0.0
    %2646 = vmatpush2.msra.mxu0 0.0
    %2647 = vmatprep.subr.mxu0 0.0
    %2648 = vmatpush2.msra.mxu0 0.0
    %2649 = vmatprep.subr.mxu0 0.0
    %2650 = vmatpush2.msra.mxu0 0.0
    %2651 = vmatprep.subr.mxu0 0.0
    %2652 = vmatpush2.msra.mxu0 0.0
    %2653 = vmatprep.subr.mxu0 0.0
    %2654 = vmatpush2.msra.mxu0 0.0
    %2655 = vmatprep.subr.mxu0 0.0
    %2656 = vmatpush2.msra.mxu0 0.0
    %2657 = vmatprep.subr.mxu0 0.0
    %2658 = vmatpush2.msra.mxu0 0.0
    %2659 = vmatprep.subr.mxu0 0.0
    %2660 = vmatpush2.msra.mxu0 0.0
    %2661 = vmatprep.subr.mxu0 0.0
    %2662 = vmatpush2.msra.mxu0 0.0
    %2663 = vmatprep.subr.mxu0 0.0
    %2664 = vmatpush2.msra.mxu0 0.0
    %2665 = vmatprep.subr.mxu0 0.0
    %2666 = vmatpush2.msra.mxu0 0.0
    %2667 = vmatprep.subr.mxu0 0.0
    %2668 = vmatpush2.msra.mxu0 0.0
    %2669 = vmatprep.mubr.f32.mxu0 0.0
    %2670 = vmatmul.mubr.f32.gmra.mxu0 %v2603
    %v2671 = vpop.f32.mrf.mxu0
    %v2672 = vadd.f32 0.0, %v2671
    %v2673 = vpop.f32.mrf.mxu0
    %2674 = vdwg.mxu0
    %s2675 = scalar_lea.vmem %s6, 32
    %v2676 = vld [vmem:[%s2675] sm:$0xff]
    %2677 = vrot.lane.b32.xlu0 %v2335, 120
    %v2678 = vpop.permute.xlu0 %2677
    %2679 = vrot.lane.b32.xlu0 %v2335, 88
    %v2680 = vpop.permute.xlu0 %2679
    %v2681 = vsel %vm238, %v2678, 0
    %v2683 = vsel %vm238, %v2680, 0
    %2685 = vmatprep.subr.mxu0 0.0
    %2686 = vmatpush1.xpose.msra.mxu0 0.0
    %2687 = vmatprep.subr.mxu0 0.0
    %2688 = vmatpush1.xpose.msra.mxu0 0.0
    %2689 = vmatprep.subr.mxu0 0.0
    %2690 = vmatpush1.xpose.msra.mxu0 0.0
    %2691 = vmatprep.subr.mxu0 0.0
    %2692 = vmatpush1.xpose.msra.mxu0 0.0
    %2693 = vmatprep.subr.mxu0 0.0
    %2694 = vmatpush1.xpose.msra.mxu0 0.0
    %2695 = vmatprep.subr.mxu0 0.0
    %2696 = vmatpush1.xpose.msra.mxu0 0.0
    %2697 = vmatprep.subr.mxu0 0.0
    %2698 = vmatpush1.xpose.msra.mxu0 0.0
    %2699 = vmatprep.subr.mxu0 0.0
    %2700 = vmatpush1.xpose.msra.mxu0 0.0
    %2701 = vmatprep.subr.mxu0 0.0
    %2702 = vmatpush1.xpose.msra.mxu0 0.0
    %2703 = vmatprep.subr.mxu0 0.0
    %2704 = vmatpush1.xpose.msra.mxu0 0.0
    %2705 = vmatprep.subr.mxu0 0.0
    %2706 = vmatpush1.xpose.msra.mxu0 0.0
    %2707 = vmatprep.subr.mxu0 0.0
    %2708 = vmatpush1.xpose.msra.mxu0 0.0
    %2709 = vmatprep.subr.mxu0 0.0
    %2710 = vmatpush1.xpose.msra.mxu0 0.0
    %2711 = vmatprep.subr.mxu0 0.0
    %2712 = vmatpush1.xpose.msra.mxu0 0.0
    %2713 = vmatprep.subr.mxu0 0.0
    %2714 = vmatpush1.xpose.msra.mxu0 0.0
    %2715 = vmatprep.subr.mxu0 0.0
    %2716 = vmatpush1.xpose.msra.mxu0 %v2683
    %2717 = vmatprep.subr.mxu0 0.0
    %2718 = vmatpush2.xpose.msra.mxu0 0.0
    %2719 = vmatprep.subr.mxu0 0.0
    %2720 = vmatpush2.xpose.msra.mxu0 0.0
    %2721 = vmatprep.subr.mxu0 0.0
    %2722 = vmatpush2.xpose.msra.mxu0 0.0
    %2723 = vmatprep.subr.mxu0 0.0
    %2724 = vmatpush2.xpose.msra.mxu0 0.0
    %2725 = vmatprep.subr.mxu0 0.0
    %2726 = vmatpush2.xpose.msra.mxu0 0.0
    %2727 = vmatprep.subr.mxu0 0.0
    %2728 = vmatpush2.xpose.msra.mxu0 0.0
    %2729 = vmatprep.subr.mxu0 0.0
    %2730 = vmatpush2.xpose.msra.mxu0 0.0
    %2731 = vmatprep.subr.mxu0 0.0
    %2732 = vmatpush2.xpose.msra.mxu0 0.0
    %2733 = vmatprep.subr.mxu0 0.0
    %2734 = vmatpush2.xpose.msra.mxu0 0.0
    %2735 = vmatprep.subr.mxu0 0.0
    %2736 = vmatpush2.xpose.msra.mxu0 0.0
    %2737 = vmatprep.subr.mxu0 0.0
    %2738 = vmatpush2.xpose.msra.mxu0 0.0
    %2739 = vmatprep.subr.mxu0 0.0
    %2740 = vmatpush2.xpose.msra.mxu0 0.0
    %2741 = vmatprep.subr.mxu0 0.0
    %2742 = vmatpush2.xpose.msra.mxu0 0.0
    %2743 = vmatprep.subr.mxu0 0.0
    %2744 = vmatpush2.xpose.msra.mxu0 0.0
    %2745 = vmatprep.subr.mxu0 0.0
    %2746 = vmatpush2.xpose.msra.mxu0 0.0
    %2747 = vmatprep.subr.mxu0 0.0
    %2748 = vmatpush2.xpose.msra.mxu0 0.0
    %2749 = vmatprep.mubr.f32.mxu0 0.0
    %2750 = vmatmul.mubr.f32.gmra.mxu0 %v2681
    %v2751 = vpop.f32.mrf.mxu0
    %v2752 = vadd.f32 0.0, %v2751
    %v2753 = vpop.f32.mrf.mxu0
    %2754 = vdwg.mxu0
    %2755 = vrot.lane.b32.xlu0 %v2340, 120
    %v2756 = vpop.permute.xlu0 %2755
    %2757 = vrot.lane.b32.xlu0 %v2340, 88
    %v2758 = vpop.permute.xlu0 %2757
    %v2759 = vsel %vm238, %v2756, 0
    %v2761 = vsel %vm238, %v2758, 0
    %2763 = vmatprep.subr.mxu0 0.0
    %2764 = vmatpush1.xpose.msra.mxu0 0.0
    %2765 = vmatprep.subr.mxu0 0.0
    %2766 = vmatpush1.xpose.msra.mxu0 0.0
    %2767 = vmatprep.subr.mxu0 0.0
    %2768 = vmatpush1.xpose.msra.mxu0 0.0
    %2769 = vmatprep.subr.mxu0 0.0
    %2770 = vmatpush1.xpose.msra.mxu0 0.0
    %2771 = vmatprep.subr.mxu0 0.0
    %2772 = vmatpush1.xpose.msra.mxu0 0.0
    %2773 = vmatprep.subr.mxu0 0.0
    %2774 = vmatpush1.xpose.msra.mxu0 0.0
    %2775 = vmatprep.subr.mxu0 0.0
    %2776 = vmatpush1.xpose.msra.mxu0 0.0
    %2777 = vmatprep.subr.mxu0 0.0
    %2778 = vmatpush1.xpose.msra.mxu0 0.0
    %2779 = vmatprep.subr.mxu0 0.0
    %2780 = vmatpush1.xpose.msra.mxu0 0.0
    %2781 = vmatprep.subr.mxu0 0.0
    %2782 = vmatpush1.xpose.msra.mxu0 0.0
    %2783 = vmatprep.subr.mxu0 0.0
    %2784 = vmatpush1.xpose.msra.mxu0 0.0
    %2785 = vmatprep.subr.mxu0 0.0
    %2786 = vmatpush1.xpose.msra.mxu0 0.0
    %2787 = vmatprep.subr.mxu0 0.0
    %2788 = vmatpush1.xpose.msra.mxu0 0.0
    %2789 = vmatprep.subr.mxu0 0.0
    %2790 = vmatpush1.xpose.msra.mxu0 0.0
    %2791 = vmatprep.subr.mxu0 0.0
    %2792 = vmatpush1.xpose.msra.mxu0 0.0
    %2793 = vmatprep.subr.mxu0 0.0
    %2794 = vmatpush1.xpose.msra.mxu0 %v2761
    %2795 = vmatprep.subr.mxu0 0.0
    %2796 = vmatpush2.xpose.msra.mxu0 0.0
    %2797 = vmatprep.subr.mxu0 0.0
    %2798 = vmatpush2.xpose.msra.mxu0 0.0
    %2799 = vmatprep.subr.mxu0 0.0
    %2800 = vmatpush2.xpose.msra.mxu0 0.0
    %2801 = vmatprep.subr.mxu0 0.0
    %2802 = vmatpush2.xpose.msra.mxu0 0.0
    %2803 = vmatprep.subr.mxu0 0.0
    %2804 = vmatpush2.xpose.msra.mxu0 0.0
    %2805 = vmatprep.subr.mxu0 0.0
    %2806 = vmatpush2.xpose.msra.mxu0 0.0
    %2807 = vmatprep.subr.mxu0 0.0
    %2808 = vmatpush2.xpose.msra.mxu0 0.0
    %2809 = vmatprep.subr.mxu0 0.0
    %2810 = vmatpush2.xpose.msra.mxu0 0.0
    %2811 = vmatprep.subr.mxu0 0.0
    %2812 = vmatpush2.xpose.msra.mxu0 0.0
    %2813 = vmatprep.subr.mxu0 0.0
    %2814 = vmatpush2.xpose.msra.mxu0 0.0
    %2815 = vmatprep.subr.mxu0 0.0
    %2816 = vmatpush2.xpose.msra.mxu0 0.0
    %2817 = vmatprep.subr.mxu0 0.0
    %2818 = vmatpush2.xpose.msra.mxu0 0.0
    %2819 = vmatprep.subr.mxu0 0.0
    %2820 = vmatpush2.xpose.msra.mxu0 0.0
    %2821 = vmatprep.subr.mxu0 0.0
    %2822 = vmatpush2.xpose.msra.mxu0 0.0
    %2823 = vmatprep.subr.mxu0 0.0
    %2824 = vmatpush2.xpose.msra.mxu0 0.0
    %2825 = vmatprep.subr.mxu0 0.0
    %2826 = vmatpush2.xpose.msra.mxu0 0.0
    %2827 = vmatprep.mubr.f32.mxu0 0.0
    %2828 = vmatmul.mubr.f32.gmra.mxu0 %v2759
    %v2829 = vpop.f32.mrf.mxu0
    %v2830 = vadd.f32 0.0, %v2829
    %v2831 = vpop.f32.mrf.mxu0
    %2832 = vdwg.mxu0
    %v2833 = vmul.f32 %v2752, 0.35355338
    %v2834 = vmul.f32 %v2830, 0.35355338
    %v2835 = vadd.f32 %v2833, %v136
    %v2836 = vadd.f32 %v2834, %v140
    %v2837 = vsel %vm238, %v2835, -inf
    %2838 = vmax.xlane.f32.xlu0 %v2837
    %v2839 = vpop.xlane.xlu0 %2838
    %v2840 = vsel %vm238, %v2836, -inf
    %2841 = vmax.xlane.f32.xlu0 %v2840
    %v2842 = vpop.xlane.xlu0 %2841
    %v2843 = vsub.f32 %v2835, %v2839
    %v2844 = vsub.f32 %v2836, %v2842
    %v2845 = vmul.f32 %v2843, 1.442695
    %v2846 = vpow.pop %v2845
    %v2847 = vmul.f32 %v2844, 1.442695
    %v2848 = vpow.pop %v2847
    %v2849 = vsel %vm238, %v2846, 0.0
    %2850 = vadd.xlane.f32.xlu0 %v2849
    %v2851 = vpop.xlane.xlu0 %2850
    %v2852 = vsel %vm238, %v2848, 0.0
    %2853 = vadd.xlane.f32.xlu0 %v2852
    %v2854 = vpop.xlane.xlu0 %2853
    %v2855 = vrcp.pop %v2851
    %v2856 = vrcp.pop %v2854
    %v2857 = vmul.f32 %v2846, %v2855
    %v2858 = vmul.f32 %v2848, %v2856
    %2859 = vrot.lane.b32.xlu0 %v2335, 56
    %v2860 = vpop.permute.xlu0 %2859
    %v2863 = vsel %vm238, %v2857, 0
    %2865 = vmatprep.subr.mxu0 0.0
    %2866 = vmatpush1.msra.mxu0 0.0
    %2867 = vmatprep.subr.mxu0 0.0
    %2868 = vmatpush1.msra.mxu0 0.0
    %2869 = vmatprep.subr.mxu0 0.0
    %2870 = vmatpush1.msra.mxu0 0.0
    %2871 = vmatprep.subr.mxu0 0.0
    %2872 = vmatpush1.msra.mxu0 0.0
    %2873 = vmatprep.subr.mxu0 0.0
    %2874 = vmatpush1.msra.mxu0 0.0
    %2875 = vmatprep.subr.mxu0 0.0
    %2876 = vmatpush1.msra.mxu0 0.0
    %2877 = vmatprep.subr.mxu0 0.0
    %2878 = vmatpush1.msra.mxu0 0.0
    %2879 = vmatprep.subr.mxu0 0.0
    %2880 = vmatpush1.msra.mxu0 0.0
    %2881 = vmatprep.subr.mxu0 0.0
    %2882 = vmatpush1.msra.mxu0 0.0
    %2883 = vmatprep.subr.mxu0 0.0
    %2884 = vmatpush1.msra.mxu0 0.0
    %2885 = vmatprep.subr.mxu0 0.0
    %2886 = vmatpush1.msra.mxu0 0.0
    %2887 = vmatprep.subr.mxu0 0.0
    %2888 = vmatpush1.msra.mxu0 0.0
    %2889 = vmatprep.subr.mxu0 0.0
    %2890 = vmatpush1.msra.mxu0 0.0
    %2891 = vmatprep.subr.mxu0 0.0
    %2892 = vmatpush1.msra.mxu0 0.0
    %2893 = vmatprep.subr.mxu0 0.0
    %2894 = vmatpush1.msra.mxu0 0.0
    %2895 = vmatprep.subr.mxu0 0.0
    %2896 = vmatpush1.msra.mxu0 %v2860
    %2897 = vmatprep.subr.mxu0 0.0
    %2898 = vmatpush2.msra.mxu0 0.0
    %2899 = vmatprep.subr.mxu0 0.0
    %2900 = vmatpush2.msra.mxu0 0.0
    %2901 = vmatprep.subr.mxu0 0.0
    %2902 = vmatpush2.msra.mxu0 0.0
    %2903 = vmatprep.subr.mxu0 0.0
    %2904 = vmatpush2.msra.mxu0 0.0
    %2905 = vmatprep.subr.mxu0 0.0
    %2906 = vmatpush2.msra.mxu0 0.0
    %2907 = vmatprep.subr.mxu0 0.0
    %2908 = vmatpush2.msra.mxu0 0.0
    %2909 = vmatprep.subr.mxu0 0.0
    %2910 = vmatpush2.msra.mxu0 0.0
    %2911 = vmatprep.subr.mxu0 0.0
    %2912 = vmatpush2.msra.mxu0 0.0
    %2913 = vmatprep.subr.mxu0 0.0
    %2914 = vmatpush2.msra.mxu0 0.0
    %2915 = vmatprep.subr.mxu0 0.0
    %2916 = vmatpush2.msra.mxu0 0.0
    %2917 = vmatprep.subr.mxu0 0.0
    %2918 = vmatpush2.msra.mxu0 0.0
    %2919 = vmatprep.subr.mxu0 0.0
    %2920 = vmatpush2.msra.mxu0 0.0
    %2921 = vmatprep.subr.mxu0 0.0
    %2922 = vmatpush2.msra.mxu0 0.0
    %2923 = vmatprep.subr.mxu0 0.0
    %2924 = vmatpush2.msra.mxu0 0.0
    %2925 = vmatprep.subr.mxu0 0.0
    %2926 = vmatpush2.msra.mxu0 0.0
    %2927 = vmatprep.subr.mxu0 0.0
    %2928 = vmatpush2.msra.mxu0 0.0
    %2929 = vmatprep.mubr.f32.mxu0 0.0
    %2930 = vmatmul.mubr.f32.gmra.mxu0 %v2863
    %v2931 = vpop.f32.mrf.mxu0
    %v2932 = vadd.f32 0.0, %v2931
    %v2933 = vpop.f32.mrf.mxu0
    %2934 = vdwg.mxu0
    %2935 = vrot.lane.b32.xlu0 %v2340, 56
    %v2936 = vpop.permute.xlu0 %2935
    %v2939 = vsel %vm238, %v2858, 0
    %2941 = vmatprep.subr.mxu0 0.0
    %2942 = vmatpush1.msra.mxu0 0.0
    %2943 = vmatprep.subr.mxu0 0.0
    %2944 = vmatpush1.msra.mxu0 0.0
    %2945 = vmatprep.subr.mxu0 0.0
    %2946 = vmatpush1.msra.mxu0 0.0
    %2947 = vmatprep.subr.mxu0 0.0
    %2948 = vmatpush1.msra.mxu0 0.0
    %2949 = vmatprep.subr.mxu0 0.0
    %2950 = vmatpush1.msra.mxu0 0.0
    %2951 = vmatprep.subr.mxu0 0.0
    %2952 = vmatpush1.msra.mxu0 0.0
    %2953 = vmatprep.subr.mxu0 0.0
    %2954 = vmatpush1.msra.mxu0 0.0
    %2955 = vmatprep.subr.mxu0 0.0
    %2956 = vmatpush1.msra.mxu0 0.0
    %2957 = vmatprep.subr.mxu0 0.0
    %2958 = vmatpush1.msra.mxu0 0.0
    %2959 = vmatprep.subr.mxu0 0.0
    %2960 = vmatpush1.msra.mxu0 0.0
    %2961 = vmatprep.subr.mxu0 0.0
    %2962 = vmatpush1.msra.mxu0 0.0
    %2963 = vmatprep.subr.mxu0 0.0
    %2964 = vmatpush1.msra.mxu0 0.0
    %2965 = vmatprep.subr.mxu0 0.0
    %2966 = vmatpush1.msra.mxu0 0.0
    %2967 = vmatprep.subr.mxu0 0.0
    %2968 = vmatpush1.msra.mxu0 0.0
    %2969 = vmatprep.subr.mxu0 0.0
    %2970 = vmatpush1.msra.mxu0 0.0
    %2971 = vmatprep.subr.mxu0 0.0
    %2972 = vmatpush1.msra.mxu0 %v2936
    %2973 = vmatprep.subr.mxu0 0.0
    %2974 = vmatpush2.msra.mxu0 0.0
    %2975 = vmatprep.subr.mxu0 0.0
    %2976 = vmatpush2.msra.mxu0 0.0
    %2977 = vmatprep.subr.mxu0 0.0
    %2978 = vmatpush2.msra.mxu0 0.0
    %2979 = vmatprep.subr.mxu0 0.0
    %2980 = vmatpush2.msra.mxu0 0.0
    %2981 = vmatprep.subr.mxu0 0.0
    %2982 = vmatpush2.msra.mxu0 0.0
    %2983 = vmatprep.subr.mxu0 0.0
    %2984 = vmatpush2.msra.mxu0 0.0
    %2985 = vmatprep.subr.mxu0 0.0
    %2986 = vmatpush2.msra.mxu0 0.0
    %2987 = vmatprep.subr.mxu0 0.0
    %2988 = vmatpush2.msra.mxu0 0.0
    %2989 = vmatprep.subr.mxu0 0.0
    %2990 = vmatpush2.msra.mxu0 0.0
    %2991 = vmatprep.subr.mxu0 0.0
    %2992 = vmatpush2.msra.mxu0 0.0
    %2993 = vmatprep.subr.mxu0 0.0
    %2994 = vmatpush2.msra.mxu0 0.0
    %2995 = vmatprep.subr.mxu0 0.0
    %2996 = vmatpush2.msra.mxu0 0.0
    %2997 = vmatprep.subr.mxu0 0.0
    %2998 = vmatpush2.msra.mxu0 0.0
    %2999 = vmatprep.subr.mxu0 0.0
    %3000 = vmatpush2.msra.mxu0 0.0
    %3001 = vmatprep.subr.mxu0 0.0
    %3002 = vmatpush2.msra.mxu0 0.0
    %3003 = vmatprep.subr.mxu0 0.0
    %3004 = vmatpush2.msra.mxu0 0.0
    %3005 = vmatprep.mubr.f32.mxu0 0.0
    %3006 = vmatmul.mubr.f32.gmra.mxu0 %v2939
    %v3007 = vpop.f32.mrf.mxu0
    %v3008 = vadd.f32 0.0, %v3007
    %v3009 = vpop.f32.mrf.mxu0
    %3010 = vdwg.mxu0
    %s3011 = scalar_lea.vmem %s6, 40
    %v3012 = vld [vmem:[%s3011] sm:$0xff]
    %v3014 = vsel %vm238, %v2932, 0
    %v3017 = vsel %vm238, %v3008, 0
    %3019 = vmatprep.subr.mxu0 0.0
    %3020 = vmatpush1.msra.mxu0 0.0
    %3021 = vmatprep.subr.mxu0 0.0
    %3022 = vmatpush1.msra.mxu0 0.0
    %3023 = vmatprep.subr.mxu0 0.0
    %3024 = vmatpush1.msra.mxu0 0.0
    %3025 = vmatprep.subr.mxu0 0.0
    %3026 = vmatpush1.msra.mxu0 0.0
    %3027 = vmatprep.subr.mxu0 0.0
    %3028 = vmatpush1.msra.mxu0 0.0
    %3029 = vmatprep.subr.mxu0 0.0
    %3030 = vmatpush1.msra.mxu0 0.0
    %3031 = vmatprep.subr.mxu0 0.0
    %3032 = vmatpush1.msra.mxu0 0.0
    %3033 = vmatprep.subr.mxu0 0.0
    %3034 = vmatpush1.msra.mxu0 0.0
    %3035 = vmatprep.subr.mxu0 0.0
    %3036 = vmatpush1.msra.mxu0 0.0
    %3037 = vmatprep.subr.mxu0 0.0
    %3038 = vmatpush1.msra.mxu0 0.0
    %3039 = vmatprep.subr.mxu0 0.0
    %3040 = vmatpush1.msra.mxu0 0.0
    %3041 = vmatprep.subr.mxu0 0.0
    %3042 = vmatpush1.msra.mxu0 0.0
    %3043 = vmatprep.subr.mxu0 0.0
    %3044 = vmatpush1.msra.mxu0 0.0
    %3045 = vmatprep.subr.mxu0 0.0
    %3046 = vmatpush1.msra.mxu0 0.0
    %3047 = vmatprep.subr.mxu0 0.0
    %3048 = vmatpush1.msra.mxu0 0.0
    %3049 = vmatprep.subr.mxu0 0.0
    %3050 = vmatpush1.msra.mxu0 %v3012
    %3051 = vmatprep.subr.mxu0 0.0
    %3052 = vmatpush2.msra.mxu0 0.0
    %3053 = vmatprep.subr.mxu0 0.0
    %3054 = vmatpush2.msra.mxu0 0.0
    %3055 = vmatprep.subr.mxu0 0.0
    %3056 = vmatpush2.msra.mxu0 0.0
    %3057 = vmatprep.subr.mxu0 0.0
    %3058 = vmatpush2.msra.mxu0 0.0
    %3059 = vmatprep.subr.mxu0 0.0
    %3060 = vmatpush2.msra.mxu0 0.0
    %3061 = vmatprep.subr.mxu0 0.0
    %3062 = vmatpush2.msra.mxu0 0.0
    %3063 = vmatprep.subr.mxu0 0.0
    %3064 = vmatpush2.msra.mxu0 0.0
    %3065 = vmatprep.subr.mxu0 0.0
    %3066 = vmatpush2.msra.mxu0 0.0
    %3067 = vmatprep.subr.mxu0 0.0
    %3068 = vmatpush2.msra.mxu0 0.0
    %3069 = vmatprep.subr.mxu0 0.0
    %3070 = vmatpush2.msra.mxu0 0.0
    %3071 = vmatprep.subr.mxu0 0.0
    %3072 = vmatpush2.msra.mxu0 0.0
    %3073 = vmatprep.subr.mxu0 0.0
    %3074 = vmatpush2.msra.mxu0 0.0
    %3075 = vmatprep.subr.mxu0 0.0
    %3076 = vmatpush2.msra.mxu0 0.0
    %3077 = vmatprep.subr.mxu0 0.0
    %3078 = vmatpush2.msra.mxu0 0.0
    %3079 = vmatprep.subr.mxu0 0.0
    %3080 = vmatpush2.msra.mxu0 0.0
    %3081 = vmatprep.subr.mxu0 0.0
    %3082 = vmatpush2.msra.mxu0 0.0
    %3083 = vmatprep.mubr.f32.mxu0 0.0
    %3084 = vmatmul.mubr.f32.gmra.mxu0 %v3014
    %v3085 = vpop.f32.mrf.mxu0
    %v3086 = vadd.f32 0.0, %v3085
    %v3087 = vpop.f32.mrf.mxu0
    %3088 = vmatprep.mubr.f32.mxu0 0.0
    %3089 = vmatmul.mubr.f32.gmra.mxu0 %v3017
    %v3090 = vpop.f32.mrf.mxu0
    %v3091 = vadd.f32 0.0, %v3090
    %v3092 = vpop.f32.mrf.mxu0
    %3093 = vdwg.mxu0
    %v3095 = vsel %vm238, %v2596, 0
    %v3098 = vsel %vm238, %v2672, 0
    %3100 = vmatprep.subr.mxu0 0.0
    %3101 = vmatpush1.msra.mxu0 0.0
    %3102 = vmatprep.subr.mxu0 0.0
    %3103 = vmatpush1.msra.mxu0 0.0
    %3104 = vmatprep.subr.mxu0 0.0
    %3105 = vmatpush1.msra.mxu0 0.0
    %3106 = vmatprep.subr.mxu0 0.0
    %3107 = vmatpush1.msra.mxu0 0.0
    %3108 = vmatprep.subr.mxu0 0.0
    %3109 = vmatpush1.msra.mxu0 0.0
    %3110 = vmatprep.subr.mxu0 0.0
    %3111 = vmatpush1.msra.mxu0 0.0
    %3112 = vmatprep.subr.mxu0 0.0
    %3113 = vmatpush1.msra.mxu0 0.0
    %3114 = vmatprep.subr.mxu0 0.0
    %3115 = vmatpush1.msra.mxu0 0.0
    %3116 = vmatprep.subr.mxu0 0.0
    %3117 = vmatpush1.msra.mxu0 0.0
    %3118 = vmatprep.subr.mxu0 0.0
    %3119 = vmatpush1.msra.mxu0 0.0
    %3120 = vmatprep.subr.mxu0 0.0
    %3121 = vmatpush1.msra.mxu0 0.0
    %3122 = vmatprep.subr.mxu0 0.0
    %3123 = vmatpush1.msra.mxu0 0.0
    %3124 = vmatprep.subr.mxu0 0.0
    %3125 = vmatpush1.msra.mxu0 0.0
    %3126 = vmatprep.subr.mxu0 0.0
    %3127 = vmatpush1.msra.mxu0 0.0
    %3128 = vmatprep.subr.mxu0 0.0
    %3129 = vmatpush1.msra.mxu0 0.0
    %3130 = vmatprep.subr.mxu0 0.0
    %3131 = vmatpush1.msra.mxu0 %v2676
    %3132 = vmatprep.subr.mxu0 0.0
    %3133 = vmatpush2.msra.mxu0 0.0
    %3134 = vmatprep.subr.mxu0 0.0
    %3135 = vmatpush2.msra.mxu0 0.0
    %3136 = vmatprep.subr.mxu0 0.0
    %3137 = vmatpush2.msra.mxu0 0.0
    %3138 = vmatprep.subr.mxu0 0.0
    %3139 = vmatpush2.msra.mxu0 0.0
    %3140 = vmatprep.subr.mxu0 0.0
    %3141 = vmatpush2.msra.mxu0 0.0
    %3142 = vmatprep.subr.mxu0 0.0
    %3143 = vmatpush2.msra.mxu0 0.0
    %3144 = vmatprep.subr.mxu0 0.0
    %3145 = vmatpush2.msra.mxu0 0.0
    %3146 = vmatprep.subr.mxu0 0.0
    %3147 = vmatpush2.msra.mxu0 0.0
    %3148 = vmatprep.subr.mxu0 0.0
    %3149 = vmatpush2.msra.mxu0 0.0
    %3150 = vmatprep.subr.mxu0 0.0
    %3151 = vmatpush2.msra.mxu0 0.0
    %3152 = vmatprep.subr.mxu0 0.0
    %3153 = vmatpush2.msra.mxu0 0.0
    %3154 = vmatprep.subr.mxu0 0.0
    %3155 = vmatpush2.msra.mxu0 0.0
    %3156 = vmatprep.subr.mxu0 0.0
    %3157 = vmatpush2.msra.mxu0 0.0
    %3158 = vmatprep.subr.mxu0 0.0
    %3159 = vmatpush2.msra.mxu0 0.0
    %3160 = vmatprep.subr.mxu0 0.0
    %3161 = vmatpush2.msra.mxu0 0.0
    %3162 = vmatprep.subr.mxu0 0.0
    %3163 = vmatpush2.msra.mxu0 0.0
    %3164 = vmatprep.mubr.f32.mxu0 0.0
    %3165 = vmatmul.mubr.f32.gmra.mxu0 %v3095
    %v3166 = vpop.f32.mrf.mxu0
    %v3167 = vadd.f32 %v3086, %v3166
    %v3168 = vpop.f32.mrf.mxu0
    %3169 = vmatprep.mubr.f32.mxu0 0.0
    %3170 = vmatmul.mubr.f32.gmra.mxu0 %v3098
    %v3171 = vpop.f32.mrf.mxu0
    %v3172 = vadd.f32 %v3091, %v3171
    %v3173 = vpop.f32.mrf.mxu0
    %3174 = vdwg.mxu0
    %3175 = vrot.lane.b32.xlu0 %v2335, 112
    %v3176 = vpop.permute.xlu0 %3175
    %3177 = vrot.lane.b32.xlu0 %v2335, 80
    %v3178 = vpop.permute.xlu0 %3177
    %v3179 = vsel %vm238, %v3176, 0
    %v3181 = vsel %vm238, %v3178, 0
    %3183 = vmatprep.subr.mxu0 0.0
    %3184 = vmatpush1.xpose.msra.mxu0 0.0
    %3185 = vmatprep.subr.mxu0 0.0
    %3186 = vmatpush1.xpose.msra.mxu0 0.0
    %3187 = vmatprep.subr.mxu0 0.0
    %3188 = vmatpush1.xpose.msra.mxu0 0.0
    %3189 = vmatprep.subr.mxu0 0.0
    %3190 = vmatpush1.xpose.msra.mxu0 0.0
    %3191 = vmatprep.subr.mxu0 0.0
    %3192 = vmatpush1.xpose.msra.mxu0 0.0
    %3193 = vmatprep.subr.mxu0 0.0
    %3194 = vmatpush1.xpose.msra.mxu0 0.0
    %3195 = vmatprep.subr.mxu0 0.0
    %3196 = vmatpush1.xpose.msra.mxu0 0.0
    %3197 = vmatprep.subr.mxu0 0.0
    %3198 = vmatpush1.xpose.msra.mxu0 0.0
    %3199 = vmatprep.subr.mxu0 0.0
    %3200 = vmatpush1.xpose.msra.mxu0 0.0
    %3201 = vmatprep.subr.mxu0 0.0
    %3202 = vmatpush1.xpose.msra.mxu0 0.0
    %3203 = vmatprep.subr.mxu0 0.0
    %3204 = vmatpush1.xpose.msra.mxu0 0.0
    %3205 = vmatprep.subr.mxu0 0.0
    %3206 = vmatpush1.xpose.msra.mxu0 0.0
    %3207 = vmatprep.subr.mxu0 0.0
    %3208 = vmatpush1.xpose.msra.mxu0 0.0
    %3209 = vmatprep.subr.mxu0 0.0
    %3210 = vmatpush1.xpose.msra.mxu0 0.0
    %3211 = vmatprep.subr.mxu0 0.0
    %3212 = vmatpush1.xpose.msra.mxu0 0.0
    %3213 = vmatprep.subr.mxu0 0.0
    %3214 = vmatpush1.xpose.msra.mxu0 %v3181
    %3215 = vmatprep.subr.mxu0 0.0
    %3216 = vmatpush2.xpose.msra.mxu0 0.0
    %3217 = vmatprep.subr.mxu0 0.0
    %3218 = vmatpush2.xpose.msra.mxu0 0.0
    %3219 = vmatprep.subr.mxu0 0.0
    %3220 = vmatpush2.xpose.msra.mxu0 0.0
    %3221 = vmatprep.subr.mxu0 0.0
    %3222 = vmatpush2.xpose.msra.mxu0 0.0
    %3223 = vmatprep.subr.mxu0 0.0
    %3224 = vmatpush2.xpose.msra.mxu0 0.0
    %3225 = vmatprep.subr.mxu0 0.0
    %3226 = vmatpush2.xpose.msra.mxu0 0.0
    %3227 = vmatprep.subr.mxu0 0.0
    %3228 = vmatpush2.xpose.msra.mxu0 0.0
    %3229 = vmatprep.subr.mxu0 0.0
    %3230 = vmatpush2.xpose.msra.mxu0 0.0
    %3231 = vmatprep.subr.mxu0 0.0
    %3232 = vmatpush2.xpose.msra.mxu0 0.0
    %3233 = vmatprep.subr.mxu0 0.0
    %3234 = vmatpush2.xpose.msra.mxu0 0.0
    %3235 = vmatprep.subr.mxu0 0.0
    %3236 = vmatpush2.xpose.msra.mxu0 0.0
    %3237 = vmatprep.subr.mxu0 0.0
    %3238 = vmatpush2.xpose.msra.mxu0 0.0
    %3239 = vmatprep.subr.mxu0 0.0
    %3240 = vmatpush2.xpose.msra.mxu0 0.0
    %3241 = vmatprep.subr.mxu0 0.0
    %3242 = vmatpush2.xpose.msra.mxu0 0.0
    %3243 = vmatprep.subr.mxu0 0.0
    %3244 = vmatpush2.xpose.msra.mxu0 0.0
    %3245 = vmatprep.subr.mxu0 0.0
    %3246 = vmatpush2.xpose.msra.mxu0 0.0
    %3247 = vmatprep.mubr.f32.mxu0 0.0
    %3248 = vmatmul.mubr.f32.gmra.mxu0 %v3179
    %v3249 = vpop.f32.mrf.mxu0
    %v3250 = vadd.f32 0.0, %v3249
    %v3251 = vpop.f32.mrf.mxu0
    %3252 = vdwg.mxu0
    %3253 = vrot.lane.b32.xlu0 %v2340, 112
    %v3254 = vpop.permute.xlu0 %3253
    %3255 = vrot.lane.b32.xlu0 %v2340, 80
    %v3256 = vpop.permute.xlu0 %3255
    %v3257 = vsel %vm238, %v3254, 0
    %v3259 = vsel %vm238, %v3256, 0
    %3261 = vmatprep.subr.mxu0 0.0
    %3262 = vmatpush1.xpose.msra.mxu0 0.0
    %3263 = vmatprep.subr.mxu0 0.0
    %3264 = vmatpush1.xpose.msra.mxu0 0.0
    %3265 = vmatprep.subr.mxu0 0.0
    %3266 = vmatpush1.xpose.msra.mxu0 0.0
    %3267 = vmatprep.subr.mxu0 0.0
    %3268 = vmatpush1.xpose.msra.mxu0 0.0
    %3269 = vmatprep.subr.mxu0 0.0
    %3270 = vmatpush1.xpose.msra.mxu0 0.0
    %3271 = vmatprep.subr.mxu0 0.0
    %3272 = vmatpush1.xpose.msra.mxu0 0.0
    %3273 = vmatprep.subr.mxu0 0.0
    %3274 = vmatpush1.xpose.msra.mxu0 0.0
    %3275 = vmatprep.subr.mxu0 0.0
    %3276 = vmatpush1.xpose.msra.mxu0 0.0
    %3277 = vmatprep.subr.mxu0 0.0
    %3278 = vmatpush1.xpose.msra.mxu0 0.0
    %3279 = vmatprep.subr.mxu0 0.0
    %3280 = vmatpush1.xpose.msra.mxu0 0.0
    %3281 = vmatprep.subr.mxu0 0.0
    %3282 = vmatpush1.xpose.msra.mxu0 0.0
    %3283 = vmatprep.subr.mxu0 0.0
    %3284 = vmatpush1.xpose.msra.mxu0 0.0
    %3285 = vmatprep.subr.mxu0 0.0
    %3286 = vmatpush1.xpose.msra.mxu0 0.0
    %3287 = vmatprep.subr.mxu0 0.0
    %3288 = vmatpush1.xpose.msra.mxu0 0.0
    %3289 = vmatprep.subr.mxu0 0.0
    %3290 = vmatpush1.xpose.msra.mxu0 0.0
    %3291 = vmatprep.subr.mxu0 0.0
    %3292 = vmatpush1.xpose.msra.mxu0 %v3259
    %3293 = vmatprep.subr.mxu0 0.0
    %3294 = vmatpush2.xpose.msra.mxu0 0.0
    %3295 = vmatprep.subr.mxu0 0.0
    %3296 = vmatpush2.xpose.msra.mxu0 0.0
    %3297 = vmatprep.subr.mxu0 0.0
    %3298 = vmatpush2.xpose.msra.mxu0 0.0
    %3299 = vmatprep.subr.mxu0 0.0
    %3300 = vmatpush2.xpose.msra.mxu0 0.0
    %3301 = vmatprep.subr.mxu0 0.0
    %3302 = vmatpush2.xpose.msra.mxu0 0.0
    %3303 = vmatprep.subr.mxu0 0.0
    %3304 = vmatpush2.xpose.msra.mxu0 0.0
    %3305 = vmatprep.subr.mxu0 0.0
    %3306 = vmatpush2.xpose.msra.mxu0 0.0
    %3307 = vmatprep.subr.mxu0 0.0
    %3308 = vmatpush2.xpose.msra.mxu0 0.0
    %3309 = vmatprep.subr.mxu0 0.0
    %3310 = vmatpush2.xpose.msra.mxu0 0.0
    %3311 = vmatprep.subr.mxu0 0.0
    %3312 = vmatpush2.xpose.msra.mxu0 0.0
    %3313 = vmatprep.subr.mxu0 0.0
    %3314 = vmatpush2.xpose.msra.mxu0 0.0
    %3315 = vmatprep.subr.mxu0 0.0
    %3316 = vmatpush2.xpose.msra.mxu0 0.0
    %3317 = vmatprep.subr.mxu0 0.0
    %3318 = vmatpush2.xpose.msra.mxu0 0.0
    %3319 = vmatprep.subr.mxu0 0.0
    %3320 = vmatpush2.xpose.msra.mxu0 0.0
    %3321 = vmatprep.subr.mxu0 0.0
    %3322 = vmatpush2.xpose.msra.mxu0 0.0
    %3323 = vmatprep.subr.mxu0 0.0
    %3324 = vmatpush2.xpose.msra.mxu0 0.0
    %3325 = vmatprep.mubr.f32.mxu0 0.0
    %3326 = vmatmul.mubr.f32.gmra.mxu0 %v3257
    %v3327 = vpop.f32.mrf.mxu0
    %v3328 = vadd.f32 0.0, %v3327
    %v3329 = vpop.f32.mrf.mxu0
    %3330 = vdwg.mxu0
    %v3331 = vmul.f32 %v3250, 0.35355338
    %v3332 = vmul.f32 %v3328, 0.35355338
    %v3333 = vadd.f32 %v3331, %v136
    %v3334 = vadd.f32 %v3332, %v140
    %v3335 = vsel %vm238, %v3333, -inf
    %3336 = vmax.xlane.f32.xlu0 %v3335
    %v3337 = vpop.xlane.xlu0 %3336
    %v3338 = vsel %vm238, %v3334, -inf
    %3339 = vmax.xlane.f32.xlu0 %v3338
    %v3340 = vpop.xlane.xlu0 %3339
    %v3341 = vsub.f32 %v3333, %v3337
    %v3342 = vsub.f32 %v3334, %v3340
    %v3343 = vmul.f32 %v3341, 1.442695
    %v3344 = vpow.pop %v3343
    %v3345 = vmul.f32 %v3342, 1.442695
    %v3346 = vpow.pop %v3345
    %v3347 = vsel %vm238, %v3344, 0.0
    %3348 = vadd.xlane.f32.xlu0 %v3347
    %v3349 = vpop.xlane.xlu0 %3348
    %v3350 = vsel %vm238, %v3346, 0.0
    %3351 = vadd.xlane.f32.xlu0 %v3350
    %v3352 = vpop.xlane.xlu0 %3351
    %v3353 = vrcp.pop %v3349
    %v3354 = vrcp.pop %v3352
    %v3355 = vmul.f32 %v3344, %v3353
    %v3356 = vmul.f32 %v3346, %v3354
    %3357 = vrot.lane.b32.xlu0 %v2335, 48
    %v3358 = vpop.permute.xlu0 %3357
    %v3361 = vsel %vm238, %v3355, 0
    %3363 = vmatprep.subr.mxu0 0.0
    %3364 = vmatpush1.msra.mxu0 0.0
    %3365 = vmatprep.subr.mxu0 0.0
    %3366 = vmatpush1.msra.mxu0 0.0
    %3367 = vmatprep.subr.mxu0 0.0
    %3368 = vmatpush1.msra.mxu0 0.0
    %3369 = vmatprep.subr.mxu0 0.0
    %3370 = vmatpush1.msra.mxu0 0.0
    %3371 = vmatprep.subr.mxu0 0.0
    %3372 = vmatpush1.msra.mxu0 0.0
    %3373 = vmatprep.subr.mxu0 0.0
    %3374 = vmatpush1.msra.mxu0 0.0
    %3375 = vmatprep.subr.mxu0 0.0
    %3376 = vmatpush1.msra.mxu0 0.0
    %3377 = vmatprep.subr.mxu0 0.0
    %3378 = vmatpush1.msra.mxu0 0.0
    %3379 = vmatprep.subr.mxu0 0.0
    %3380 = vmatpush1.msra.mxu0 0.0
    %3381 = vmatprep.subr.mxu0 0.0
    %3382 = vmatpush1.msra.mxu0 0.0
    %3383 = vmatprep.subr.mxu0 0.0
    %3384 = vmatpush1.msra.mxu0 0.0
    %3385 = vmatprep.subr.mxu0 0.0
    %3386 = vmatpush1.msra.mxu0 0.0
    %3387 = vmatprep.subr.mxu0 0.0
    %3388 = vmatpush1.msra.mxu0 0.0
    %3389 = vmatprep.subr.mxu0 0.0
    %3390 = vmatpush1.msra.mxu0 0.0
    %3391 = vmatprep.subr.mxu0 0.0
    %3392 = vmatpush1.msra.mxu0 0.0
    %3393 = vmatprep.subr.mxu0 0.0
    %3394 = vmatpush1.msra.mxu0 %v3358
    %3395 = vmatprep.subr.mxu0 0.0
    %3396 = vmatpush2.msra.mxu0 0.0
    %3397 = vmatprep.subr.mxu0 0.0
    %3398 = vmatpush2.msra.mxu0 0.0
    %3399 = vmatprep.subr.mxu0 0.0
    %3400 = vmatpush2.msra.mxu0 0.0
    %3401 = vmatprep.subr.mxu0 0.0
    %3402 = vmatpush2.msra.mxu0 0.0
    %3403 = vmatprep.subr.mxu0 0.0
    %3404 = vmatpush2.msra.mxu0 0.0
    %3405 = vmatprep.subr.mxu0 0.0
    %3406 = vmatpush2.msra.mxu0 0.0
    %3407 = vmatprep.subr.mxu0 0.0
    %3408 = vmatpush2.msra.mxu0 0.0
    %3409 = vmatprep.subr.mxu0 0.0
    %3410 = vmatpush2.msra.mxu0 0.0
    %3411 = vmatprep.subr.mxu0 0.0
    %3412 = vmatpush2.msra.mxu0 0.0
    %3413 = vmatprep.subr.mxu0 0.0
    %3414 = vmatpush2.msra.mxu0 0.0
    %3415 = vmatprep.subr.mxu0 0.0
    %3416 = vmatpush2.msra.mxu0 0.0
    %3417 = vmatprep.subr.mxu0 0.0
    %3418 = vmatpush2.msra.mxu0 0.0
    %3419 = vmatprep.subr.mxu0 0.0
    %3420 = vmatpush2.msra.mxu0 0.0
    %3421 = vmatprep.subr.mxu0 0.0
    %3422 = vmatpush2.msra.mxu0 0.0
    %3423 = vmatprep.subr.mxu0 0.0
    %3424 = vmatpush2.msra.mxu0 0.0
    %3425 = vmatprep.subr.mxu0 0.0
    %3426 = vmatpush2.msra.mxu0 0.0
    %3427 = vmatprep.mubr.f32.mxu0 0.0
    %3428 = vmatmul.mubr.f32.gmra.mxu0 %v3361
    %v3429 = vpop.f32.mrf.mxu0
    %v3430 = vadd.f32 0.0, %v3429
    %v3431 = vpop.f32.mrf.mxu0
    %3432 = vdwg.mxu0
    %3433 = vrot.lane.b32.xlu0 %v2340, 48
    %v3434 = vpop.permute.xlu0 %3433
    %v3437 = vsel %vm238, %v3356, 0
    %3439 = vmatprep.subr.mxu0 0.0
    %3440 = vmatpush1.msra.mxu0 0.0
    %3441 = vmatprep.subr.mxu0 0.0
    %3442 = vmatpush1.msra.mxu0 0.0
    %3443 = vmatprep.subr.mxu0 0.0
    %3444 = vmatpush1.msra.mxu0 0.0
    %3445 = vmatprep.subr.mxu0 0.0
    %3446 = vmatpush1.msra.mxu0 0.0
    %3447 = vmatprep.subr.mxu0 0.0
    %3448 = vmatpush1.msra.mxu0 0.0
    %3449 = vmatprep.subr.mxu0 0.0
    %3450 = vmatpush1.msra.mxu0 0.0
    %3451 = vmatprep.subr.mxu0 0.0
    %3452 = vmatpush1.msra.mxu0 0.0
    %3453 = vmatprep.subr.mxu0 0.0
    %3454 = vmatpush1.msra.mxu0 0.0
    %3455 = vmatprep.subr.mxu0 0.0
    %3456 = vmatpush1.msra.mxu0 0.0
    %3457 = vmatprep.subr.mxu0 0.0
    %3458 = vmatpush1.msra.mxu0 0.0
    %3459 = vmatprep.subr.mxu0 0.0
    %3460 = vmatpush1.msra.mxu0 0.0
    %3461 = vmatprep.subr.mxu0 0.0
    %3462 = vmatpush1.msra.mxu0 0.0
    %3463 = vmatprep.subr.mxu0 0.0
    %3464 = vmatpush1.msra.mxu0 0.0
    %3465 = vmatprep.subr.mxu0 0.0
    %3466 = vmatpush1.msra.mxu0 0.0
    %3467 = vmatprep.subr.mxu0 0.0
    %3468 = vmatpush1.msra.mxu0 0.0
    %3469 = vmatprep.subr.mxu0 0.0
    %3470 = vmatpush1.msra.mxu0 %v3434
    %3471 = vmatprep.subr.mxu0 0.0
    %3472 = vmatpush2.msra.mxu0 0.0
    %3473 = vmatprep.subr.mxu0 0.0
    %3474 = vmatpush2.msra.mxu0 0.0
    %3475 = vmatprep.subr.mxu0 0.0
    %3476 = vmatpush2.msra.mxu0 0.0
    %3477 = vmatprep.subr.mxu0 0.0
    %3478 = vmatpush2.msra.mxu0 0.0
    %3479 = vmatprep.subr.mxu0 0.0
    %3480 = vmatpush2.msra.mxu0 0.0
    %3481 = vmatprep.subr.mxu0 0.0
    %3482 = vmatpush2.msra.mxu0 0.0
    %3483 = vmatprep.subr.mxu0 0.0
    %3484 = vmatpush2.msra.mxu0 0.0
    %3485 = vmatprep.subr.mxu0 0.0
    %3486 = vmatpush2.msra.mxu0 0.0
    %3487 = vmatprep.subr.mxu0 0.0
    %3488 = vmatpush2.msra.mxu0 0.0
    %3489 = vmatprep.subr.mxu0 0.0
    %3490 = vmatpush2.msra.mxu0 0.0
    %3491 = vmatprep.subr.mxu0 0.0
    %3492 = vmatpush2.msra.mxu0 0.0
    %3493 = vmatprep.subr.mxu0 0.0
    %3494 = vmatpush2.msra.mxu0 0.0
    %3495 = vmatprep.subr.mxu0 0.0
    %3496 = vmatpush2.msra.mxu0 0.0
    %3497 = vmatprep.subr.mxu0 0.0
    %3498 = vmatpush2.msra.mxu0 0.0
    %3499 = vmatprep.subr.mxu0 0.0
    %3500 = vmatpush2.msra.mxu0 0.0
    %3501 = vmatprep.subr.mxu0 0.0
    %3502 = vmatpush2.msra.mxu0 0.0
    %3503 = vmatprep.mubr.f32.mxu0 0.0
    %3504 = vmatmul.mubr.f32.gmra.mxu0 %v3437
    %v3505 = vpop.f32.mrf.mxu0
    %v3506 = vadd.f32 0.0, %v3505
    %v3507 = vpop.f32.mrf.mxu0
    %3508 = vdwg.mxu0
    %s3509 = scalar_lea.vmem %s6, 48
    %v3510 = vld [vmem:[%s3509] sm:$0xff]
    %v3512 = vsel %vm238, %v3430, 0
    %v3515 = vsel %vm238, %v3506, 0
    %3517 = vmatprep.subr.mxu0 0.0
    %3518 = vmatpush1.msra.mxu0 0.0
    %3519 = vmatprep.subr.mxu0 0.0
    %3520 = vmatpush1.msra.mxu0 0.0
    %3521 = vmatprep.subr.mxu0 0.0
    %3522 = vmatpush1.msra.mxu0 0.0
    %3523 = vmatprep.subr.mxu0 0.0
    %3524 = vmatpush1.msra.mxu0 0.0
    %3525 = vmatprep.subr.mxu0 0.0
    %3526 = vmatpush1.msra.mxu0 0.0
    %3527 = vmatprep.subr.mxu0 0.0
    %3528 = vmatpush1.msra.mxu0 0.0
    %3529 = vmatprep.subr.mxu0 0.0
    %3530 = vmatpush1.msra.mxu0 0.0
    %3531 = vmatprep.subr.mxu0 0.0
    %3532 = vmatpush1.msra.mxu0 0.0
    %3533 = vmatprep.subr.mxu0 0.0
    %3534 = vmatpush1.msra.mxu0 0.0
    %3535 = vmatprep.subr.mxu0 0.0
    %3536 = vmatpush1.msra.mxu0 0.0
    %3537 = vmatprep.subr.mxu0 0.0
    %3538 = vmatpush1.msra.mxu0 0.0
    %3539 = vmatprep.subr.mxu0 0.0
    %3540 = vmatpush1.msra.mxu0 0.0
    %3541 = vmatprep.subr.mxu0 0.0
    %3542 = vmatpush1.msra.mxu0 0.0
    %3543 = vmatprep.subr.mxu0 0.0
    %3544 = vmatpush1.msra.mxu0 0.0
    %3545 = vmatprep.subr.mxu0 0.0
    %3546 = vmatpush1.msra.mxu0 0.0
    %3547 = vmatprep.subr.mxu0 0.0
    %3548 = vmatpush1.msra.mxu0 %v3510
    %3549 = vmatprep.subr.mxu0 0.0
    %3550 = vmatpush2.msra.mxu0 0.0
    %3551 = vmatprep.subr.mxu0 0.0
    %3552 = vmatpush2.msra.mxu0 0.0
    %3553 = vmatprep.subr.mxu0 0.0
    %3554 = vmatpush2.msra.mxu0 0.0
    %3555 = vmatprep.subr.mxu0 0.0
    %3556 = vmatpush2.msra.mxu0 0.0
    %3557 = vmatprep.subr.mxu0 0.0
    %3558 = vmatpush2.msra.mxu0 0.0
    %3559 = vmatprep.subr.mxu0 0.0
    %3560 = vmatpush2.msra.mxu0 0.0
    %3561 = vmatprep.subr.mxu0 0.0
    %3562 = vmatpush2.msra.mxu0 0.0
    %3563 = vmatprep.subr.mxu0 0.0
    %3564 = vmatpush2.msra.mxu0 0.0
    %3565 = vmatprep.subr.mxu0 0.0
    %3566 = vmatpush2.msra.mxu0 0.0
    %3567 = vmatprep.subr.mxu0 0.0
    %3568 = vmatpush2.msra.mxu0 0.0
    %3569 = vmatprep.subr.mxu0 0.0
    %3570 = vmatpush2.msra.mxu0 0.0
    %3571 = vmatprep.subr.mxu0 0.0
    %3572 = vmatpush2.msra.mxu0 0.0
    %3573 = vmatprep.subr.mxu0 0.0
    %3574 = vmatpush2.msra.mxu0 0.0
    %3575 = vmatprep.subr.mxu0 0.0
    %3576 = vmatpush2.msra.mxu0 0.0
    %3577 = vmatprep.subr.mxu0 0.0
    %3578 = vmatpush2.msra.mxu0 0.0
    %3579 = vmatprep.subr.mxu0 0.0
    %3580 = vmatpush2.msra.mxu0 0.0
    %3581 = vmatprep.mubr.f32.mxu0 0.0
    %3582 = vmatmul.mubr.f32.gmra.mxu0 %v3512
    %v3583 = vpop.f32.mrf.mxu0
    %v3584 = vadd.f32 0.0, %v3583
    %v3585 = vpop.f32.mrf.mxu0
    %3586 = vmatprep.mubr.f32.mxu0 0.0
    %3587 = vmatmul.mubr.f32.gmra.mxu0 %v3515
    %v3588 = vpop.f32.mrf.mxu0
    %v3589 = vadd.f32 0.0, %v3588
    %v3590 = vpop.f32.mrf.mxu0
    %3591 = vdwg.mxu0
    %v3592 = vadd.f32 %v3167, %v3584
    %v3593 = vadd.f32 %v3172, %v3589
    %3594 = vrot.lane.b32.xlu0 %v2335, 104
    %v3595 = vpop.permute.xlu0 %3594
    %3596 = vrot.lane.b32.xlu0 %v2335, 72
    %v3597 = vpop.permute.xlu0 %3596
    %v3598 = vsel %vm238, %v3595, 0
    %v3600 = vsel %vm238, %v3597, 0
    %3602 = vmatprep.subr.mxu0 0.0
    %3603 = vmatpush1.xpose.msra.mxu0 0.0
    %3604 = vmatprep.subr.mxu0 0.0
    %3605 = vmatpush1.xpose.msra.mxu0 0.0
    %3606 = vmatprep.subr.mxu0 0.0
    %3607 = vmatpush1.xpose.msra.mxu0 0.0
    %3608 = vmatprep.subr.mxu0 0.0
    %3609 = vmatpush1.xpose.msra.mxu0 0.0
    %3610 = vmatprep.subr.mxu0 0.0
    %3611 = vmatpush1.xpose.msra.mxu0 0.0
    %3612 = vmatprep.subr.mxu0 0.0
    %3613 = vmatpush1.xpose.msra.mxu0 0.0
    %3614 = vmatprep.subr.mxu0 0.0
    %3615 = vmatpush1.xpose.msra.mxu0 0.0
    %3616 = vmatprep.subr.mxu0 0.0
    %3617 = vmatpush1.xpose.msra.mxu0 0.0
    %3618 = vmatprep.subr.mxu0 0.0
    %3619 = vmatpush1.xpose.msra.mxu0 0.0
    %3620 = vmatprep.subr.mxu0 0.0
    %3621 = vmatpush1.xpose.msra.mxu0 0.0
    %3622 = vmatprep.subr.mxu0 0.0
    %3623 = vmatpush1.xpose.msra.mxu0 0.0
    %3624 = vmatprep.subr.mxu0 0.0
    %3625 = vmatpush1.xpose.msra.mxu0 0.0
    %3626 = vmatprep.subr.mxu0 0.0
    %3627 = vmatpush1.xpose.msra.mxu0 0.0
    %3628 = vmatprep.subr.mxu0 0.0
    %3629 = vmatpush1.xpose.msra.mxu0 0.0
    %3630 = vmatprep.subr.mxu0 0.0
    %3631 = vmatpush1.xpose.msra.mxu0 0.0
    %3632 = vmatprep.subr.mxu0 0.0
    %3633 = vmatpush1.xpose.msra.mxu0 %v3600
    %3634 = vmatprep.subr.mxu0 0.0
    %3635 = vmatpush2.xpose.msra.mxu0 0.0
    %3636 = vmatprep.subr.mxu0 0.0
    %3637 = vmatpush2.xpose.msra.mxu0 0.0
    %3638 = vmatprep.subr.mxu0 0.0
    %3639 = vmatpush2.xpose.msra.mxu0 0.0
    %3640 = vmatprep.subr.mxu0 0.0
    %3641 = vmatpush2.xpose.msra.mxu0 0.0
    %3642 = vmatprep.subr.mxu0 0.0
    %3643 = vmatpush2.xpose.msra.mxu0 0.0
    %3644 = vmatprep.subr.mxu0 0.0
    %3645 = vmatpush2.xpose.msra.mxu0 0.0
    %3646 = vmatprep.subr.mxu0 0.0
    %3647 = vmatpush2.xpose.msra.mxu0 0.0
    %3648 = vmatprep.subr.mxu0 0.0
    %3649 = vmatpush2.xpose.msra.mxu0 0.0
    %3650 = vmatprep.subr.mxu0 0.0
    %3651 = vmatpush2.xpose.msra.mxu0 0.0
    %3652 = vmatprep.subr.mxu0 0.0
    %3653 = vmatpush2.xpose.msra.mxu0 0.0
    %3654 = vmatprep.subr.mxu0 0.0
    %3655 = vmatpush2.xpose.msra.mxu0 0.0
    %3656 = vmatprep.subr.mxu0 0.0
    %3657 = vmatpush2.xpose.msra.mxu0 0.0
    %3658 = vmatprep.subr.mxu0 0.0
    %3659 = vmatpush2.xpose.msra.mxu0 0.0
    %3660 = vmatprep.subr.mxu0 0.0
    %3661 = vmatpush2.xpose.msra.mxu0 0.0
    %3662 = vmatprep.subr.mxu0 0.0
    %3663 = vmatpush2.xpose.msra.mxu0 0.0
    %3664 = vmatprep.subr.mxu0 0.0
    %3665 = vmatpush2.xpose.msra.mxu0 0.0
    %3666 = vmatprep.mubr.f32.mxu0 0.0
    %3667 = vmatmul.mubr.f32.gmra.mxu0 %v3598
    %v3668 = vpop.f32.mrf.mxu0
    %v3669 = vadd.f32 0.0, %v3668
    %v3670 = vpop.f32.mrf.mxu0
    %3671 = vdwg.mxu0
    %3672 = vrot.lane.b32.xlu0 %v2340, 104
    %v3673 = vpop.permute.xlu0 %3672
    %3674 = vrot.lane.b32.xlu0 %v2340, 72
    %v3675 = vpop.permute.xlu0 %3674
    %v3676 = vsel %vm238, %v3673, 0
    %v3678 = vsel %vm238, %v3675, 0
    %3680 = vmatprep.subr.mxu0 0.0
    %3681 = vmatpush1.xpose.msra.mxu0 0.0
    %3682 = vmatprep.subr.mxu0 0.0
    %3683 = vmatpush1.xpose.msra.mxu0 0.0
    %3684 = vmatprep.subr.mxu0 0.0
    %3685 = vmatpush1.xpose.msra.mxu0 0.0
    %3686 = vmatprep.subr.mxu0 0.0
    %3687 = vmatpush1.xpose.msra.mxu0 0.0
    %3688 = vmatprep.subr.mxu0 0.0
    %3689 = vmatpush1.xpose.msra.mxu0 0.0
    %3690 = vmatprep.subr.mxu0 0.0
    %3691 = vmatpush1.xpose.msra.mxu0 0.0
    %3692 = vmatprep.subr.mxu0 0.0
    %3693 = vmatpush1.xpose.msra.mxu0 0.0
    %3694 = vmatprep.subr.mxu0 0.0
    %3695 = vmatpush1.xpose.msra.mxu0 0.0
    %3696 = vmatprep.subr.mxu0 0.0
    %3697 = vmatpush1.xpose.msra.mxu0 0.0
    %3698 = vmatprep.subr.mxu0 0.0
    %3699 = vmatpush1.xpose.msra.mxu0 0.0
    %3700 = vmatprep.subr.mxu0 0.0
    %3701 = vmatpush1.xpose.msra.mxu0 0.0
    %3702 = vmatprep.subr.mxu0 0.0
    %3703 = vmatpush1.xpose.msra.mxu0 0.0
    %3704 = vmatprep.subr.mxu0 0.0
    %3705 = vmatpush1.xpose.msra.mxu0 0.0
    %3706 = vmatprep.subr.mxu0 0.0
    %3707 = vmatpush1.xpose.msra.mxu0 0.0
    %3708 = vmatprep.subr.mxu0 0.0
    %3709 = vmatpush1.xpose.msra.mxu0 0.0
    %3710 = vmatprep.subr.mxu0 0.0
    %3711 = vmatpush1.xpose.msra.mxu0 %v3678
    %3712 = vmatprep.subr.mxu0 0.0
    %3713 = vmatpush2.xpose.msra.mxu0 0.0
    %3714 = vmatprep.subr.mxu0 0.0
    %3715 = vmatpush2.xpose.msra.mxu0 0.0
    %3716 = vmatprep.subr.mxu0 0.0
    %3717 = vmatpush2.xpose.msra.mxu0 0.0
    %3718 = vmatprep.subr.mxu0 0.0
    %3719 = vmatpush2.xpose.msra.mxu0 0.0
    %3720 = vmatprep.subr.mxu0 0.0
    %3721 = vmatpush2.xpose.msra.mxu0 0.0
    %3722 = vmatprep.subr.mxu0 0.0
    %3723 = vmatpush2.xpose.msra.mxu0 0.0
    %3724 = vmatprep.subr.mxu0 0.0
    %3725 = vmatpush2.xpose.msra.mxu0 0.0
    %3726 = vmatprep.subr.mxu0 0.0
    %3727 = vmatpush2.xpose.msra.mxu0 0.0
    %3728 = vmatprep.subr.mxu0 0.0
    %3729 = vmatpush2.xpose.msra.mxu0 0.0
    %3730 = vmatprep.subr.mxu0 0.0
    %3731 = vmatpush2.xpose.msra.mxu0 0.0
    %3732 = vmatprep.subr.mxu0 0.0
    %3733 = vmatpush2.xpose.msra.mxu0 0.0
    %3734 = vmatprep.subr.mxu0 0.0
    %3735 = vmatpush2.xpose.msra.mxu0 0.0
    %3736 = vmatprep.subr.mxu0 0.0
    %3737 = vmatpush2.xpose.msra.mxu0 0.0
    %3738 = vmatprep.subr.mxu0 0.0
    %3739 = vmatpush2.xpose.msra.mxu0 0.0
    %3740 = vmatprep.subr.mxu0 0.0
    %3741 = vmatpush2.xpose.msra.mxu0 0.0
    %3742 = vmatprep.subr.mxu0 0.0
    %3743 = vmatpush2.xpose.msra.mxu0 0.0
    %3744 = vmatprep.mubr.f32.mxu0 0.0
    %3745 = vmatmul.mubr.f32.gmra.mxu0 %v3676
    %v3746 = vpop.f32.mrf.mxu0
    %v3747 = vadd.f32 0.0, %v3746
    %v3748 = vpop.f32.mrf.mxu0
    %3749 = vdwg.mxu0
    %v3750 = vmul.f32 %v3669, 0.35355338
    %v3751 = vmul.f32 %v3747, 0.35355338
    %v3752 = vadd.f32 %v3750, %v136
    %v3753 = vadd.f32 %v3751, %v140
    %v3754 = vsel %vm238, %v3752, -inf
    %3755 = vmax.xlane.f32.xlu0 %v3754
    %v3756 = vpop.xlane.xlu0 %3755
    %v3757 = vsel %vm238, %v3753, -inf
    %3758 = vmax.xlane.f32.xlu0 %v3757
    %v3759 = vpop.xlane.xlu0 %3758
    %v3760 = vsub.f32 %v3752, %v3756
    %v3761 = vsub.f32 %v3753, %v3759
    %v3762 = vmul.f32 %v3760, 1.442695
    %v3763 = vpow.pop %v3762
    %v3764 = vmul.f32 %v3761, 1.442695
    %v3765 = vpow.pop %v3764
    %v3766 = vsel %vm238, %v3763, 0.0
    %3767 = vadd.xlane.f32.xlu0 %v3766
    %v3768 = vpop.xlane.xlu0 %3767
    %v3769 = vsel %vm238, %v3765, 0.0
    %3770 = vadd.xlane.f32.xlu0 %v3769
    %v3771 = vpop.xlane.xlu0 %3770
    %v3772 = vrcp.pop %v3768
    %v3773 = vrcp.pop %v3771
    %v3774 = vmul.f32 %v3763, %v3772
    %v3775 = vmul.f32 %v3765, %v3773
    %3776 = vrot.lane.b32.xlu0 %v2335, 40
    %v3777 = vpop.permute.xlu0 %3776
    %v3780 = vsel %vm238, %v3774, 0
    %3782 = vmatprep.subr.mxu0 0.0
    %3783 = vmatpush1.msra.mxu0 0.0
    %3784 = vmatprep.subr.mxu0 0.0
    %3785 = vmatpush1.msra.mxu0 0.0
    %3786 = vmatprep.subr.mxu0 0.0
    %3787 = vmatpush1.msra.mxu0 0.0
    %3788 = vmatprep.subr.mxu0 0.0
    %3789 = vmatpush1.msra.mxu0 0.0
    %3790 = vmatprep.subr.mxu0 0.0
    %3791 = vmatpush1.msra.mxu0 0.0
    %3792 = vmatprep.subr.mxu0 0.0
    %3793 = vmatpush1.msra.mxu0 0.0
    %3794 = vmatprep.subr.mxu0 0.0
    %3795 = vmatpush1.msra.mxu0 0.0
    %3796 = vmatprep.subr.mxu0 0.0
    %3797 = vmatpush1.msra.mxu0 0.0
    %3798 = vmatprep.subr.mxu0 0.0
    %3799 = vmatpush1.msra.mxu0 0.0
    %3800 = vmatprep.subr.mxu0 0.0
    %3801 = vmatpush1.msra.mxu0 0.0
    %3802 = vmatprep.subr.mxu0 0.0
    %3803 = vmatpush1.msra.mxu0 0.0
    %3804 = vmatprep.subr.mxu0 0.0
    %3805 = vmatpush1.msra.mxu0 0.0
    %3806 = vmatprep.subr.mxu0 0.0
    %3807 = vmatpush1.msra.mxu0 0.0
    %3808 = vmatprep.subr.mxu0 0.0
    %3809 = vmatpush1.msra.mxu0 0.0
    %3810 = vmatprep.subr.mxu0 0.0
    %3811 = vmatpush1.msra.mxu0 0.0
    %3812 = vmatprep.subr.mxu0 0.0
    %3813 = vmatpush1.msra.mxu0 %v3777
    %3814 = vmatprep.subr.mxu0 0.0
    %3815 = vmatpush2.msra.mxu0 0.0
    %3816 = vmatprep.subr.mxu0 0.0
    %3817 = vmatpush2.msra.mxu0 0.0
    %3818 = vmatprep.subr.mxu0 0.0
    %3819 = vmatpush2.msra.mxu0 0.0
    %3820 = vmatprep.subr.mxu0 0.0
    %3821 = vmatpush2.msra.mxu0 0.0
    %3822 = vmatprep.subr.mxu0 0.0
    %3823 = vmatpush2.msra.mxu0 0.0
    %3824 = vmatprep.subr.mxu0 0.0
    %3825 = vmatpush2.msra.mxu0 0.0
    %3826 = vmatprep.subr.mxu0 0.0
    %3827 = vmatpush2.msra.mxu0 0.0
    %3828 = vmatprep.subr.mxu0 0.0
    %3829 = vmatpush2.msra.mxu0 0.0
    %3830 = vmatprep.subr.mxu0 0.0
    %3831 = vmatpush2.msra.mxu0 0.0
    %3832 = vmatprep.subr.mxu0 0.0
    %3833 = vmatpush2.msra.mxu0 0.0
    %3834 = vmatprep.subr.mxu0 0.0
    %3835 = vmatpush2.msra.mxu0 0.0
    %3836 = vmatprep.subr.mxu0 0.0
    %3837 = vmatpush2.msra.mxu0 0.0
    %3838 = vmatprep.subr.mxu0 0.0
    %3839 = vmatpush2.msra.mxu0 0.0
    %3840 = vmatprep.subr.mxu0 0.0
    %3841 = vmatpush2.msra.mxu0 0.0
    %3842 = vmatprep.subr.mxu0 0.0
    %3843 = vmatpush2.msra.mxu0 0.0
    %3844 = vmatprep.subr.mxu0 0.0
    %3845 = vmatpush2.msra.mxu0 0.0
    %3846 = vmatprep.mubr.f32.mxu0 0.0
    %3847 = vmatmul.mubr.f32.gmra.mxu0 %v3780
    %v3848 = vpop.f32.mrf.mxu0
    %v3849 = vadd.f32 0.0, %v3848
    %v3850 = vpop.f32.mrf.mxu0
    %3851 = vdwg.mxu0
    %3852 = vrot.lane.b32.xlu0 %v2340, 40
    %v3853 = vpop.permute.xlu0 %3852
    %v3856 = vsel %vm238, %v3775, 0
    %3858 = vmatprep.subr.mxu0 0.0
    %3859 = vmatpush1.msra.mxu0 0.0
    %3860 = vmatprep.subr.mxu0 0.0
    %3861 = vmatpush1.msra.mxu0 0.0
    %3862 = vmatprep.subr.mxu0 0.0
    %3863 = vmatpush1.msra.mxu0 0.0
    %3864 = vmatprep.subr.mxu0 0.0
    %3865 = vmatpush1.msra.mxu0 0.0
    %3866 = vmatprep.subr.mxu0 0.0
    %3867 = vmatpush1.msra.mxu0 0.0
    %3868 = vmatprep.subr.mxu0 0.0
    %3869 = vmatpush1.msra.mxu0 0.0
    %3870 = vmatprep.subr.mxu0 0.0
    %3871 = vmatpush1.msra.mxu0 0.0
    %3872 = vmatprep.subr.mxu0 0.0
    %3873 = vmatpush1.msra.mxu0 0.0
    %3874 = vmatprep.subr.mxu0 0.0
    %3875 = vmatpush1.msra.mxu0 0.0
    %3876 = vmatprep.subr.mxu0 0.0
    %3877 = vmatpush1.msra.mxu0 0.0
    %3878 = vmatprep.subr.mxu0 0.0
    %3879 = vmatpush1.msra.mxu0 0.0
    %3880 = vmatprep.subr.mxu0 0.0
    %3881 = vmatpush1.msra.mxu0 0.0
    %3882 = vmatprep.subr.mxu0 0.0
    %3883 = vmatpush1.msra.mxu0 0.0
    %3884 = vmatprep.subr.mxu0 0.0
    %3885 = vmatpush1.msra.mxu0 0.0
    %3886 = vmatprep.subr.mxu0 0.0
    %3887 = vmatpush1.msra.mxu0 0.0
    %3888 = vmatprep.subr.mxu0 0.0
    %3889 = vmatpush1.msra.mxu0 %v3853
    %3890 = vmatprep.subr.mxu0 0.0
    %3891 = vmatpush2.msra.mxu0 0.0
    %3892 = vmatprep.subr.mxu0 0.0
    %3893 = vmatpush2.msra.mxu0 0.0
    %3894 = vmatprep.subr.mxu0 0.0
    %3895 = vmatpush2.msra.mxu0 0.0
    %3896 = vmatprep.subr.mxu0 0.0
    %3897 = vmatpush2.msra.mxu0 0.0
    %3898 = vmatprep.subr.mxu0 0.0
    %3899 = vmatpush2.msra.mxu0 0.0
    %3900 = vmatprep.subr.mxu0 0.0
    %3901 = vmatpush2.msra.mxu0 0.0
    %3902 = vmatprep.subr.mxu0 0.0
    %3903 = vmatpush2.msra.mxu0 0.0
    %3904 = vmatprep.subr.mxu0 0.0
    %3905 = vmatpush2.msra.mxu0 0.0
    %3906 = vmatprep.subr.mxu0 0.0
    %3907 = vmatpush2.msra.mxu0 0.0
    %3908 = vmatprep.subr.mxu0 0.0
    %3909 = vmatpush2.msra.mxu0 0.0
    %3910 = vmatprep.subr.mxu0 0.0
    %3911 = vmatpush2.msra.mxu0 0.0
    %3912 = vmatprep.subr.mxu0 0.0
    %3913 = vmatpush2.msra.mxu0 0.0
    %3914 = vmatprep.subr.mxu0 0.0
    %3915 = vmatpush2.msra.mxu0 0.0
    %3916 = vmatprep.subr.mxu0 0.0
    %3917 = vmatpush2.msra.mxu0 0.0
    %3918 = vmatprep.subr.mxu0 0.0
    %3919 = vmatpush2.msra.mxu0 0.0
    %3920 = vmatprep.subr.mxu0 0.0
    %3921 = vmatpush2.msra.mxu0 0.0
    %3922 = vmatprep.mubr.f32.mxu0 0.0
    %3923 = vmatmul.mubr.f32.gmra.mxu0 %v3856
    %v3924 = vpop.f32.mrf.mxu0
    %v3925 = vadd.f32 0.0, %v3924
    %v3926 = vpop.f32.mrf.mxu0
    %3927 = vdwg.mxu0
    %s3928 = scalar_lea.vmem %s6, 56
    %v3929 = vld [vmem:[%s3928] sm:$0xff]
    %v3931 = vsel %vm238, %v3849, 0
    %v3934 = vsel %vm238, %v3925, 0
    %3936 = vmatprep.subr.mxu0 0.0
    %3937 = vmatpush1.msra.mxu0 0.0
    %3938 = vmatprep.subr.mxu0 0.0
    %3939 = vmatpush1.msra.mxu0 0.0
    %3940 = vmatprep.subr.mxu0 0.0
    %3941 = vmatpush1.msra.mxu0 0.0
    %3942 = vmatprep.subr.mxu0 0.0
    %3943 = vmatpush1.msra.mxu0 0.0
    %3944 = vmatprep.subr.mxu0 0.0
    %3945 = vmatpush1.msra.mxu0 0.0
    %3946 = vmatprep.subr.mxu0 0.0
    %3947 = vmatpush1.msra.mxu0 0.0
    %3948 = vmatprep.subr.mxu0 0.0
    %3949 = vmatpush1.msra.mxu0 0.0
    %3950 = vmatprep.subr.mxu0 0.0
    %3951 = vmatpush1.msra.mxu0 0.0
    %3952 = vmatprep.subr.mxu0 0.0
    %3953 = vmatpush1.msra.mxu0 0.0
    %3954 = vmatprep.subr.mxu0 0.0
    %3955 = vmatpush1.msra.mxu0 0.0
    %3956 = vmatprep.subr.mxu0 0.0
    %3957 = vmatpush1.msra.mxu0 0.0
    %3958 = vmatprep.subr.mxu0 0.0
    %3959 = vmatpush1.msra.mxu0 0.0
    %3960 = vmatprep.subr.mxu0 0.0
    %3961 = vmatpush1.msra.mxu0 0.0
    %3962 = vmatprep.subr.mxu0 0.0
    %3963 = vmatpush1.msra.mxu0 0.0
    %3964 = vmatprep.subr.mxu0 0.0
    %3965 = vmatpush1.msra.mxu0 0.0
    %3966 = vmatprep.subr.mxu0 0.0
    %3967 = vmatpush1.msra.mxu0 %v3929
    %3968 = vmatprep.subr.mxu0 0.0
    %3969 = vmatpush2.msra.mxu0 0.0
    %3970 = vmatprep.subr.mxu0 0.0
    %3971 = vmatpush2.msra.mxu0 0.0
    %3972 = vmatprep.subr.mxu0 0.0
    %3973 = vmatpush2.msra.mxu0 0.0
    %3974 = vmatprep.subr.mxu0 0.0
    %3975 = vmatpush2.msra.mxu0 0.0
    %3976 = vmatprep.subr.mxu0 0.0
    %3977 = vmatpush2.msra.mxu0 0.0
    %3978 = vmatprep.subr.mxu0 0.0
    %3979 = vmatpush2.msra.mxu0 0.0
    %3980 = vmatprep.subr.mxu0 0.0
    %3981 = vmatpush2.msra.mxu0 0.0
    %3982 = vmatprep.subr.mxu0 0.0
    %3983 = vmatpush2.msra.mxu0 0.0
    %3984 = vmatprep.subr.mxu0 0.0
    %3985 = vmatpush2.msra.mxu0 0.0
    %3986 = vmatprep.subr.mxu0 0.0
    %3987 = vmatpush2.msra.mxu0 0.0
    %3988 = vmatprep.subr.mxu0 0.0
    %3989 = vmatpush2.msra.mxu0 0.0
    %3990 = vmatprep.subr.mxu0 0.0
    %3991 = vmatpush2.msra.mxu0 0.0
    %3992 = vmatprep.subr.mxu0 0.0
    %3993 = vmatpush2.msra.mxu0 0.0
    %3994 = vmatprep.subr.mxu0 0.0
    %3995 = vmatpush2.msra.mxu0 0.0
    %3996 = vmatprep.subr.mxu0 0.0
    %3997 = vmatpush2.msra.mxu0 0.0
    %3998 = vmatprep.subr.mxu0 0.0
    %3999 = vmatpush2.msra.mxu0 0.0
    %4000 = vmatprep.mubr.f32.mxu0 0.0
    %4001 = vmatmul.mubr.f32.gmra.mxu0 %v3931
    %v4002 = vpop.f32.mrf.mxu0
    %v4003 = vadd.f32 0.0, %v4002
    %v4004 = vpop.f32.mrf.mxu0
    %4005 = vmatprep.mubr.f32.mxu0 0.0
    %4006 = vmatmul.mubr.f32.gmra.mxu0 %v3934
    %v4007 = vpop.f32.mrf.mxu0
    %v4008 = vadd.f32 0.0, %v4007
    %v4009 = vpop.f32.mrf.mxu0
    %4010 = vdwg.mxu0
    %v4011 = vadd.f32 %v3592, %v4003
    %v4012 = vadd.f32 %v3593, %v4008
    %s4013 = scalar_lea.vmem %s7, 1
    %v4014 = vld [vmem:[%s4013] sm:$0x1]
    %v4016 = vlaneseq
    %v4017 = vshrl.u32 %v4016, 7
    %v4018 = vsub.s32 0, %v4017
    %v4019 = vrot.slane %v4014, %v4018
    %v4021 = vadd.f32 %v4011, %v4019
    %v4022 = vadd.f32 %v4012, %v4019
    %v4023 = vadd.f32 %v4021, %v2247
    %v4024 = vadd.f32 %v4022, %v2248
    %s4025 = scalar_lea.vmem %s8, 1
    %v4026 = vld [vmem:[%s4025] sm:$0x1]
    %s4027 = scalar_lea.vmem %s9, 1
    %v4028 = vld [vmem:[%s4027] sm:$0x1]
    %v4029 = vsel %vm63, %v4023, 0.0
    %4030 = vadd.xlane.f32.xlu0 %v4029
    %v4031 = vpop.xlane.xlu0 %4030
    %v4032 = vsel %vm63, %v4024, 0.0
    %4033 = vadd.xlane.f32.xlu0 %v4032
    %v4034 = vpop.xlane.xlu0 %4033
    %v4035 = vmul.f32 %v4031, %v70
    %v4036 = vmul.f32 %v4034, %v70
    %v4037 = vsub.f32 %v4023, %v4035
    %v4038 = vsub.f32 %v4024, %v4036
    %v4039 = vmul.f32 %v4037, %v4037
    %v4040 = vmul.f32 %v4038, %v4038
    %v4041 = vsel %vm63, %v4039, 0.0
    %4042 = vadd.xlane.f32.xlu0 %v4041
    %v4043 = vpop.xlane.xlu0 %4042
    %v4044 = vsel %vm63, %v4040, 0.0
    %4045 = vadd.xlane.f32.xlu0 %v4044
    %v4046 = vpop.xlane.xlu0 %4045
    %v4047 = vmul.f32 %v4043, %v70
    %v4048 = vmul.f32 %v4046, %v70
    %v4049 = vadd.f32 %v4047, 1e-12
    %v4050 = vadd.f32 %v4048, 1e-12
    %v4051 = vrsqrt.pop %v4049
    %v4052 = vrsqrt.pop %v4050
    %v4053 = vmul.f32 %v4037, %v4051
    %v4054 = vmul.f32 %v4038, %v4052
    %v4056 = vlaneseq
    %v4057 = vshrl.u32 %v4056, 7
    %v4058 = vsub.s32 0, %v4057
    %v4059 = vrot.slane %v4026, %v4058
    %v4061 = vmul.f32 %v4053, %v4059
    %v4062 = vmul.f32 %v4054, %v4059
    %v4064 = vlaneseq
    %v4065 = vshrl.u32 %v4064, 7
    %v4066 = vsub.s32 0, %v4065
    %v4067 = vrot.slane %v4028, %v4066
    %v4069 = vadd.f32 %v4061, %v4067
    %v4070 = vadd.f32 %v4062, %v4067
    %s4071 = scalar_lea.vmem %s10, 32
    %v4072 = vld [vmem:[%s4071] sm:$0xff]
    %v4073 = vld [vmem:[%s4071 + $0x8] sm:$0xff]
    %v4074 = vld [vmem:[%s4071 + $0x10] sm:$0xff]
    %v4075 = vld [vmem:[%s4071 + $0x18] sm:$0xff]
    %s4076 = scalar_lea.vmem %s11, 1
    %v4077 = vld [vmem:[%s4076] sm:$0x1]
    %v4079 = vlaneseq
    %v4080 = vshrl.u32 %v4079, 7
    %v4081 = vsub.s32 0, %v4080
    %v4082 = vrot.slane %v4077, %v4081
    %v4085 = vsel %vm63, %v4069, 0
    %v4088 = vsel %vm63, %v4070, 0
    %4090 = vmatprep.subr.mxu0 0.0
    %4091 = vmatpush1.msra.mxu0 0.0
    %4092 = vmatprep.subr.mxu0 0.0
    %4093 = vmatpush1.msra.mxu0 0.0
    %4094 = vmatprep.subr.mxu0 0.0
    %4095 = vmatpush1.msra.mxu0 0.0
    %4096 = vmatprep.subr.mxu0 0.0
    %4097 = vmatpush1.msra.mxu0 0.0
    %4098 = vmatprep.subr.mxu0 0.0
    %4099 = vmatpush1.msra.mxu0 0.0
    %4100 = vmatprep.subr.mxu0 0.0
    %4101 = vmatpush1.msra.mxu0 0.0
    %4102 = vmatprep.subr.mxu0 0.0
    %4103 = vmatpush1.msra.mxu0 0.0
    %4104 = vmatprep.subr.mxu0 0.0
    %4105 = vmatpush1.msra.mxu0 0.0
    %4106 = vmatprep.subr.mxu0 0.0
    %4107 = vmatpush1.msra.mxu0 0.0
    %4108 = vmatprep.subr.mxu0 0.0
    %4109 = vmatpush1.msra.mxu0 0.0
    %4110 = vmatprep.subr.mxu0 0.0
    %4111 = vmatpush1.msra.mxu0 0.0
    %4112 = vmatprep.subr.mxu0 0.0
    %4113 = vmatpush1.msra.mxu0 0.0
    %4114 = vmatprep.subr.mxu0 0.0
    %4115 = vmatpush1.msra.mxu0 %v4075
    %4116 = vmatprep.subr.mxu0 0.0
    %4117 = vmatpush1.msra.mxu0 %v4074
    %4118 = vmatprep.subr.mxu0 0.0
    %4119 = vmatpush1.msra.mxu0 %v4073
    %4120 = vmatprep.subr.mxu0 0.0
    %4121 = vmatpush1.msra.mxu0 %v4072
    %4122 = vmatprep.subr.mxu0 0.0
    %4123 = vmatpush2.msra.mxu0 0.0
    %4124 = vmatprep.subr.mxu0 0.0
    %4125 = vmatpush2.msra.mxu0 0.0
    %4126 = vmatprep.subr.mxu0 0.0
    %4127 = vmatpush2.msra.mxu0 0.0
    %4128 = vmatprep.subr.mxu0 0.0
    %4129 = vmatpush2.msra.mxu0 0.0
    %4130 = vmatprep.subr.mxu0 0.0
    %4131 = vmatpush2.msra.mxu0 0.0
    %4132 = vmatprep.subr.mxu0 0.0
    %4133 = vmatpush2.msra.mxu0 0.0
    %4134 = vmatprep.subr.mxu0 0.0
    %4135 = vmatpush2.msra.mxu0 0.0
    %4136 = vmatprep.subr.mxu0 0.0
    %4137 = vmatpush2.msra.mxu0 0.0
    %4138 = vmatprep.subr.mxu0 0.0
    %4139 = vmatpush2.msra.mxu0 0.0
    %4140 = vmatprep.subr.mxu0 0.0
    %4141 = vmatpush2.msra.mxu0 0.0
    %4142 = vmatprep.subr.mxu0 0.0
    %4143 = vmatpush2.msra.mxu0 0.0
    %4144 = vmatprep.subr.mxu0 0.0
    %4145 = vmatpush2.msra.mxu0 0.0
    %4146 = vmatprep.subr.mxu0 0.0
    %4147 = vmatpush2.msra.mxu0 0.0
    %4148 = vmatprep.subr.mxu0 0.0
    %4149 = vmatpush2.msra.mxu0 0.0
    %4150 = vmatprep.subr.mxu0 0.0
    %4151 = vmatpush2.msra.mxu0 0.0
    %4152 = vmatprep.subr.mxu0 0.0
    %4153 = vmatpush2.msra.mxu0 0.0
    %4154 = vmatprep.mubr.f32.mxu0 0.0
    %4155 = vmatmul.mubr.f32.gmra.mxu0 %v4085
    %v4156 = vpop.f32.mrf.mxu0
    %v4157 = vadd.f32 %v4082, %v4156
    %v4158 = vpop.f32.mrf.mxu0
    %4159 = vmatprep.mubr.f32.mxu0 0.0
    %4160 = vmatmul.mubr.f32.gmra.mxu0 %v4088
    %v4161 = vpop.f32.mrf.mxu0
    %v4162 = vadd.f32 %v4082, %v4161
    %v4163 = vpop.f32.mrf.mxu0
    %4164 = vdwg.mxu0
    %v4165 = vmul.f32 %v4157, 0.5
    %v4166 = vmul.f32 %v4162, 0.5
    %v4167 = vmul.f32 %v4157, 0.70710677
    %v4168 = vmul.f32 %v4162, 0.70710677
    %v4169 = vand.u32 2147483647, %v4167
    %v4170 = vand.u32 2147483647, %v4168
    %v4171 = vmul.f32 %v4169, 0.3275911
    %v4172 = vmul.f32 %v4170, 0.3275911
    %v4173 = vadd.f32 %v4171, 1.0
    %v4174 = vadd.f32 %v4172, 1.0
    %v4175 = vrcp.pop %v4173
    %v4176 = vmul.f32 1.0, %v4175
    %v4177 = vrcp.pop %v4174
    %v4178 = vmul.f32 1.0, %v4177
    %v4179 = vmul.f32 %v4176, 1.0614054
    %v4180 = vmul.f32 %v4178, 1.0614054
    %v4181 = vadd.f32 %v4179, -1.4531521
    %v4182 = vadd.f32 %v4180, -1.4531521
    %v4183 = vmul.f32 %v4181, %v4176
    %v4184 = vmul.f32 %v4182, %v4178
    %v4185 = vadd.f32 %v4183, 1.4214138
    %v4186 = vadd.f32 %v4184, 1.4214138
    %v4187 = vmul.f32 %v4185, %v4176
    %v4188 = vmul.f32 %v4186, %v4178
    %v4189 = vadd.f32 %v4187, -0.28449672
    %v4190 = vadd.f32 %v4188, -0.28449672
    %v4191 = vmul.f32 %v4189, %v4176
    %v4192 = vmul.f32 %v4190, %v4178
    %v4193 = vadd.f32 %v4191, 0.2548296
    %v4194 = vadd.f32 %v4192, 0.2548296
    %v4195 = vmul.f32 %v4193, %v4176
    %v4196 = vmul.f32 %v4194, %v4178
    %v4197 = vsub.f32 0.0, %v4169
    %v4198 = vsub.f32 0.0, %v4170
    %v4199 = vmul.f32 %v4197, %v4169
    %v4200 = vmul.f32 %v4198, %v4170
    %v4201 = vmul.f32 %v4199, 1.442695
    %v4202 = vpow.pop %v4201
    %v4203 = vmul.f32 %v4200, 1.442695
    %v4204 = vpow.pop %v4203
    %v4205 = vmul.f32 %v4195, %v4202
    %v4206 = vmul.f32 %v4196, %v4204
    %v4207 = vsub.f32 1.0, %v4205
    %v4208 = vsub.f32 1.0, %v4206
    %vm4209 = vcmp.ge.f32.partialorder %v4167, 0.0
    %vm4210 = vcmp.ge.f32.partialorder %v4168, 0.0
    %v4211 = vsub.f32 0.0, %v4207
    %v4212 = vsub.f32 0.0, %v4208
    %v4213 = vsel %vm4209, %v4207, %v4211
    %v4214 = vsel %vm4210, %v4208, %v4212
    %v4215 = vadd.f32 %v4213, 1.0
    %v4216 = vadd.f32 %v4214, 1.0
    %v4217 = vmul.f32 %v4165, %v4215
    %v4218 = vmul.f32 %v4166, %v4216
    %s4219 = scalar_lea.vmem %s12, 64
    %v4220 = vld [vmem:[%s4219] sm:$0xff]
    %v4221 = vld [vmem:[%s4219 + $0x8] sm:$0xff]
    %v4222 = vld [vmem:[%s4219 + $0x10] sm:$0xff]
    %v4223 = vld [vmem:[%s4219 + $0x18] sm:$0xff]
    %v4224 = vld [vmem:[%s4219 + $0x20] sm:$0xff]
    %v4225 = vld [vmem:[%s4219 + $0x28] sm:$0xff]
    %v4226 = vld [vmem:[%s4219 + $0x30] sm:$0xff]
    %v4227 = vld [vmem:[%s4219 + $0x38] sm:$0xff]
    %s4228 = scalar_lea.vmem %s13, 1
    %v4229 = vld [vmem:[%s4228] sm:$0x1]
    %v4231 = vlaneseq
    %v4232 = vshrl.u32 %v4231, 7
    %v4233 = vsub.s32 0, %v4232
    %v4234 = vrot.slane %v4229, %v4233
    %v4237 = vsel %vm2121, %v4217, 0
    %v4240 = vsel %vm2121, %v4218, 0
    %4242 = vmatprep.subr.mxu0 0.0
    %4243 = vmatpush1.msra.mxu0 0.0
    %4244 = vmatprep.subr.mxu0 0.0
    %4245 = vmatpush1.msra.mxu0 0.0
    %4246 = vmatprep.subr.mxu0 0.0
    %4247 = vmatpush1.msra.mxu0 0.0
    %4248 = vmatprep.subr.mxu0 0.0
    %4249 = vmatpush1.msra.mxu0 0.0
    %4250 = vmatprep.subr.mxu0 0.0
    %4251 = vmatpush1.msra.mxu0 0.0
    %4252 = vmatprep.subr.mxu0 0.0
    %4253 = vmatpush1.msra.mxu0 0.0
    %4254 = vmatprep.subr.mxu0 0.0
    %4255 = vmatpush1.msra.mxu0 0.0
    %4256 = vmatprep.subr.mxu0 0.0
    %4257 = vmatpush1.msra.mxu0 0.0
    %4258 = vmatprep.subr.mxu0 0.0
    %4259 = vmatpush1.msra.mxu0 %v4227
    %4260 = vmatprep.subr.mxu0 0.0
    %4261 = vmatpush1.msra.mxu0 %v4226
    %4262 = vmatprep.subr.mxu0 0.0
    %4263 = vmatpush1.msra.mxu0 %v4225
    %4264 = vmatprep.subr.mxu0 0.0
    %4265 = vmatpush1.msra.mxu0 %v4224
    %4266 = vmatprep.subr.mxu0 0.0
    %4267 = vmatpush1.msra.mxu0 %v4223
    %4268 = vmatprep.subr.mxu0 0.0
    %4269 = vmatpush1.msra.mxu0 %v4222
    %4270 = vmatprep.subr.mxu0 0.0
    %4271 = vmatpush1.msra.mxu0 %v4221
    %4272 = vmatprep.subr.mxu0 0.0
    %4273 = vmatpush1.msra.mxu0 %v4220
    %4274 = vmatprep.subr.mxu0 0.0
    %4275 = vmatpush2.msra.mxu0 0.0
    %4276 = vmatprep.subr.mxu0 0.0
    %4277 = vmatpush2.msra.mxu0 0.0
    %4278 = vmatprep.subr.mxu0 0.0
    %4279 = vmatpush2.msra.mxu0 0.0
    %4280 = vmatprep.subr.mxu0 0.0
    %4281 = vmatpush2.msra.mxu0 0.0
    %4282 = vmatprep.subr.mxu0 0.0
    %4283 = vmatpush2.msra.mxu0 0.0
    %4284 = vmatprep.subr.mxu0 0.0
    %4285 = vmatpush2.msra.mxu0 0.0
    %4286 = vmatprep.subr.mxu0 0.0
    %4287 = vmatpush2.msra.mxu0 0.0
    %4288 = vmatprep.subr.mxu0 0.0
    %4289 = vmatpush2.msra.mxu0 0.0
    %4290 = vmatprep.subr.mxu0 0.0
    %4291 = vmatpush2.msra.mxu0 0.0
    %4292 = vmatprep.subr.mxu0 0.0
    %4293 = vmatpush2.msra.mxu0 0.0
    %4294 = vmatprep.subr.mxu0 0.0
    %4295 = vmatpush2.msra.mxu0 0.0
    %4296 = vmatprep.subr.mxu0 0.0
    %4297 = vmatpush2.msra.mxu0 0.0
    %4298 = vmatprep.subr.mxu0 0.0
    %4299 = vmatpush2.msra.mxu0 0.0
    %4300 = vmatprep.subr.mxu0 0.0
    %4301 = vmatpush2.msra.mxu0 0.0
    %4302 = vmatprep.subr.mxu0 0.0
    %4303 = vmatpush2.msra.mxu0 0.0
    %4304 = vmatprep.subr.mxu0 0.0
    %4305 = vmatpush2.msra.mxu0 0.0
    %4306 = vmatprep.mubr.f32.mxu0 0.0
    %4307 = vmatmul.mubr.f32.gmra.mxu0 %v4237
    %v4308 = vpop.f32.mrf.mxu0
    %v4309 = vadd.f32 %v4234, %v4308
    %v4310 = vpop.f32.mrf.mxu0
    %4311 = vmatprep.mubr.f32.mxu0 0.0
    %4312 = vmatmul.mubr.f32.gmra.mxu0 %v4240
    %v4313 = vpop.f32.mrf.mxu0
    %v4314 = vadd.f32 %v4234, %v4313
    %v4315 = vpop.f32.mrf.mxu0
    %4316 = vdwg.mxu0
    %v4317 = vadd.f32 %v4309, %v4069
    %v4318 = vadd.f32 %v4314, %v4070
    %s4319 = scalar_lea.vmem %s14, 1
    %v4320 = vld [vmem:[%s4319] sm:$0x1]
    %s4321 = scalar_lea.vmem %s15, 1
    %v4322 = vld [vmem:[%s4321] sm:$0x1]
    %v4323 = vsel %vm63, %v4317, 0.0
    %4324 = vadd.xlane.f32.xlu0 %v4323
    %v4325 = vpop.xlane.xlu0 %4324
    %v4326 = vsel %vm63, %v4318, 0.0
    %4327 = vadd.xlane.f32.xlu0 %v4326
    %v4328 = vpop.xlane.xlu0 %4327
    %v4329 = vmul.f32 %v4325, %v70
    %v4330 = vmul.f32 %v4328, %v70
    %v4331 = vsub.f32 %v4317, %v4329
    %v4332 = vsub.f32 %v4318, %v4330
    %v4333 = vmul.f32 %v4331, %v4331
    %v4334 = vmul.f32 %v4332, %v4332
    %v4335 = vsel %vm63, %v4333, 0.0
    %4336 = vadd.xlane.f32.xlu0 %v4335
    %v4337 = vpop.xlane.xlu0 %4336
    %v4338 = vsel %vm63, %v4334, 0.0
    %4339 = vadd.xlane.f32.xlu0 %v4338
    %v4340 = vpop.xlane.xlu0 %4339
    %v4341 = vmul.f32 %v4337, %v70
    %v4342 = vmul.f32 %v4340, %v70
    %v4343 = vadd.f32 %v4341, 1e-12
    %v4344 = vadd.f32 %v4342, 1e-12
    %v4345 = vrsqrt.pop %v4343
    %v4346 = vrsqrt.pop %v4344
    %v4347 = vmul.f32 %v4331, %v4345
    %v4348 = vmul.f32 %v4332, %v4346
    %v4350 = vlaneseq
    %v4351 = vshrl.u32 %v4350, 7
    %v4352 = vsub.s32 0, %v4351
    %v4353 = vrot.slane %v4320, %v4352
    %v4355 = vmul.f32 %v4347, %v4353
    %v4356 = vmul.f32 %v4348, %v4353
    %v4358 = vlaneseq
    %v4359 = vshrl.u32 %v4358, 7
    %v4360 = vsub.s32 0, %v4359
    %v4361 = vrot.slane %v4322, %v4360
    %v4363 = vadd.f32 %v4355, %v4361
    %v4364 = vadd.f32 %v4356, %v4361
    %4365 = vst.msk [vmem:[#allocation2] sm:$0xff] %vm63, %v4363
    %4366 = vst.msk [vmem:[#allocation2 + $0x8] sm:$0xff] %vm63, %v4364
    %v4367 = vld [vmem:[%s16] sm:$0xff]
    %v4368 = vld [vmem:[%s16 + $0x8] sm:$0xff]
    %v4369 = vld [vmem:[%s16 + $0x10] sm:$0xff]
    %v4370 = vld [vmem:[%s16 + $0x18] sm:$0xff]
    %v4372 = vsel %vm63, %v4363, 0
    %v4375 = vsel %vm63, %v4364, 0
    %4377 = vmatprep.subr.mxu0 0.0
    %4378 = vmatpush1.msra.mxu0 0.0
    %4379 = vmatprep.subr.mxu0 0.0
    %4380 = vmatpush1.msra.mxu0 0.0
    %4381 = vmatprep.subr.mxu0 0.0
    %4382 = vmatpush1.msra.mxu0 0.0
    %4383 = vmatprep.subr.mxu0 0.0
    %4384 = vmatpush1.msra.mxu0 0.0
    %4385 = vmatprep.subr.mxu0 0.0
    %4386 = vmatpush1.msra.mxu0 0.0
    %4387 = vmatprep.subr.mxu0 0.0
    %4388 = vmatpush1.msra.mxu0 0.0
    %4389 = vmatprep.subr.mxu0 0.0
    %4390 = vmatpush1.msra.mxu0 0.0
    %4391 = vmatprep.subr.mxu0 0.0
    %4392 = vmatpush1.msra.mxu0 0.0
    %4393 = vmatprep.subr.mxu0 0.0
    %4394 = vmatpush1.msra.mxu0 0.0
    %4395 = vmatprep.subr.mxu0 0.0
    %4396 = vmatpush1.msra.mxu0 0.0
    %4397 = vmatprep.subr.mxu0 0.0
    %4398 = vmatpush1.msra.mxu0 0.0
    %4399 = vmatprep.subr.mxu0 0.0
    %4400 = vmatpush1.msra.mxu0 0.0
    %4401 = vmatprep.subr.mxu0 0.0
    %4402 = vmatpush1.msra.mxu0 %v4370
    %4403 = vmatprep.subr.mxu0 0.0
    %4404 = vmatpush1.msra.mxu0 %v4369
    %4405 = vmatprep.subr.mxu0 0.0
    %4406 = vmatpush1.msra.mxu0 %v4368
    %4407 = vmatprep.subr.mxu0 0.0
    %4408 = vmatpush1.msra.mxu0 %v4367
    %4409 = vmatprep.subr.mxu0 0.0
    %4410 = vmatpush2.msra.mxu0 0.0
    %4411 = vmatprep.subr.mxu0 0.0
    %4412 = vmatpush2.msra.mxu0 0.0
    %4413 = vmatprep.subr.mxu0 0.0
    %4414 = vmatpush2.msra.mxu0 0.0
    %4415 = vmatprep.subr.mxu0 0.0
    %4416 = vmatpush2.msra.mxu0 0.0
    %4417 = vmatprep.subr.mxu0 0.0
    %4418 = vmatpush2.msra.mxu0 0.0
    %4419 = vmatprep.subr.mxu0 0.0
    %4420 = vmatpush2.msra.mxu0 0.0
    %4421 = vmatprep.subr.mxu0 0.0
    %4422 = vmatpush2.msra.mxu0 0.0
    %4423 = vmatprep.subr.mxu0 0.0
    %4424 = vmatpush2.msra.mxu0 0.0
    %4425 = vmatprep.subr.mxu0 0.0
    %4426 = vmatpush2.msra.mxu0 0.0
    %4427 = vmatprep.subr.mxu0 0.0
    %4428 = vmatpush2.msra.mxu0 0.0
    %4429 = vmatprep.subr.mxu0 0.0
    %4430 = vmatpush2.msra.mxu0 0.0
    %4431 = vmatprep.subr.mxu0 0.0
    %4432 = vmatpush2.msra.mxu0 0.0
    %4433 = vmatprep.subr.mxu0 0.0
    %4434 = vmatpush2.msra.mxu0 0.0
    %4435 = vmatprep.subr.mxu0 0.0
    %4436 = vmatpush2.msra.mxu0 0.0
    %4437 = vmatprep.subr.mxu0 0.0
    %4438 = vmatpush2.msra.mxu0 0.0
    %4439 = vmatprep.subr.mxu0 0.0
    %4440 = vmatpush2.msra.mxu0 0.0
    %4441 = vmatprep.mubr.f32.mxu0 0.0
    %4442 = vmatmul.mubr.f32.gmra.mxu0 %v4372
    %v4443 = vpop.f32.mrf.mxu0
    %v4444 = vadd.f32 0.0, %v4443
    %v4445 = vpop.f32.mrf.mxu0
    %4446 = vmatprep.mubr.f32.mxu0 0.0
    %4447 = vmatmul.mubr.f32.gmra.mxu0 %v4375
    %v4448 = vpop.f32.mrf.mxu0
    %v4449 = vadd.f32 0.0, %v4448
    %v4450 = vpop.f32.mrf.mxu0
    %4451 = vdwg.mxu0
    %4452 = vst [vmem:[%s18] sm:$0xff] %v4444
    %4453 = vst [vmem:[%s18 + $0x8] sm:$0xff] %v4449
    // Predicated region
    $region70: #{cwsb_forward.1} parent=1 // pred_check
      _
    $region71: #{cwsb_forward.1} parent=1 // pred_check_branch
      %4455 = sbr.rel (0) target = $region73
    $region72: #{cwsb_forward.1} parent=1 // pred_region
      %s4457 = ssub.s32 256, 256
      %4458 = vsyncadd [#allocation3], %s4457
      %s4459 = sshll.u32 [#allocation2], 4
      %s4460 = int_to_ptr.vmem [resolvable:$true] %s4459
      %4465 = dma.vmem_to_hbm [thread:$0]  %s4460, 256, %s17, [#allocation3], 128, 128, 8
    $region73: #{cwsb_forward.1} parent=1 // pred_fallthru
      _
    // Predicated region
    $region74: #{cwsb_forward.1} parent=1 // pred_check
      _
    $region75: #{cwsb_forward.1} parent=1 // pred_check_branch
      %4467 = sbr.rel (0) target = $region77
    $region76: #{cwsb_forward.1} parent=1 // pred_region
      _
    $region77: #{cwsb_forward.1} parent=1 // pred_fallthru
      _
    // Predicated region
    $region78: #{cwsb_forward.1} parent=1 // pred_check
      _
    $region79: #{cwsb_forward.1} parent=1 // pred_check_branch
      %4469 = sbr.rel (0) target = $region81
    $region80: #{cwsb_forward.1} parent=1 // pred_region
      %4470 = dma.done [#allocation3], 256
    $region81: #{cwsb_forward.1} parent=1 // pred_fallthru
      _
    // Predicated region
    $region82: #{cwsb_forward.1} parent=1 // pred_check
      _
    $region83: #{cwsb_forward.1} parent=1 // pred_check_branch
      %4472 = sbr.rel (0) target = $region85
    $region84: #{cwsb_forward.1} parent=1 // pred_region
      _
    $region85: #{cwsb_forward.1} parent=1 // pred_fallthru
      _
    %4473 = vsyncpa [#allocation3], 1

</llo_original>
